<compile_context>
chip_gen: v7x
topology: tpu7x:2x2x1
jax: 0.10.0
libtpu: 0.0.40
codegen_flags: <defaults>
</compile_context>

<pallas_src>
import functools

import jax
import jax.numpy as jnp
from jax.experimental import pallas as pl
from jax.experimental.pallas import tpu as pltpu


def _round_up(x, m):
    return (x + m - 1) // m * m


# ----------------------------------------------------------------------------
# Pallas kernel: whole GRU-cell forward for one batch block, flat 2-D layout.
#   xh_ref  : (M, Cp)      mxu dtype  [Xt | Ht-1 | 0-pad] lanes, M = Bt * N2p
#   h_ref   : (M, Hp)      f32        [Ht-1 | 0-pad] lanes
#   ka_ref  : (N2p, N2p)   mxu dtype  kron(A,  A )^T  (zero-padded rows/cols)
#   khy_ref : (N2p, N2p)   mxu dtype  kron(Hy, Hy)^T
#   wbig_ref: (Cp, 6*Hp)   mxu dtype  [Wg1_u|Wg1_r|Wg3_u|Wg3_r|Wc1_x|Wc3_x]
#   wch_ref : (Hp, 2*Hp)   mxu dtype  [Wc1_h | Wc3_h]
#   bg_ref  : (1, 2*Hp)    f32        bg1 + bg3 (each Hd group padded to Hp lanes)
#   bc_ref  : (1, Hp)      f32        bc1 + bc3
#   out_ref : (M, Hp)      f32
# ----------------------------------------------------------------------------
def _odcru_cell_kernel(xh_ref, h_ref, ka_ref, khy_ref, wbig_ref, wch_ref,
                       bg_ref, bc_ref, out_ref, *, n2p, bt, hp):
    def mm(a, b):
        return jnp.dot(a, b, preferred_element_type=jnp.float32)

    ka = ka_ref[...]                          # (N2p, N2p)  loaded once
    khy = khy_ref[...]

    def prop(op, y):
        # Block-diagonal application of the (N2p, N2p) operator to each of the
        # bt per-batch row blocks of y (blocks are sublane-aligned).
        yd = y.astype(op.dtype)
        if bt == 1:
            return mm(op, yd)
        parts = [mm(op, yd[b * n2p:(b + 1) * n2p, :]) for b in range(bt)]
        return jnp.concatenate(parts, axis=0)

    xh = xh_ref[...]                          # (M, Cp)
    h = h_ref[...]                            # (M, Hp) f32

    # Fused projection -> [yg1 | yg3 | yc1_x | yc3_x], each Hd group padded to Hp.
    ybig = mm(xh, wbig_ref[...])              # (M, 6*Hp) f32
    yg1 = ybig[:, : 2 * hp]
    yg3 = ybig[:, 2 * hp: 4 * hp]
    yc_x = ybig[:, 4 * hp:]

    # Gates ODconv: y1 + prop_A(y1) + y3 + prop_Hy(y3) + (b1 + b3).
    gates = yg1 + yg3 + prop(ka, yg1) + prop(khy, yg3) + bg_ref[...]
    update = jax.nn.sigmoid(gates[:, :hp])
    reset = jax.nn.sigmoid(gates[:, hp:])

    # Candidate ODconv on [Xt, reset*Ht-1]: x-part reused from ybig, h-part added.
    rh = (reset * h).astype(xh.dtype)         # (M, Hp)
    yc = yc_x + mm(rh, wch_ref[...])          # (M, 2*Hp) f32
    yc1 = yc[:, :hp]
    yc3 = yc[:, hp:]
    cand = jnp.tanh(yc1 + yc3 + prop(ka, yc1) + prop(khy, yc3) + bc_ref[...])

    out_ref[...] = ((1.0 - update) * h + update * cand).astype(out_ref.dtype)


# ----------------------------------------------------------------------------
# Wrapper helpers
# ----------------------------------------------------------------------------
def _pad2d(x, rows, cols):
    return jnp.pad(x, ((0, rows - x.shape[0]), (0, cols - x.shape[1])))


def _pad_lane_groups(w, group, padded_group):
    """Split the last dim into `group`-wide chunks, pad each chunk to `padded_group` lanes."""
    k = w.shape[-1] // group
    pad = [(0, 0)] * (w.ndim - 1) + [(0, padded_group - group)]
    return jnp.concatenate(
        [jnp.pad(w[..., i * group:(i + 1) * group], pad) for i in range(k)], axis=-1)


def _tpu_generation():
    """Best-effort (VMEM capacity, dual-TensorCore?) query with safe fallbacks."""
    kind = ""
    try:
        kind = jax.devices()[0].device_kind.lower()
    except Exception:
        pass
    # v4/v5p megacore and v7x expose 2 TensorCores to the grid.
    multi_tc = any(tag in kind for tag in ("v4", "v5p", "v7", "7x"))
    try:
        vmem_cap = int(pltpu.get_tpu_info().vmem_capacity_bytes)
    except Exception:
        vmem_cap = (64 << 20) if multi_tc else (128 << 20)
    return vmem_cap, multi_tc


def _pick_batch_block(B, n2p, per_row_bytes, invariant_bytes, *, vmem_cap, multi_tc):
    """Batch elements per grid step: amortize the ~0.35us/step overhead, stay inside
    a VMEM budget, and on dual-TC chips keep >= 2 grid steps for core parallelism."""
    budget_rows = (int(0.5 * vmem_cap) - invariant_bytes) // max(per_row_bytes, 1)
    budget_rows = max(n2p, budget_rows)
    target_rows = 512 if multi_tc else 1024
    bt = max(1, min(B, max(1, target_rows // n2p), budget_rows // n2p))
    while B % bt:
        bt -= 1
    if multi_tc:
        while bt > 1 and B // bt < 2:
            bt -= 1
            while B % bt:
                bt -= 1
    return bt


# ----------------------------------------------------------------------------
# Wrapper
# ----------------------------------------------------------------------------
def odcru_cell_forward(Xt, Ht_1, A, Hy, params, *, hidden_dim,
                       batch_block=None, mxu_dtype=jnp.bfloat16):
    """Xt: (B, N, N, Din) f32, Ht_1: (B, N, N, Hd) f32, A/Hy: (N, N) f32."""
    B, N, _, Din = Xt.shape
    Hd = hidden_dim
    Cin = Din + Hd
    N2 = N * N
    N2p = _round_up(N2, 16)    # sublane-aligned rows per batch element
    Hp = _round_up(Hd, 128)    # lane-padded hidden channel group
    Cp = _round_up(Cin, 128)   # lane-padded [Xt | Ht-1] input channels
    ms = jnp.dtype(mxu_dtype).itemsize

    # ---- flat 2-D activation slabs (wrapper-side concat / pad / reshape is free).
    xh = jnp.concatenate([Xt, Ht_1], axis=-1).reshape(B, N2, Cin).astype(mxu_dtype)
    xh_flat = jnp.zeros((B, N2p, Cp), mxu_dtype).at[:, :N2, :Cin].set(xh)
    xh_flat = xh_flat.reshape(B * N2p, Cp)
    h_flat = jnp.zeros((B, N2p, Hp), jnp.float32).at[:, :N2, :Hd].set(
        Ht_1.reshape(B, N2, Hd).astype(jnp.float32))
    h_flat = h_flat.reshape(B * N2p, Hp)

    # ---- (N^2, N^2) propagation operators, transposed:
    #      einsum('bncl,nm->bmcl') then einsum('bmcl,cd->bmdl')  ==  kron(A, A)^T @ y_b
    KA_T = _pad2d(jnp.kron(A, A).T, N2p, N2p).astype(mxu_dtype)
    KHy_T = _pad2d(jnp.kron(Hy, Hy).T, N2p, N2p).astype(mxu_dtype)

    # ---- weights: lane-pad every Hd output group to Hp and fuse along lanes.
    Wg1 = _pad2d(_pad_lane_groups(params["Wg1"], Hd, Hp), Cp, 2 * Hp)
    Wg3 = _pad2d(_pad_lane_groups(params["Wg3"], Hd, Hp), Cp, 2 * Hp)
    Wc1x = _pad2d(params["Wc1"][:Din], Cp, Hp)     # x rows only; h rows stay zero
    Wc3x = _pad2d(params["Wc3"][:Din], Cp, Hp)
    Wbig = jnp.concatenate([Wg1, Wg3, Wc1x, Wc3x], axis=1).astype(mxu_dtype)
    Wch = jnp.concatenate([_pad2d(params["Wc1"][Din:], Hp, Hp),
                           _pad2d(params["Wc3"][Din:], Hp, Hp)],
                          axis=1).astype(mxu_dtype)
    bg = _pad_lane_groups(params["bg1"] + params["bg3"], Hd, Hp).astype(jnp.float32)
    bc = _pad2d(params["bc1"] + params["bc3"], 1, Hp).astype(jnp.float32)

    # ---- blocking / VMEM budget (generation aware).
    invariant_bytes = (2 * N2p * N2p * ms + Cp * 6 * Hp * ms + Hp * 2 * Hp * ms
                       + 3 * Hp * 4)
    # double-buffered xh + h + out, plus a generous allowance for f32 temporaries
    per_row_bytes = 2 * Cp * ms + 2 * Hp * 4 + 2 * Hp * 4 + 16 * Hp * 4
    vmem_cap, multi_tc = _tpu_generation()
    if batch_block is None:
        Bt = _pick_batch_block(B, N2p, per_row_bytes, invariant_bytes,
                               vmem_cap=vmem_cap, multi_tc=multi_tc)
    else:
        Bt = batch_block
    assert B % Bt == 0, "batch_block must divide the batch size"
    M = Bt * N2p
    vmem_limit = int(min(max(invariant_bytes + M * per_row_bytes + (4 << 20),
                             32 << 20),
                         int(0.9 * vmem_cap)))

    kernel = functools.partial(_odcru_cell_kernel, n2p=N2p, bt=Bt, hp=Hp)

    def _call(single_buffer_invariants):
        def rows(shape):
            return pl.BlockSpec(shape, lambda i: (i, 0))

        def inv(shape):
            if single_buffer_invariants:
                # Grid-invariant operand: one pipeline buffer instead of two.
                return pl.BlockSpec(shape, lambda i: (0, 0),
                                    pipeline_mode=pl.Buffered(1))
            return pl.BlockSpec(shape, lambda i: (0, 0))

        return pl.pallas_call(
            kernel,
            out_shape=jax.ShapeDtypeStruct((B * N2p, Hp), jnp.float32),
            grid_spec=pltpu.PrefetchScalarGridSpec(
                num_scalar_prefetch=0,
                grid=(B // Bt,),
                in_specs=[
                    rows((M, Cp)),          # [Xt | Ht-1] slab (mxu dtype)
                    rows((M, Hp)),          # Ht-1 slab (f32)
                    inv((N2p, N2p)),        # kron(A, A)^T
                    inv((N2p, N2p)),        # kron(Hy, Hy)^T
                    inv((Cp, 6 * Hp)),      # fused projection weights
                    inv((Hp, 2 * Hp)),      # candidate h-rows weights
                    inv((1, 2 * Hp)),       # gates bias (b1 + b3)
                    inv((1, Hp)),           # candidate bias (b1 + b3)
                ],
                out_specs=rows((M, Hp)),
            ),
            compiler_params=pltpu.CompilerParams(
                dimension_semantics=("parallel",),
                vmem_limit_bytes=vmem_limit),
        )(xh_flat, h_flat, KA_T, KHy_T, Wbig, Wch, bg, bc)

    try:
        out_flat = _call(True)
    except Exception:
        # Compatibility fallback for Pallas builds that reject single-buffered
        # pipeline_mode on invariant operands; semantics are identical.
        out_flat = _call(False)

    return out_flat.reshape(B, N2p, Hp)[:, :N2, :Hd].reshape(B, N, N, Hd)


# ----------------------------------------------------------------------------
# Pure-JAX f32 reference (mirrors the PyTorch forward, layer==1)
# ----------------------------------------------------------------------------
def _odconv_ref(X, W1, b1, W3, b3, A, Hy):
    y1 = X @ W1
    t1 = jnp.einsum('bncl,nm->bmcl', y1, A)
    p1 = jnp.einsum('bmcl,cd->bmdl', t1, A)
    H = y1 + p1 + b1.reshape(1, 1, 1, -1)
    y3 = X @ W3
    t3 = jnp.einsum('bncl,nm->bmcl', y3, Hy)
    p3 = jnp.einsum('bmcl,cd->bmdl', t3, Hy)
    H2 = y3 + p3 + b3.reshape(1, 1, 1, -1)
    return H + H2


def _cell_ref(Xt, Ht_1, A, Hy, params, hidden_dim):
    XH = jnp.concatenate([Xt, Ht_1], axis=-1)
    gates = _odconv_ref(XH, params["Wg1"], params["bg1"],
                        params["Wg3"], params["bg3"], A, Hy)
    update = jax.nn.sigmoid(gates[..., :hidden_dim])
    reset = jax.nn.sigmoid(gates[..., hidden_dim:])
    cand_in = jnp.concatenate([Xt, reset * Ht_1], axis=-1)
    cand = jnp.tanh(_odconv_ref(cand_in, params["Wc1"], params["bc1"],
                                params["Wc3"], params["bc3"], A, Hy))
    return (1.0 - update) * Ht_1 + update * cand


# ----------------------------------------------------------------------------
# Deterministic parameter init (glorot uniform weights, zero biases)
# ----------------------------------------------------------------------------
def _glorot(key, fan_in, fan_out):
    limit = (6.0 / (fan_in + fan_out)) ** 0.5
    return jax.random.uniform(key, (fan_in, fan_out), jnp.float32, -limit, limit)


def make_params(key, input_dim, hidden_dim):
    cin = input_dim + hidden_dim
    k = jax.random.split(key, 4)
    return {
        # gates = ODconv(cin -> 2*hidden), layer 1: linear1/b1, linear3/b3
        "Wg1": _glorot(k[0], cin, 2 * hidden_dim),
        "bg1": jnp.zeros((1, 2 * hidden_dim), jnp.float32),
        "Wg3": _glorot(k[1], cin, 2 * hidden_dim),
        "bg3": jnp.zeros((1, 2 * hidden_dim), jnp.float32),
        # candi = ODconv(cin -> hidden), layer 1
        "Wc1": _glorot(k[2], cin, hidden_dim),
        "bc1": jnp.zeros((1, hidden_dim), jnp.float32),
        "Wc3": _glorot(k[3], cin, hidden_dim),
        "bc3": jnp.zeros((1, hidden_dim), jnp.float32),
    }


# ----------------------------------------------------------------------------
if __name__ == "__main__":
    B, N, Din, Hd = 2, 8, 4, 8   # batch, num_nodes, input_dim, hidden_dim

    key = jax.random.PRNGKey(0)
    kx, kh, kg, khyk, kp = jax.random.split(key, 5)

    Xt = jax.random.normal(kx, (B, N, N, Din), jnp.float32)
    Ht_1 = jax.random.normal(kh, (B, N, N, Hd), jnp.float32)
    # G_nor / hyper arrive as (2, N, N) in the torch module; the forward uses [1].
    G_nor = jax.random.uniform(kg, (2, N, N), jnp.float32)
    hyper = jax.random.uniform(khyk, (2, N, N), jnp.float32)
    A = G_nor[1]
    Hy = hyper[1]

    params = make_params(kp, Din, Hd)
    Ht_ref = _cell_ref(Xt, Ht_1, A, Hy, params, Hd)

    # Exercise the auto heuristic plus both the Bt==1 and Bt>1 kernel paths (the
    # review asks to keep a Bt>1 case so the per-batch block-diagonal propagation
    # stays covered by the correctness check).
    for bb in (None, 1, 2):
        Ht = odcru_cell_forward(Xt, Ht_1, A, Hy, params, hidden_dim=Hd,
                                batch_block=bb)
        Ht = jax.block_until_ready(Ht)
        # bf16 MXU operands (default mxu_dtype) -> looser tolerance than pure f32;
        # pass mxu_dtype=jnp.float32 for numerics-sensitive models.
        if not jnp.allclose(Ht, Ht_ref, atol=1e-1, rtol=1e-1):
            max_err = float(jnp.max(jnp.abs(Ht - Ht_ref)))
            raise AssertionError(
                f"Pallas kernel (batch_block={bb}) does not match JAX reference "
                f"(max abs err {max_err})")

    print("KERNEL_OK")
</pallas_src>

<mosaic_0001>
module attributes {stable_mosaic.version = 11 : i64} {
  func.func @_odcru_cell_kernel(%arg0: i32, %arg1: memref<128x128xbf16, #tpu.memory_space<vmem>>, %arg2: memref<128x128xf32, #tpu.memory_space<vmem>>, %arg3: memref<64x64xbf16, #tpu.memory_space<vmem>>, %arg4: memref<64x64xbf16, #tpu.memory_space<vmem>>, %arg5: memref<128x768xbf16, #tpu.memory_space<vmem>>, %arg6: memref<128x256xbf16, #tpu.memory_space<vmem>>, %arg7: memref<1x256xf32, #tpu.memory_space<vmem>>, %arg8: memref<1x128xf32, #tpu.memory_space<vmem>>, %arg9: memref<128x128xf32, #tpu.memory_space<vmem>>) attributes {dimension_semantics = [#tpu.dimension_semantics<parallel>], iteration_bounds = array<i64: 1>, scalar_prefetch = 0 : i64, scratch_operands = 0 : i64, tpu.core_type = #tpu.core_type<tc>, window_params = [{transform_indices = @transform_0, window_bounds = array<i64: 128, 128>}, {transform_indices = @transform_1, window_bounds = array<i64: 128, 128>}, {pipeline_mode = #tpu.pipeline_mode<synchronous>, transform_indices = @transform_2, window_bounds = array<i64: 64, 64>}, {pipeline_mode = #tpu.pipeline_mode<synchronous>, transform_indices = @transform_3, window_bounds = array<i64: 64, 64>}, {pipeline_mode = #tpu.pipeline_mode<synchronous>, transform_indices = @transform_4, window_bounds = array<i64: 128, 768>}, {pipeline_mode = #tpu.pipeline_mode<synchronous>, transform_indices = @transform_5, window_bounds = array<i64: 128, 256>}, {pipeline_mode = #tpu.pipeline_mode<synchronous>, transform_indices = @transform_6, window_bounds = array<i64: 1, 256>}, {pipeline_mode = #tpu.pipeline_mode<synchronous>, transform_indices = @transform_7, window_bounds = array<i64: 1, 128>}, {transform_indices = @transform_8, window_bounds = array<i64: 128, 128>}]} {
    %c0 = arith.constant 0 : index
    %c0_0 = arith.constant 0 : index
    %0 = vector.load %arg3[%c0, %c0_0] : memref<64x64xbf16, #tpu.memory_space<vmem>>, vector<64x64xbf16>
    %c0_1 = arith.constant 0 : index
    %c0_2 = arith.constant 0 : index
    %1 = vector.load %arg4[%c0_1, %c0_2] : memref<64x64xbf16, #tpu.memory_space<vmem>>, vector<64x64xbf16>
    %c0_3 = arith.constant 0 : index
    %c0_4 = arith.constant 0 : index
    %2 = vector.load %arg1[%c0_3, %c0_4] : memref<128x128xbf16, #tpu.memory_space<vmem>>, vector<128x128xbf16>
    %c0_5 = arith.constant 0 : index
    %c0_6 = arith.constant 0 : index
    %3 = vector.load %arg2[%c0_5, %c0_6] : memref<128x128xf32, #tpu.memory_space<vmem>>, vector<128x128xf32>
    %c0_7 = arith.constant 0 : index
    %c0_8 = arith.constant 0 : index
    %4 = vector.load %arg5[%c0_7, %c0_8] : memref<128x768xbf16, #tpu.memory_space<vmem>>, vector<128x768xbf16>
    %cst = arith.constant dense<0.000000e+00> : vector<128x768xf32>
    %5 = tpu.matmul %2, %4, %cst {dimension_numbers = #tpu.dot_dimension_numbers<[1], [0], [0], [1], [0, 0, 1, 1], [], []>} : vector<128x128xbf16>, vector<128x768xbf16>, vector<128x768xf32> -> vector<128x768xf32>
    %6 = vector.extract_strided_slice %5 {offsets = [0, 0], sizes = [128, 256], strides = [1, 1]} : vector<128x768xf32> to vector<128x256xf32>
    %7 = vector.extract_strided_slice %5 {offsets = [0, 256], sizes = [128, 256], strides = [1, 1]} : vector<128x768xf32> to vector<128x256xf32>
    %8 = vector.extract_strided_slice %5 {offsets = [0, 512], sizes = [128, 256], strides = [1, 1]} : vector<128x768xf32> to vector<128x256xf32>
    %9 = arith.addf %6, %7 : vector<128x256xf32>
    %10 = arith.truncf %6 : vector<128x256xf32> to vector<128x256xbf16>
    %11 = vector.extract_strided_slice %10 {offsets = [0, 0], sizes = [64, 256], strides = [1, 1]} : vector<128x256xbf16> to vector<64x256xbf16>
    %cst_9 = arith.constant dense<0.000000e+00> : vector<64x256xf32>
    %12 = tpu.matmul %0, %11, %cst_9 {dimension_numbers = #tpu.dot_dimension_numbers<[1], [0], [0], [1], [0, 0, 1, 1], [], []>} : vector<64x64xbf16>, vector<64x256xbf16>, vector<64x256xf32> -> vector<64x256xf32>
    %13 = vector.extract_strided_slice %10 {offsets = [64, 0], sizes = [64, 256], strides = [1, 1]} : vector<128x256xbf16> to vector<64x256xbf16>
    %cst_10 = arith.constant dense<0.000000e+00> : vector<64x256xf32>
    %14 = tpu.matmul %0, %13, %cst_10 {dimension_numbers = #tpu.dot_dimension_numbers<[1], [0], [0], [1], [0, 0, 1, 1], [], []>} : vector<64x64xbf16>, vector<64x256xbf16>, vector<64x256xf32> -> vector<64x256xf32>
    %15 = tpu.concatenate %12, %14 in 0 : vector<64x256xf32>, vector<64x256xf32> -> vector<128x256xf32>
    %16 = arith.addf %9, %15 : vector<128x256xf32>
    %17 = arith.truncf %7 : vector<128x256xf32> to vector<128x256xbf16>
    %18 = vector.extract_strided_slice %17 {offsets = [0, 0], sizes = [64, 256], strides = [1, 1]} : vector<128x256xbf16> to vector<64x256xbf16>
    %cst_11 = arith.constant dense<0.000000e+00> : vector<64x256xf32>
    %19 = tpu.matmul %1, %18, %cst_11 {dimension_numbers = #tpu.dot_dimension_numbers<[1], [0], [0], [1], [0, 0, 1, 1], [], []>} : vector<64x64xbf16>, vector<64x256xbf16>, vector<64x256xf32> -> vector<64x256xf32>
    %20 = vector.extract_strided_slice %17 {offsets = [64, 0], sizes = [64, 256], strides = [1, 1]} : vector<128x256xbf16> to vector<64x256xbf16>
    %cst_12 = arith.constant dense<0.000000e+00> : vector<64x256xf32>
    %21 = tpu.matmul %1, %20, %cst_12 {dimension_numbers = #tpu.dot_dimension_numbers<[1], [0], [0], [1], [0, 0, 1, 1], [], []>} : vector<64x64xbf16>, vector<64x256xbf16>, vector<64x256xf32> -> vector<64x256xf32>
    %22 = tpu.concatenate %19, %21 in 0 : vector<64x256xf32>, vector<64x256xf32> -> vector<128x256xf32>
    %23 = arith.addf %16, %22 : vector<128x256xf32>
    %c0_13 = arith.constant 0 : index
    %c0_14 = arith.constant 0 : index
    %24 = vector.load %arg7[%c0_13, %c0_14] : memref<1x256xf32, #tpu.memory_space<vmem>>, vector<1x256xf32>
    %25 = vector.broadcast %24 : vector<1x256xf32> to vector<128x256xf32>
    %26 = arith.addf %23, %25 : vector<128x256xf32>
    %27 = vector.extract_strided_slice %26 {offsets = [0, 0], sizes = [128, 128], strides = [1, 1]} : vector<128x256xf32> to vector<128x128xf32>
    %28 = arith.negf %27 : vector<128x128xf32>
    %29 = math.exp %28 : vector<128x128xf32>
    %cst_15 = arith.constant 1.000000e+00 : f32
    %30 = vector.broadcast %cst_15 : f32 to vector<128x128xf32>
    %31 = arith.addf %30, %29 : vector<128x128xf32>
    %32 = arith.divf %30, %31 : vector<128x128xf32>
    %33 = vector.extract_strided_slice %26 {offsets = [0, 128], sizes = [128, 128], strides = [1, 1]} : vector<128x256xf32> to vector<128x128xf32>
    %34 = arith.negf %33 : vector<128x128xf32>
    %35 = math.exp %34 : vector<128x128xf32>
    %cst_16 = arith.constant 1.000000e+00 : f32
    %36 = vector.broadcast %cst_16 : f32 to vector<128x128xf32>
    %37 = arith.addf %36, %35 : vector<128x128xf32>
    %38 = arith.divf %36, %37 : vector<128x128xf32>
    %39 = arith.mulf %38, %3 : vector<128x128xf32>
    %40 = arith.truncf %39 : vector<128x128xf32> to vector<128x128xbf16>
    %c0_17 = arith.constant 0 : index
    %c0_18 = arith.constant 0 : index
    %41 = vector.load %arg6[%c0_17, %c0_18] : memref<128x256xbf16, #tpu.memory_space<vmem>>, vector<128x256xbf16>
    %cst_19 = arith.constant dense<0.000000e+00> : vector<128x256xf32>
    %42 = tpu.matmul %40, %41, %cst_19 {dimension_numbers = #tpu.dot_dimension_numbers<[1], [0], [0], [1], [0, 0, 1, 1], [], []>} : vector<128x128xbf16>, vector<128x256xbf16>, vector<128x256xf32> -> vector<128x256xf32>
    %43 = arith.addf %8, %42 : vector<128x256xf32>
    %44 = vector.extract_strided_slice %43 {offsets = [0, 0], sizes = [128, 128], strides = [1, 1]} : vector<128x256xf32> to vector<128x128xf32>
    %45 = vector.extract_strided_slice %43 {offsets = [0, 128], sizes = [128, 128], strides = [1, 1]} : vector<128x256xf32> to vector<128x128xf32>
    %46 = arith.addf %44, %45 : vector<128x128xf32>
    %47 = arith.truncf %44 : vector<128x128xf32> to vector<128x128xbf16>
    %48 = vector.extract_strided_slice %47 {offsets = [0, 0], sizes = [64, 128], strides = [1, 1]} : vector<128x128xbf16> to vector<64x128xbf16>
    %cst_20 = arith.constant dense<0.000000e+00> : vector<64x128xf32>
    %49 = tpu.matmul %0, %48, %cst_20 {dimension_numbers = #tpu.dot_dimension_numbers<[1], [0], [0], [1], [0, 0, 1, 1], [], []>} : vector<64x64xbf16>, vector<64x128xbf16>, vector<64x128xf32> -> vector<64x128xf32>
    %50 = vector.extract_strided_slice %47 {offsets = [64, 0], sizes = [64, 128], strides = [1, 1]} : vector<128x128xbf16> to vector<64x128xbf16>
    %cst_21 = arith.constant dense<0.000000e+00> : vector<64x128xf32>
    %51 = tpu.matmul %0, %50, %cst_21 {dimension_numbers = #tpu.dot_dimension_numbers<[1], [0], [0], [1], [0, 0, 1, 1], [], []>} : vector<64x64xbf16>, vector<64x128xbf16>, vector<64x128xf32> -> vector<64x128xf32>
    %52 = tpu.concatenate %49, %51 in 0 : vector<64x128xf32>, vector<64x128xf32> -> vector<128x128xf32>
    %53 = arith.addf %46, %52 : vector<128x128xf32>
    %54 = arith.truncf %45 : vector<128x128xf32> to vector<128x128xbf16>
    %55 = vector.extract_strided_slice %54 {offsets = [0, 0], sizes = [64, 128], strides = [1, 1]} : vector<128x128xbf16> to vector<64x128xbf16>
    %cst_22 = arith.constant dense<0.000000e+00> : vector<64x128xf32>
    %56 = tpu.matmul %1, %55, %cst_22 {dimension_numbers = #tpu.dot_dimension_numbers<[1], [0], [0], [1], [0, 0, 1, 1], [], []>} : vector<64x64xbf16>, vector<64x128xbf16>, vector<64x128xf32> -> vector<64x128xf32>
    %57 = vector.extract_strided_slice %54 {offsets = [64, 0], sizes = [64, 128], strides = [1, 1]} : vector<128x128xbf16> to vector<64x128xbf16>
    %cst_23 = arith.constant dense<0.000000e+00> : vector<64x128xf32>
    %58 = tpu.matmul %1, %57, %cst_23 {dimension_numbers = #tpu.dot_dimension_numbers<[1], [0], [0], [1], [0, 0, 1, 1], [], []>} : vector<64x64xbf16>, vector<64x128xbf16>, vector<64x128xf32> -> vector<64x128xf32>
    %59 = tpu.concatenate %56, %58 in 0 : vector<64x128xf32>, vector<64x128xf32> -> vector<128x128xf32>
    %60 = arith.addf %53, %59 : vector<128x128xf32>
    %c0_24 = arith.constant 0 : index
    %c0_25 = arith.constant 0 : index
    %61 = vector.load %arg8[%c0_24, %c0_25] : memref<1x128xf32, #tpu.memory_space<vmem>>, vector<1x128xf32>
    %62 = vector.broadcast %61 : vector<1x128xf32> to vector<128x128xf32>
    %63 = arith.addf %60, %62 : vector<128x128xf32>
    %64 = math.tanh %63 : vector<128x128xf32>
    %cst_26 = arith.constant 1.000000e+00 : f32
    %65 = vector.broadcast %cst_26 : f32 to vector<128x128xf32>
    %66 = arith.subf %65, %32 : vector<128x128xf32>
    %67 = arith.mulf %66, %3 : vector<128x128xf32>
    %68 = arith.mulf %32, %64 : vector<128x128xf32>
    %69 = arith.addf %67, %68 : vector<128x128xf32>
    %c0_27 = arith.constant 0 : index
    %c0_28 = arith.constant 0 : index
    %70 = vector.load %arg9[%c0_27, %c0_28] : memref<128x128xf32, #tpu.memory_space<vmem>>, vector<128x128xf32>
    tpu.vector_store %arg9[%c0_27, %c0_28], %69 {strides = array<i32>} : memref<128x128xf32, #tpu.memory_space<vmem>>, vector<128x128xf32>,
    return
  }
  func.func @transform_0(%arg0: i32) -> (i32, i32) {
    %c0_i32 = arith.constant 0 : i32
    %c0_i32_0 = arith.constant 0 : i32
    return %arg0, %c0_i32 : i32, i32
  }
  func.func @transform_1(%arg0: i32) -> (i32, i32) {
    %c0_i32 = arith.constant 0 : i32
    %c0_i32_0 = arith.constant 0 : i32
    return %arg0, %c0_i32 : i32, i32
  }
  func.func @transform_2(%arg0: i32) -> (i32, i32) {
    %c0_i32 = arith.constant 0 : i32
    %c0_i32_0 = arith.constant 0 : i32
    %c0_i32_1 = arith.constant 0 : i32
    return %c0_i32, %c0_i32_0 : i32, i32
  }
  func.func @transform_3(%arg0: i32) -> (i32, i32) {
    %c0_i32 = arith.constant 0 : i32
    %c0_i32_0 = arith.constant 0 : i32
    %c0_i32_1 = arith.constant 0 : i32
    return %c0_i32, %c0_i32_0 : i32, i32
  }
  func.func @transform_4(%arg0: i32) -> (i32, i32) {
    %c0_i32 = arith.constant 0 : i32
    %c0_i32_0 = arith.constant 0 : i32
    %c0_i32_1 = arith.constant 0 : i32
    return %c0_i32, %c0_i32_0 : i32, i32
  }
  func.func @transform_5(%arg0: i32) -> (i32, i32) {
    %c0_i32 = arith.constant 0 : i32
    %c0_i32_0 = arith.constant 0 : i32
    %c0_i32_1 = arith.constant 0 : i32
    return %c0_i32, %c0_i32_0 : i32, i32
  }
  func.func @transform_6(%arg0: i32) -> (i32, i32) {
    %c0_i32 = arith.constant 0 : i32
    %c0_i32_0 = arith.constant 0 : i32
    %c0_i32_1 = arith.constant 0 : i32
    return %c0_i32, %c0_i32_0 : i32, i32
  }
  func.func @transform_7(%arg0: i32) -> (i32, i32) {
    %c0_i32 = arith.constant 0 : i32
    %c0_i32_0 = arith.constant 0 : i32
    %c0_i32_1 = arith.constant 0 : i32
    return %c0_i32, %c0_i32_0 : i32, i32
  }
  func.func @transform_8(%arg0: i32) -> (i32, i32) {
    %c0_i32 = arith.constant 0 : i32
    %c0_i32_0 = arith.constant 0 : i32
    return %arg0, %c0_i32 : i32, i32
  }
}

module attributes {stable_mosaic.version = 11 : i64} {
  func.func @_odcru_cell_kernel(%arg0: i32, %arg1: memref<128x128xbf16, #tpu.memory_space<vmem>>, %arg2: memref<128x128xf32, #tpu.memory_space<vmem>>, %arg3: memref<64x64xbf16, #tpu.memory_space<vmem>>, %arg4: memref<64x64xbf16, #tpu.memory_space<vmem>>, %arg5: memref<128x768xbf16, #tpu.memory_space<vmem>>, %arg6: memref<128x256xbf16, #tpu.memory_space<vmem>>, %arg7: memref<1x256xf32, #tpu.memory_space<vmem>>, %arg8: memref<1x128xf32, #tpu.memory_space<vmem>>, %arg9: memref<128x128xf32, #tpu.memory_space<vmem>>) attributes {dimension_semantics = [#tpu.dimension_semantics<parallel>], iteration_bounds = array<i64: 1>, scalar_prefetch = 0 : i64, scratch_operands = 0 : i64, tpu.core_type = #tpu.core_type<tc>, window_params = [{transform_indices = @transform_0, window_bounds = array<i64: 128, 128>}, {transform_indices = @transform_1, window_bounds = array<i64: 128, 128>}, {pipeline_mode = #tpu.pipeline_mode<synchronous>, transform_indices = @transform_2, window_bounds = array<i64: 64, 64>}, {pipeline_mode = #tpu.pipeline_mode<synchronous>, transform_indices = @transform_3, window_bounds = array<i64: 64, 64>}, {pipeline_mode = #tpu.pipeline_mode<synchronous>, transform_indices = @transform_4, window_bounds = array<i64: 128, 768>}, {pipeline_mode = #tpu.pipeline_mode<synchronous>, transform_indices = @transform_5, window_bounds = array<i64: 128, 256>}, {pipeline_mode = #tpu.pipeline_mode<synchronous>, transform_indices = @transform_6, window_bounds = array<i64: 1, 256>}, {pipeline_mode = #tpu.pipeline_mode<synchronous>, transform_indices = @transform_7, window_bounds = array<i64: 1, 128>}, {transform_indices = @transform_8, window_bounds = array<i64: 128, 128>}]} {
    %c0 = arith.constant 0 : index
    %c0_0 = arith.constant 0 : index
    %0 = vector.load %arg3[%c0, %c0_0] : memref<64x64xbf16, #tpu.memory_space<vmem>>, vector<64x64xbf16>
    %c0_1 = arith.constant 0 : index
    %c0_2 = arith.constant 0 : index
    %1 = vector.load %arg4[%c0_1, %c0_2] : memref<64x64xbf16, #tpu.memory_space<vmem>>, vector<64x64xbf16>
    %c0_3 = arith.constant 0 : index
    %c0_4 = arith.constant 0 : index
    %2 = vector.load %arg1[%c0_3, %c0_4] : memref<128x128xbf16, #tpu.memory_space<vmem>>, vector<128x128xbf16>
    %c0_5 = arith.constant 0 : index
    %c0_6 = arith.constant 0 : index
    %3 = vector.load %arg2[%c0_5, %c0_6] : memref<128x128xf32, #tpu.memory_space<vmem>>, vector<128x128xf32>
    %c0_7 = arith.constant 0 : index
    %c0_8 = arith.constant 0 : index
    %4 = vector.load %arg5[%c0_7, %c0_8] : memref<128x768xbf16, #tpu.memory_space<vmem>>, vector<128x768xbf16>
    %cst = arith.constant dense<0.000000e+00> : vector<128x768xf32>
    %5 = tpu.matmul %2, %4, %cst {dimension_numbers = #tpu.dot_dimension_numbers<[1], [0], [0], [1], [0, 0, 1, 1], [], []>} : vector<128x128xbf16>, vector<128x768xbf16>, vector<128x768xf32> -> vector<128x768xf32>
    %6 = vector.extract_strided_slice %5 {offsets = [0, 0], sizes = [128, 256], strides = [1, 1]} : vector<128x768xf32> to vector<128x256xf32>
    %7 = vector.extract_strided_slice %5 {offsets = [0, 256], sizes = [128, 256], strides = [1, 1]} : vector<128x768xf32> to vector<128x256xf32>
    %8 = vector.extract_strided_slice %5 {offsets = [0, 512], sizes = [128, 256], strides = [1, 1]} : vector<128x768xf32> to vector<128x256xf32>
    %9 = arith.addf %6, %7 : vector<128x256xf32>
    %10 = arith.truncf %6 : vector<128x256xf32> to vector<128x256xbf16>
    %11 = vector.extract_strided_slice %10 {offsets = [0, 0], sizes = [64, 256], strides = [1, 1]} : vector<128x256xbf16> to vector<64x256xbf16>
    %cst_9 = arith.constant dense<0.000000e+00> : vector<64x256xf32>
    %12 = tpu.matmul %0, %11, %cst_9 {dimension_numbers = #tpu.dot_dimension_numbers<[1], [0], [0], [1], [0, 0, 1, 1], [], []>} : vector<64x64xbf16>, vector<64x256xbf16>, vector<64x256xf32> -> vector<64x256xf32>
    %13 = vector.extract_strided_slice %10 {offsets = [64, 0], sizes = [64, 256], strides = [1, 1]} : vector<128x256xbf16> to vector<64x256xbf16>
    %cst_10 = arith.constant dense<0.000000e+00> : vector<64x256xf32>
    %14 = tpu.matmul %0, %13, %cst_10 {dimension_numbers = #tpu.dot_dimension_numbers<[1], [0], [0], [1], [0, 0, 1, 1], [], []>} : vector<64x64xbf16>, vector<64x256xbf16>, vector<64x256xf32> -> vector<64x256xf32>
    %15 = tpu.concatenate %12, %14 in 0 : vector<64x256xf32>, vector<64x256xf32> -> vector<128x256xf32>
    %16 = arith.addf %9, %15 : vector<128x256xf32>
    %17 = arith.truncf %7 : vector<128x256xf32> to vector<128x256xbf16>
    %18 = vector.extract_strided_slice %17 {offsets = [0, 0], sizes = [64, 256], strides = [1, 1]} : vector<128x256xbf16> to vector<64x256xbf16>
    %cst_11 = arith.constant dense<0.000000e+00> : vector<64x256xf32>
    %19 = tpu.matmul %1, %18, %cst_11 {dimension_numbers = #tpu.dot_dimension_numbers<[1], [0], [0], [1], [0, 0, 1, 1], [], []>} : vector<64x64xbf16>, vector<64x256xbf16>, vector<64x256xf32> -> vector<64x256xf32>
    %20 = vector.extract_strided_slice %17 {offsets = [64, 0], sizes = [64, 256], strides = [1, 1]} : vector<128x256xbf16> to vector<64x256xbf16>
    %cst_12 = arith.constant dense<0.000000e+00> : vector<64x256xf32>
    %21 = tpu.matmul %1, %20, %cst_12 {dimension_numbers = #tpu.dot_dimension_numbers<[1], [0], [0], [1], [0, 0, 1, 1], [], []>} : vector<64x64xbf16>, vector<64x256xbf16>, vector<64x256xf32> -> vector<64x256xf32>
    %22 = tpu.concatenate %19, %21 in 0 : vector<64x256xf32>, vector<64x256xf32> -> vector<128x256xf32>
    %23 = arith.addf %16, %22 : vector<128x256xf32>
    %c0_13 = arith.constant 0 : index
    %c0_14 = arith.constant 0 : index
    %24 = vector.load %arg7[%c0_13, %c0_14] : memref<1x256xf32, #tpu.memory_space<vmem>>, vector<1x256xf32>
    %25 = vector.broadcast %24 : vector<1x256xf32> to vector<128x256xf32>
    %26 = arith.addf %23, %25 : vector<128x256xf32>
    %27 = vector.extract_strided_slice %26 {offsets = [0, 0], sizes = [128, 128], strides = [1, 1]} : vector<128x256xf32> to vector<128x128xf32>
    %28 = arith.negf %27 : vector<128x128xf32>
    %29 = math.exp %28 : vector<128x128xf32>
    %cst_15 = arith.constant 1.000000e+00 : f32
    %30 = vector.broadcast %cst_15 : f32 to vector<128x128xf32>
    %31 = arith.addf %30, %29 : vector<128x128xf32>
    %32 = arith.divf %30, %31 : vector<128x128xf32>
    %33 = vector.extract_strided_slice %26 {offsets = [0, 128], sizes = [128, 128], strides = [1, 1]} : vector<128x256xf32> to vector<128x128xf32>
    %34 = arith.negf %33 : vector<128x128xf32>
    %35 = math.exp %34 : vector<128x128xf32>
    %cst_16 = arith.constant 1.000000e+00 : f32
    %36 = vector.broadcast %cst_16 : f32 to vector<128x128xf32>
    %37 = arith.addf %36, %35 : vector<128x128xf32>
    %38 = arith.divf %36, %37 : vector<128x128xf32>
    %39 = arith.mulf %38, %3 : vector<128x128xf32>
    %40 = arith.truncf %39 : vector<128x128xf32> to vector<128x128xbf16>
    %c0_17 = arith.constant 0 : index
    %c0_18 = arith.constant 0 : index
    %41 = vector.load %arg6[%c0_17, %c0_18] : memref<128x256xbf16, #tpu.memory_space<vmem>>, vector<128x256xbf16>
    %cst_19 = arith.constant dense<0.000000e+00> : vector<128x256xf32>
    %42 = tpu.matmul %40, %41, %cst_19 {dimension_numbers = #tpu.dot_dimension_numbers<[1], [0], [0], [1], [0, 0, 1, 1], [], []>} : vector<128x128xbf16>, vector<128x256xbf16>, vector<128x256xf32> -> vector<128x256xf32>
    %43 = arith.addf %8, %42 : vector<128x256xf32>
    %44 = vector.extract_strided_slice %43 {offsets = [0, 0], sizes = [128, 128], strides = [1, 1]} : vector<128x256xf32> to vector<128x128xf32>
    %45 = vector.extract_strided_slice %43 {offsets = [0, 128], sizes = [128, 128], strides = [1, 1]} : vector<128x256xf32> to vector<128x128xf32>
    %46 = arith.addf %44, %45 : vector<128x128xf32>
    %47 = arith.truncf %44 : vector<128x128xf32> to vector<128x128xbf16>
    %48 = vector.extract_strided_slice %47 {offsets = [0, 0], sizes = [64, 128], strides = [1, 1]} : vector<128x128xbf16> to vector<64x128xbf16>
    %cst_20 = arith.constant dense<0.000000e+00> : vector<64x128xf32>
    %49 = tpu.matmul %0, %48, %cst_20 {dimension_numbers = #tpu.dot_dimension_numbers<[1], [0], [0], [1], [0, 0, 1, 1], [], []>} : vector<64x64xbf16>, vector<64x128xbf16>, vector<64x128xf32> -> vector<64x128xf32>
    %50 = vector.extract_strided_slice %47 {offsets = [64, 0], sizes = [64, 128], strides = [1, 1]} : vector<128x128xbf16> to vector<64x128xbf16>
    %cst_21 = arith.constant dense<0.000000e+00> : vector<64x128xf32>
    %51 = tpu.matmul %0, %50, %cst_21 {dimension_numbers = #tpu.dot_dimension_numbers<[1], [0], [0], [1], [0, 0, 1, 1], [], []>} : vector<64x64xbf16>, vector<64x128xbf16>, vector<64x128xf32> -> vector<64x128xf32>
    %52 = tpu.concatenate %49, %51 in 0 : vector<64x128xf32>, vector<64x128xf32> -> vector<128x128xf32>
    %53 = arith.addf %46, %52 : vector<128x128xf32>
    %54 = arith.truncf %45 : vector<128x128xf32> to vector<128x128xbf16>
    %55 = vector.extract_strided_slice %54 {offsets = [0, 0], sizes = [64, 128], strides = [1, 1]} : vector<128x128xbf16> to vector<64x128xbf16>
    %cst_22 = arith.constant dense<0.000000e+00> : vector<64x128xf32>
    %56 = tpu.matmul %1, %55, %cst_22 {dimension_numbers = #tpu.dot_dimension_numbers<[1], [0], [0], [1], [0, 0, 1, 1], [], []>} : vector<64x64xbf16>, vector<64x128xbf16>, vector<64x128xf32> -> vector<64x128xf32>
    %57 = vector.extract_strided_slice %54 {offsets = [64, 0], sizes = [64, 128], strides = [1, 1]} : vector<128x128xbf16> to vector<64x128xbf16>
    %cst_23 = arith.constant dense<0.000000e+00> : vector<64x128xf32>
    %58 = tpu.matmul %1, %57, %cst_23 {dimension_numbers = #tpu.dot_dimension_numbers<[1], [0], [0], [1], [0, 0, 1, 1], [], []>} : vector<64x64xbf16>, vector<64x128xbf16>, vector<64x128xf32> -> vector<64x128xf32>
    %59 = tpu.concatenate %56, %58 in 0 : vector<64x128xf32>, vector<64x128xf32> -> vector<128x128xf32>
    %60 = arith.addf %53, %59 : vector<128x128xf32>
    %c0_24 = arith.constant 0 : index
    %c0_25 = arith.constant 0 : index
    %61 = vector.load %arg8[%c0_24, %c0_25] : memref<1x128xf32, #tpu.memory_space<vmem>>, vector<1x128xf32>
    %62 = vector.broadcast %61 : vector<1x128xf32> to vector<128x128xf32>
    %63 = arith.addf %60, %62 : vector<128x128xf32>
    %64 = math.tanh %63 : vector<128x128xf32>
    %cst_26 = arith.constant 1.000000e+00 : f32
    %65 = vector.broadcast %cst_26 : f32 to vector<128x128xf32>
    %66 = arith.subf %65, %32 : vector<128x128xf32>
    %67 = arith.mulf %66, %3 : vector<128x128xf32>
    %68 = arith.mulf %32, %64 : vector<128x128xf32>
    %69 = arith.addf %67, %68 : vector<128x128xf32>
    %c0_27 = arith.constant 0 : index
    %c0_28 = arith.constant 0 : index
    %70 = vector.load %arg9[%c0_27, %c0_28] : memref<128x128xf32, #tpu.memory_space<vmem>>, vector<128x128xf32>
    tpu.vector_store %arg9[%c0_27, %c0_28], %69 {strides = array<i32>} : memref<128x128xf32, #tpu.memory_space<vmem>>, vector<128x128xf32>,
    return
  }
  func.func @transform_0(%arg0: i32) -> (i32, i32) {
    %c0_i32 = arith.constant 0 : i32
    %c0_i32_0 = arith.constant 0 : i32
    return %arg0, %c0_i32 : i32, i32
  }
  func.func @transform_1(%arg0: i32) -> (i32, i32) {
    %c0_i32 = arith.constant 0 : i32
    %c0_i32_0 = arith.constant 0 : i32
    return %arg0, %c0_i32 : i32, i32
  }
  func.func @transform_2(%arg0: i32) -> (i32, i32) {
    %c0_i32 = arith.constant 0 : i32
    %c0_i32_0 = arith.constant 0 : i32
    %c0_i32_1 = arith.constant 0 : i32
    return %c0_i32, %c0_i32_0 : i32, i32
  }
  func.func @transform_3(%arg0: i32) -> (i32, i32) {
    %c0_i32 = arith.constant 0 : i32
    %c0_i32_0 = arith.constant 0 : i32
    %c0_i32_1 = arith.constant 0 : i32
    return %c0_i32, %c0_i32_0 : i32, i32
  }
  func.func @transform_4(%arg0: i32) -> (i32, i32) {
    %c0_i32 = arith.constant 0 : i32
    %c0_i32_0 = arith.constant 0 : i32
    %c0_i32_1 = arith.constant 0 : i32
    return %c0_i32, %c0_i32_0 : i32, i32
  }
  func.func @transform_5(%arg0: i32) -> (i32, i32) {
    %c0_i32 = arith.constant 0 : i32
    %c0_i32_0 = arith.constant 0 : i32
    %c0_i32_1 = arith.constant 0 : i32
    return %c0_i32, %c0_i32_0 : i32, i32
  }
  func.func @transform_6(%arg0: i32) -> (i32, i32) {
    %c0_i32 = arith.constant 0 : i32
    %c0_i32_0 = arith.constant 0 : i32
    %c0_i32_1 = arith.constant 0 : i32
    return %c0_i32, %c0_i32_0 : i32, i32
  }
  func.func @transform_7(%arg0: i32) -> (i32, i32) {
    %c0_i32 = arith.constant 0 : i32
    %c0_i32_0 = arith.constant 0 : i32
    %c0_i32_1 = arith.constant 0 : i32
    return %c0_i32, %c0_i32_0 : i32, i32
  }
  func.func @transform_8(%arg0: i32) -> (i32, i32) {
    %c0_i32 = arith.constant 0 : i32
    %c0_i32_0 = arith.constant 0 : i32
    return %arg0, %c0_i32 : i32, i32
  }
}

</mosaic_0001>

<llo_original>
// kernel: tpu_custom_call.1
$region0: #{tpu_custom_call.1}
  #allocation0 [shape = 'u32[]', space=smem, size = 0x4, offset = 0x4, fixed_abs, tag = 'smem constant byte address 0x4 - core index']
  #allocation1 [shape = 'u32[144,128]{1,0:T(1,128)}', space=vmem, size = 0x12000, scoped, tag = 'internal scratch']
  %s0 = inlined_call_operand.hbm [shape: bf16[128,128], index: 0, kind: input, shape index: {}]
  %s1 = inlined_call_operand.hbm [shape: f32[128,128], index: 1, kind: input, shape index: {}]
  %s2 = inlined_call_operand.hbm [shape: bf16[64,64], index: 2, kind: input, shape index: {}]
  %s3 = inlined_call_operand.hbm [shape: bf16[64,64], index: 3, kind: input, shape index: {}]
  %s4 = inlined_call_operand.hbm [shape: bf16[128,768], index: 4, kind: input, shape index: {}]
  %s5 = inlined_call_operand.hbm [shape: bf16[128,256], index: 5, kind: input, shape index: {}]
  %s6 = inlined_call_operand.vmem [shape: f32[1,256], index: 6, kind: input, shape index: {}]
  %s7 = inlined_call_operand.vmem [shape: f32[1,128], index: 7, kind: input, shape index: {}]
  %s8 = inlined_call_operand.hbm [shape: f32[128,128], index: 8, kind: output, shape index: {}]
  %s9 = sld [smem:[#allocation0]]
  $region66: #{tpu_custom_call.1} parent=0
    _
  %s11 = ssub.s32 1, %s9
  %s12 = scalar_select 0, %s11, %s9
  $region1: #{tpu_custom_call.1} parent=0
    #allocation2 [shape = 'u8[32768]{0}', space=vmem, size = 0x8000, scoped, tag = 'input window, operand 0, single buffered']
    #allocation3 [shape = 's32[1]{0}', space=sflag, size = 0x4, scoped, tag = 'scoped memory for tpu_custom_call.1']
    #allocation4 [shape = 's32[1]{0}', space=sflag, size = 0x4, scoped, tag = 'scoped memory for tpu_custom_call.1']
    #allocation5 [shape = 'u8[65536]{0}', space=vmem, size = 0x10000, scoped, tag = 'input window, operand 1, single buffered']
    #allocation6 [shape = 's32[1]{0}', space=sflag, size = 0x4, scoped, tag = 'scoped memory for tpu_custom_call.1']
    #allocation7 [shape = 'u8[16384]{0}', space=vmem, size = 0x4000, scoped, tag = 'input window, operand 2, single buffered']
    #allocation8 [shape = 'u8[16384]{0}', space=vmem, size = 0x4000, scoped, tag = 'input window, operand 3, single buffered']
    #allocation9 [shape = 's32[1]{0}', space=sflag, size = 0x4, scoped, tag = 'scoped memory for tpu_custom_call.1']
    #allocation10 [shape = 'u8[196608]{0}', space=vmem, size = 0x30000, scoped, tag = 'input window, operand 4, single buffered']
    #allocation11 [shape = 'u8[65536]{0}', space=vmem, size = 0x10000, scoped, tag = 'input window, operand 5, single buffered']
    #allocation12 [shape = 's32[1]{0}', space=sflag, size = 0x4, scoped, tag = 'scoped memory for tpu_custom_call.1']
    #allocation13 [shape = 'u8[65536]{0}', space=vmem, size = 0x10000, scoped, tag = 'output window, operand 0, single buffered']
    %13 = vsyncpa [#allocation3], 0
    %14 = vsyncpa [#allocation6], 0
    %15 = vsyncpa [#allocation9], 0
    %16 = vsyncpa [#allocation12], 0
    %17 = vsyncpa [#allocation4], 0
    // Predicated region
    $region2: #{tpu_custom_call.1} parent=1 // pred_check
      _
    $region3: #{tpu_custom_call.1} parent=1 // pred_check_branch
      %19 = sbr.rel (0) target = $region5
    $region4: #{tpu_custom_call.1} parent=1 // pred_region
      %s21 = ssub.s32 1024, 1024
      %22 = vsyncadd [#allocation3], %s21
      %s23 = sshll.u32 [#allocation2], 4
      %s24 = int_to_ptr.vmem [resolvable:$true] %s23
      %29 = dma.hbm_to_vmem [thread:$0]  %s0, 1024, %s24, [#allocation3], 64, 64, 4
    $region5: #{tpu_custom_call.1} parent=1 // pred_fallthru
      _
    // Predicated region
    $region6: #{tpu_custom_call.1} parent=1 // pred_check
      _
    $region7: #{tpu_custom_call.1} parent=1 // pred_check_branch
      %31 = sbr.rel (0) target = $region9
    $region8: #{tpu_custom_call.1} parent=1 // pred_region
      %s33 = ssub.s32 2048, 2048
      %34 = vsyncadd [#allocation6], %s33
      %s35 = sshll.u32 [#allocation5], 4
      %s36 = int_to_ptr.vmem [resolvable:$true] %s35
      %41 = dma.hbm_to_vmem [thread:$0]  %s1, 2048, %s36, [#allocation6], 128, 128, 8
    $region9: #{tpu_custom_call.1} parent=1 // pred_fallthru
      _
    // Predicated region
    $region10: #{tpu_custom_call.1} parent=1 // pred_check
      _
    $region11: #{tpu_custom_call.1} parent=1 // pred_check_branch
      %43 = sbr.rel (0) target = $region13
    $region12: #{tpu_custom_call.1} parent=1 // pred_region
      %s45 = ssub.s32 512, 512
      %46 = vsyncadd [#allocation6], %s45
      %s47 = sshll.u32 [#allocation7], 4
      %s48 = int_to_ptr.vmem [resolvable:$true] %s47
      %53 = dma.hbm_to_vmem [thread:$0]  %s2, 512, %s48, [#allocation6], 64, 64, 4
    $region13: #{tpu_custom_call.1} parent=1 // pred_fallthru
      _
    // Predicated region
    $region14: #{tpu_custom_call.1} parent=1 // pred_check
      _
    $region15: #{tpu_custom_call.1} parent=1 // pred_check_branch
      %55 = sbr.rel (0) target = $region17
    $region16: #{tpu_custom_call.1} parent=1 // pred_region
      %s57 = ssub.s32 512, 512
      %58 = vsyncadd [#allocation9], %s57
      %s59 = sshll.u32 [#allocation8], 4
      %s60 = int_to_ptr.vmem [resolvable:$true] %s59
      %65 = dma.hbm_to_vmem [thread:$0]  %s3, 512, %s60, [#allocation9], 64, 64, 4
    $region17: #{tpu_custom_call.1} parent=1 // pred_fallthru
      _
    // Predicated region
    $region18: #{tpu_custom_call.1} parent=1 // pred_check
      _
    $region19: #{tpu_custom_call.1} parent=1 // pred_check_branch
      %67 = sbr.rel (0) target = $region21
    $region20: #{tpu_custom_call.1} parent=1 // pred_region
      %s69 = ssub.s32 6144, 6144
      %70 = vsyncadd [#allocation9], %s69
      %s71 = sshll.u32 [#allocation10], 4
      %s72 = int_to_ptr.vmem [resolvable:$true] %s71
      %77 = dma.hbm_to_vmem [thread:$0]  %s4, 6144, %s72, [#allocation9], 384, 384, 24
    $region21: #{tpu_custom_call.1} parent=1 // pred_fallthru
      _
    // Predicated region
    $region22: #{tpu_custom_call.1} parent=1 // pred_check
      _
    $region23: #{tpu_custom_call.1} parent=1 // pred_check_branch
      %79 = sbr.rel (0) target = $region25
    $region24: #{tpu_custom_call.1} parent=1 // pred_region
      %s81 = ssub.s32 2048, 2048
      %82 = vsyncadd [#allocation12], %s81
      %s83 = sshll.u32 [#allocation11], 4
      %s84 = int_to_ptr.vmem [resolvable:$true] %s83
      %89 = dma.hbm_to_vmem [thread:$0]  %s5, 2048, %s84, [#allocation12], 128, 128, 8
    $region25: #{tpu_custom_call.1} parent=1 // pred_fallthru
      _
    // Predicated region
    $region26: #{tpu_custom_call.1} parent=1 // pred_check
      _
    $region27: #{tpu_custom_call.1} parent=1 // pred_check_branch
      %91 = sbr.rel (0) target = $region29
    $region28: #{tpu_custom_call.1} parent=1 // pred_region
      _
    $region29: #{tpu_custom_call.1} parent=1 // pred_fallthru
      _
    // Predicated region
    $region30: #{tpu_custom_call.1} parent=1 // pred_check
      _
    $region31: #{tpu_custom_call.1} parent=1 // pred_check_branch
      %93 = sbr.rel (0) target = $region33
    $region32: #{tpu_custom_call.1} parent=1 // pred_region
      _
    $region33: #{tpu_custom_call.1} parent=1 // pred_fallthru
      _
    // Predicated region
    $region34: #{tpu_custom_call.1} parent=1 // pred_check
      _
    $region35: #{tpu_custom_call.1} parent=1 // pred_check_branch
      %95 = sbr.rel (0) target = $region37
    $region36: #{tpu_custom_call.1} parent=1 // pred_region
      %96 = dma.done [#allocation3], 1024
    $region37: #{tpu_custom_call.1} parent=1 // pred_fallthru
      _
    // Predicated region
    $region38: #{tpu_custom_call.1} parent=1 // pred_check
      _
    $region39: #{tpu_custom_call.1} parent=1 // pred_check_branch
      %98 = sbr.rel (0) target = $region41
    $region40: #{tpu_custom_call.1} parent=1 // pred_region
      %99 = dma.done [#allocation6], 2048
    $region41: #{tpu_custom_call.1} parent=1 // pred_fallthru
      _
    // Predicated region
    $region42: #{tpu_custom_call.1} parent=1 // pred_check
      _
    $region43: #{tpu_custom_call.1} parent=1 // pred_check_branch
      %101 = sbr.rel (0) target = $region45
    $region44: #{tpu_custom_call.1} parent=1 // pred_region
      %102 = dma.done [#allocation6], 512
    $region45: #{tpu_custom_call.1} parent=1 // pred_fallthru
      _
    // Predicated region
    $region46: #{tpu_custom_call.1} parent=1 // pred_check
      _
    $region47: #{tpu_custom_call.1} parent=1 // pred_check_branch
      %104 = sbr.rel (0) target = $region49
    $region48: #{tpu_custom_call.1} parent=1 // pred_region
      %105 = dma.done [#allocation9], 512
    $region49: #{tpu_custom_call.1} parent=1 // pred_fallthru
      _
    // Predicated region
    $region50: #{tpu_custom_call.1} parent=1 // pred_check
      _
    $region51: #{tpu_custom_call.1} parent=1 // pred_check_branch
      %107 = sbr.rel (0) target = $region53
    $region52: #{tpu_custom_call.1} parent=1 // pred_region
      %108 = dma.done [#allocation9], 6144
    $region53: #{tpu_custom_call.1} parent=1 // pred_fallthru
      _
    // Predicated region
    $region54: #{tpu_custom_call.1} parent=1 // pred_check
      _
    $region55: #{tpu_custom_call.1} parent=1 // pred_check_branch
      %110 = sbr.rel (0) target = $region57
    $region56: #{tpu_custom_call.1} parent=1 // pred_region
      %111 = dma.done [#allocation12], 2048
    $region57: #{tpu_custom_call.1} parent=1 // pred_fallthru
      _
    %v113 = vld [vmem:[#allocation7] sm:$0xf]
    %v114 = vld [vmem:[#allocation7 + $0x4] sm:$0xf]
    %v115 = vld [vmem:[#allocation7 + $0x8] sm:$0xf]
    %v116 = vld [vmem:[#allocation7 + $0xc] sm:$0xf]
    %v117 = vld [vmem:[#allocation7 + $0x10] sm:$0xf]
    %v118 = vld [vmem:[#allocation7 + $0x14] sm:$0xf]
    %v119 = vld [vmem:[#allocation7 + $0x18] sm:$0xf]
    %v120 = vld [vmem:[#allocation7 + $0x1c] sm:$0xf]
    %v121 = vld [vmem:[#allocation8] sm:$0xf]
    %v122 = vld [vmem:[#allocation8 + $0x4] sm:$0xf]
    %v123 = vld [vmem:[#allocation8 + $0x8] sm:$0xf]
    %v124 = vld [vmem:[#allocation8 + $0xc] sm:$0xf]
    %v125 = vld [vmem:[#allocation8 + $0x10] sm:$0xf]
    %v126 = vld [vmem:[#allocation8 + $0x14] sm:$0xf]
    %v127 = vld [vmem:[#allocation8 + $0x18] sm:$0xf]
    %v128 = vld [vmem:[#allocation8 + $0x1c] sm:$0xf]
    %v129 = vld [vmem:[#allocation2] sm:$0xf]
    %v130 = vld [vmem:[#allocation2 + $0x4] sm:$0xf]
    %v131 = vld [vmem:[#allocation2 + $0x8] sm:$0xf]
    %v132 = vld [vmem:[#allocation2 + $0xc] sm:$0xf]
    %v133 = vld [vmem:[#allocation2 + $0x10] sm:$0xf]
    %v134 = vld [vmem:[#allocation2 + $0x14] sm:$0xf]
    %v135 = vld [vmem:[#allocation2 + $0x18] sm:$0xf]
    %v136 = vld [vmem:[#allocation2 + $0x1c] sm:$0xf]
    %v137 = vld [vmem:[#allocation2 + $0x20] sm:$0xf]
    %v138 = vld [vmem:[#allocation2 + $0x24] sm:$0xf]
    %v139 = vld [vmem:[#allocation2 + $0x28] sm:$0xf]
    %v140 = vld [vmem:[#allocation2 + $0x2c] sm:$0xf]
    %v141 = vld [vmem:[#allocation2 + $0x30] sm:$0xf]
    %v142 = vld [vmem:[#allocation2 + $0x34] sm:$0xf]
    %v143 = vld [vmem:[#allocation2 + $0x38] sm:$0xf]
    %v144 = vld [vmem:[#allocation2 + $0x3c] sm:$0xf]
    %v145 = vld [vmem:[#allocation5] sm:$0xff]
    %v146 = vld [vmem:[#allocation5 + $0x8] sm:$0xff]
    %v147 = vld [vmem:[#allocation5 + $0x10] sm:$0xff]
    %v148 = vld [vmem:[#allocation5 + $0x18] sm:$0xff]
    %v149 = vld [vmem:[#allocation5 + $0x20] sm:$0xff]
    %v150 = vld [vmem:[#allocation5 + $0x28] sm:$0xff]
    %v151 = vld [vmem:[#allocation5 + $0x30] sm:$0xff]
    %v152 = vld [vmem:[#allocation5 + $0x38] sm:$0xff]
    %v153 = vld [vmem:[#allocation5 + $0x40] sm:$0xff]
    %v154 = vld [vmem:[#allocation5 + $0x48] sm:$0xff]
    %v155 = vld [vmem:[#allocation5 + $0x50] sm:$0xff]
    %v156 = vld [vmem:[#allocation5 + $0x58] sm:$0xff]
    %v157 = vld [vmem:[#allocation5 + $0x60] sm:$0xff]
    %v158 = vld [vmem:[#allocation5 + $0x68] sm:$0xff]
    %v159 = vld [vmem:[#allocation5 + $0x70] sm:$0xff]
    %v160 = vld [vmem:[#allocation5 + $0x78] sm:$0xff]
    %v161 = vld [vmem:[#allocation10] sm:$0xff]
    %v162 = vld [vmem:[#allocation10 + $0x8] sm:$0xff]
    %v163 = vld [vmem:[#allocation10 + $0x10] sm:$0xff]
    %v164 = vld [vmem:[#allocation10 + $0x18] sm:$0xff]
    %v165 = vld [vmem:[#allocation10 + $0x20] sm:$0xff]
    %v166 = vld [vmem:[#allocation10 + $0x28] sm:$0xff]
    %v167 = vld [vmem:[#allocation10 + $0x30] sm:$0xff]
    %v168 = vld [vmem:[#allocation10 + $0x38] sm:$0xff]
    %v169 = vld [vmem:[#allocation10 + $0x40] sm:$0xff]
    %v170 = vld [vmem:[#allocation10 + $0x48] sm:$0xff]
    %v171 = vld [vmem:[#allocation10 + $0x50] sm:$0xff]
    %v172 = vld [vmem:[#allocation10 + $0x58] sm:$0xff]
    %v173 = vld [vmem:[#allocation10 + $0x60] sm:$0xff]
    %v174 = vld [vmem:[#allocation10 + $0x68] sm:$0xff]
    %v175 = vld [vmem:[#allocation10 + $0x70] sm:$0xff]
    %v176 = vld [vmem:[#allocation10 + $0x78] sm:$0xff]
    %v177 = vld [vmem:[#allocation10 + $0x80] sm:$0xff]
    %v178 = vld [vmem:[#allocation10 + $0x88] sm:$0xff]
    %v179 = vld [vmem:[#allocation10 + $0x90] sm:$0xff]
    %v180 = vld [vmem:[#allocation10 + $0x98] sm:$0xff]
    %v181 = vld [vmem:[#allocation10 + $0xa0] sm:$0xff]
    %v182 = vld [vmem:[#allocation10 + $0xa8] sm:$0xff]
    %v183 = vld [vmem:[#allocation10 + $0xb0] sm:$0xff]
    %v184 = vld [vmem:[#allocation10 + $0xb8] sm:$0xff]
    %v185 = vld [vmem:[#allocation10 + $0xc0] sm:$0xff]
    %v186 = vld [vmem:[#allocation10 + $0xc8] sm:$0xff]
    %v187 = vld [vmem:[#allocation10 + $0xd0] sm:$0xff]
    %v188 = vld [vmem:[#allocation10 + $0xd8] sm:$0xff]
    %v189 = vld [vmem:[#allocation10 + $0xe0] sm:$0xff]
    %v190 = vld [vmem:[#allocation10 + $0xe8] sm:$0xff]
    %v191 = vld [vmem:[#allocation10 + $0xf0] sm:$0xff]
    %v192 = vld [vmem:[#allocation10 + $0xf8] sm:$0xff]
    %v193 = vld [vmem:[#allocation10 + $0x100] sm:$0xff]
    %v194 = vld [vmem:[#allocation10 + $0x108] sm:$0xff]
    %v195 = vld [vmem:[#allocation10 + $0x110] sm:$0xff]
    %v196 = vld [vmem:[#allocation10 + $0x118] sm:$0xff]
    %v197 = vld [vmem:[#allocation10 + $0x120] sm:$0xff]
    %v198 = vld [vmem:[#allocation10 + $0x128] sm:$0xff]
    %v199 = vld [vmem:[#allocation10 + $0x130] sm:$0xff]
    %v200 = vld [vmem:[#allocation10 + $0x138] sm:$0xff]
    %v201 = vld [vmem:[#allocation10 + $0x140] sm:$0xff]
    %v202 = vld [vmem:[#allocation10 + $0x148] sm:$0xff]
    %v203 = vld [vmem:[#allocation10 + $0x150] sm:$0xff]
    %v204 = vld [vmem:[#allocation10 + $0x158] sm:$0xff]
    %v205 = vld [vmem:[#allocation10 + $0x160] sm:$0xff]
    %v206 = vld [vmem:[#allocation10 + $0x168] sm:$0xff]
    %v207 = vld [vmem:[#allocation10 + $0x170] sm:$0xff]
    %v208 = vld [vmem:[#allocation10 + $0x178] sm:$0xff]
    %v225 = vunpack.c.l.b16 %v129
    %v226 = vunpack.c.l.b16 %v130
    %v227 = vunpack.c.l.b16 %v131
    %v228 = vunpack.c.l.b16 %v132
    %v229 = vunpack.c.l.b16 %v133
    %v230 = vunpack.c.l.b16 %v134
    %v231 = vunpack.c.l.b16 %v135
    %v232 = vunpack.c.l.b16 %v136
    %v233 = vunpack.c.l.b16 %v137
    %v234 = vunpack.c.l.b16 %v138
    %v235 = vunpack.c.l.b16 %v139
    %v236 = vunpack.c.l.b16 %v140
    %v237 = vunpack.c.l.b16 %v141
    %v238 = vunpack.c.l.b16 %v142
    %v239 = vunpack.c.l.b16 %v143
    %v240 = vunpack.c.l.b16 %v144
    %v241 = vpack.c.b16 %v226, %v225
    %v242 = vpack.c.b16 %v228, %v227
    %v243 = vpack.c.b16 %v230, %v229
    %v244 = vpack.c.b16 %v232, %v231
    %v245 = vpack.c.b16 %v234, %v233
    %v246 = vpack.c.b16 %v236, %v235
    %v247 = vpack.c.b16 %v238, %v237
    %v248 = vpack.c.b16 %v240, %v239
    %v305 = vunpack.c.l.b16 %v161
    %v306 = vunpack.c.h.b16 %v161
    %v307 = vunpack.c.l.b16 %v162
    %v308 = vunpack.c.h.b16 %v162
    %v309 = vunpack.c.l.b16 %v163
    %v310 = vunpack.c.h.b16 %v163
    %v311 = vunpack.c.l.b16 %v164
    %v312 = vunpack.c.h.b16 %v164
    %v313 = vunpack.c.l.b16 %v165
    %v314 = vunpack.c.h.b16 %v165
    %v315 = vunpack.c.l.b16 %v166
    %v316 = vunpack.c.h.b16 %v166
    %v317 = vunpack.c.l.b16 %v167
    %v318 = vunpack.c.h.b16 %v167
    %v319 = vunpack.c.l.b16 %v168
    %v320 = vunpack.c.h.b16 %v168
    %v321 = vunpack.c.l.b16 %v169
    %v322 = vunpack.c.h.b16 %v169
    %v323 = vunpack.c.l.b16 %v170
    %v324 = vunpack.c.h.b16 %v170
    %v325 = vunpack.c.l.b16 %v171
    %v326 = vunpack.c.h.b16 %v171
    %v327 = vunpack.c.l.b16 %v172
    %v328 = vunpack.c.h.b16 %v172
    %v329 = vunpack.c.l.b16 %v173
    %v330 = vunpack.c.h.b16 %v173
    %v331 = vunpack.c.l.b16 %v174
    %v332 = vunpack.c.h.b16 %v174
    %v333 = vunpack.c.l.b16 %v175
    %v334 = vunpack.c.h.b16 %v175
    %v335 = vunpack.c.l.b16 %v176
    %v336 = vunpack.c.h.b16 %v176
    %v337 = vunpack.c.l.b16 %v177
    %v338 = vunpack.c.h.b16 %v177
    %v339 = vunpack.c.l.b16 %v178
    %v340 = vunpack.c.h.b16 %v178
    %v341 = vunpack.c.l.b16 %v179
    %v342 = vunpack.c.h.b16 %v179
    %v343 = vunpack.c.l.b16 %v180
    %v344 = vunpack.c.h.b16 %v180
    %v345 = vunpack.c.l.b16 %v181
    %v346 = vunpack.c.h.b16 %v181
    %v347 = vunpack.c.l.b16 %v182
    %v348 = vunpack.c.h.b16 %v182
    %v349 = vunpack.c.l.b16 %v183
    %v350 = vunpack.c.h.b16 %v183
    %v351 = vunpack.c.l.b16 %v184
    %v352 = vunpack.c.h.b16 %v184
    %v353 = vunpack.c.l.b16 %v185
    %v354 = vunpack.c.h.b16 %v185
    %v355 = vunpack.c.l.b16 %v186
    %v356 = vunpack.c.h.b16 %v186
    %v357 = vunpack.c.l.b16 %v187
    %v358 = vunpack.c.h.b16 %v187
    %v359 = vunpack.c.l.b16 %v188
    %v360 = vunpack.c.h.b16 %v188
    %v361 = vunpack.c.l.b16 %v189
    %v362 = vunpack.c.h.b16 %v189
    %v363 = vunpack.c.l.b16 %v190
    %v364 = vunpack.c.h.b16 %v190
    %v365 = vunpack.c.l.b16 %v191
    %v366 = vunpack.c.h.b16 %v191
    %v367 = vunpack.c.l.b16 %v192
    %v368 = vunpack.c.h.b16 %v192
    %v369 = vunpack.c.l.b16 %v193
    %v370 = vunpack.c.h.b16 %v193
    %v371 = vunpack.c.l.b16 %v194
    %v372 = vunpack.c.h.b16 %v194
    %v373 = vunpack.c.l.b16 %v195
    %v374 = vunpack.c.h.b16 %v195
    %v375 = vunpack.c.l.b16 %v196
    %v376 = vunpack.c.h.b16 %v196
    %v377 = vunpack.c.l.b16 %v197
    %v378 = vunpack.c.h.b16 %v197
    %v379 = vunpack.c.l.b16 %v198
    %v380 = vunpack.c.h.b16 %v198
    %v381 = vunpack.c.l.b16 %v199
    %v382 = vunpack.c.h.b16 %v199
    %v383 = vunpack.c.l.b16 %v200
    %v384 = vunpack.c.h.b16 %v200
    %v385 = vunpack.c.l.b16 %v201
    %v386 = vunpack.c.h.b16 %v201
    %v387 = vunpack.c.l.b16 %v202
    %v388 = vunpack.c.h.b16 %v202
    %v389 = vunpack.c.l.b16 %v203
    %v390 = vunpack.c.h.b16 %v203
    %v391 = vunpack.c.l.b16 %v204
    %v392 = vunpack.c.h.b16 %v204
    %v393 = vunpack.c.l.b16 %v205
    %v394 = vunpack.c.h.b16 %v205
    %v395 = vunpack.c.l.b16 %v206
    %v396 = vunpack.c.h.b16 %v206
    %v397 = vunpack.c.l.b16 %v207
    %v398 = vunpack.c.h.b16 %v207
    %v399 = vunpack.c.l.b16 %v208
    %v400 = vunpack.c.h.b16 %v208
    %v401 = vpack.c.b16 %v311, %v305
    %v402 = vpack.c.b16 %v312, %v306
    %v403 = vpack.c.b16 %v313, %v307
    %v404 = vpack.c.b16 %v314, %v308
    %v405 = vpack.c.b16 %v315, %v309
    %v406 = vpack.c.b16 %v316, %v310
    %v407 = vpack.c.b16 %v323, %v317
    %v408 = vpack.c.b16 %v324, %v318
    %v409 = vpack.c.b16 %v325, %v319
    %v410 = vpack.c.b16 %v326, %v320
    %v411 = vpack.c.b16 %v327, %v321
    %v412 = vpack.c.b16 %v328, %v322
    %v413 = vpack.c.b16 %v335, %v329
    %v414 = vpack.c.b16 %v336, %v330
    %v415 = vpack.c.b16 %v337, %v331
    %v416 = vpack.c.b16 %v338, %v332
    %v417 = vpack.c.b16 %v339, %v333
    %v418 = vpack.c.b16 %v340, %v334
    %v419 = vpack.c.b16 %v347, %v341
    %v420 = vpack.c.b16 %v348, %v342
    %v421 = vpack.c.b16 %v349, %v343
    %v422 = vpack.c.b16 %v350, %v344
    %v423 = vpack.c.b16 %v351, %v345
    %v424 = vpack.c.b16 %v352, %v346
    %v425 = vpack.c.b16 %v359, %v353
    %v426 = vpack.c.b16 %v360, %v354
    %v427 = vpack.c.b16 %v361, %v355
    %v428 = vpack.c.b16 %v362, %v356
    %v429 = vpack.c.b16 %v363, %v357
    %v430 = vpack.c.b16 %v364, %v358
    %v431 = vpack.c.b16 %v371, %v365
    %v432 = vpack.c.b16 %v372, %v366
    %v433 = vpack.c.b16 %v373, %v367
    %v434 = vpack.c.b16 %v374, %v368
    %v435 = vpack.c.b16 %v375, %v369
    %v436 = vpack.c.b16 %v376, %v370
    %v437 = vpack.c.b16 %v383, %v377
    %v438 = vpack.c.b16 %v384, %v378
    %v439 = vpack.c.b16 %v385, %v379
    %v440 = vpack.c.b16 %v386, %v380
    %v441 = vpack.c.b16 %v387, %v381
    %v442 = vpack.c.b16 %v388, %v382
    %v443 = vpack.c.b16 %v395, %v389
    %v444 = vpack.c.b16 %v396, %v390
    %v445 = vpack.c.b16 %v397, %v391
    %v446 = vpack.c.b16 %v398, %v392
    %v447 = vpack.c.b16 %v399, %v393
    %v448 = vpack.c.b16 %v400, %v394
    %497 = vmatprep.subr.bf16.mxu0 %v402
    %498 = vmatpush1.bf16.msra.mxu0 %v401
    %499 = vmatprep.subr.bf16.mxu0 %v408
    %500 = vmatpush1.bf16.msra.mxu0 %v407
    %501 = vmatprep.subr.bf16.mxu0 %v414
    %502 = vmatpush1.bf16.msra.mxu0 %v413
    %503 = vmatprep.subr.bf16.mxu0 %v420
    %504 = vmatpush1.bf16.msra.mxu0 %v419
    %505 = vmatprep.subr.bf16.mxu0 %v426
    %506 = vmatpush1.bf16.msra.mxu0 %v425
    %507 = vmatprep.subr.bf16.mxu0 %v432
    %508 = vmatpush1.bf16.msra.mxu0 %v431
    %509 = vmatprep.subr.bf16.mxu0 %v438
    %510 = vmatpush1.bf16.msra.mxu0 %v437
    %511 = vmatprep.subr.bf16.mxu0 %v444
    %512 = vmatpush1.bf16.msra.mxu0 %v443
    %513 = vmatprep.subr.bf16.mxu0 0
    %514 = vmatpush1.bf16.msra.mxu0 0
    %515 = vmatprep.subr.bf16.mxu0 0
    %516 = vmatpush1.bf16.msra.mxu0 0
    %517 = vmatprep.subr.bf16.mxu0 0
    %518 = vmatpush1.bf16.msra.mxu0 0
    %519 = vmatprep.subr.bf16.mxu0 0
    %520 = vmatpush1.bf16.msra.mxu0 0
    %521 = vmatprep.subr.bf16.mxu0 0
    %522 = vmatpush1.bf16.msra.mxu0 0
    %523 = vmatprep.subr.bf16.mxu0 0
    %524 = vmatpush1.bf16.msra.mxu0 0
    %525 = vmatprep.subr.bf16.mxu0 0
    %526 = vmatpush1.bf16.msra.mxu0 0
    %527 = vmatprep.subr.bf16.mxu0 0
    %528 = vmatpush1.bf16.msra.mxu0 0
    %529 = vmatprep.mubr.bf16.mxu0 0
    %530 = vmatmul.mubr.bf16.gmra.mrb[0].mxu0 %v241
    %v531 = vpop.f32.mrb[0].mxu0
    %v532 = vadd.f32 0.0, %v531
    %v533 = vpop.f32.mrb[0].mxu0
    %v534 = vadd.f32 0.0, %v533
    %v535 = vpop.f32.mrb[0].mxu0
    %v536 = vadd.f32 0.0, %v535
    %v537 = vpop.f32.mrb[0].mxu0
    %v538 = vadd.f32 0.0, %v537
    %539 = vmatprep.mubr.bf16.mxu0 0
    %540 = vmatmul.mubr.bf16.gmra.mrb[0].mxu0 %v242
    %v541 = vpop.f32.mrb[0].mxu0
    %v542 = vadd.f32 0.0, %v541
    %v543 = vpop.f32.mrb[0].mxu0
    %v544 = vadd.f32 0.0, %v543
    %v545 = vpop.f32.mrb[0].mxu0
    %v546 = vadd.f32 0.0, %v545
    %v547 = vpop.f32.mrb[0].mxu0
    %v548 = vadd.f32 0.0, %v547
    %549 = vmatprep.mubr.bf16.mxu0 0
    %550 = vmatmul.mubr.bf16.gmra.mrb[0].mxu0 %v243
    %v551 = vpop.f32.mrb[0].mxu0
    %v552 = vadd.f32 0.0, %v551
    %v553 = vpop.f32.mrb[0].mxu0
    %v554 = vadd.f32 0.0, %v553
    %v555 = vpop.f32.mrb[0].mxu0
    %v556 = vadd.f32 0.0, %v555
    %v557 = vpop.f32.mrb[0].mxu0
    %v558 = vadd.f32 0.0, %v557
    %559 = vmatprep.mubr.bf16.mxu0 0
    %560 = vmatmul.mubr.bf16.gmra.mrb[0].mxu0 %v244
    %v561 = vpop.f32.mrb[0].mxu0
    %v562 = vadd.f32 0.0, %v561
    %v563 = vpop.f32.mrb[0].mxu0
    %v564 = vadd.f32 0.0, %v563
    %v565 = vpop.f32.mrb[0].mxu0
    %v566 = vadd.f32 0.0, %v565
    %v567 = vpop.f32.mrb[0].mxu0
    %v568 = vadd.f32 0.0, %v567
    %569 = vmatprep.mubr.bf16.mxu0 0
    %570 = vmatmul.mubr.bf16.gmra.mrb[0].mxu0 %v245
    %v571 = vpop.f32.mrb[0].mxu0
    %v572 = vadd.f32 0.0, %v571
    %v573 = vpop.f32.mrb[0].mxu0
    %v574 = vadd.f32 0.0, %v573
    %v575 = vpop.f32.mrb[0].mxu0
    %v576 = vadd.f32 0.0, %v575
    %v577 = vpop.f32.mrb[0].mxu0
    %v578 = vadd.f32 0.0, %v577
    %579 = vmatprep.mubr.bf16.mxu0 0
    %580 = vmatmul.mubr.bf16.gmra.mrb[0].mxu0 %v246
    %v581 = vpop.f32.mrb[0].mxu0
    %v582 = vadd.f32 0.0, %v581
    %v583 = vpop.f32.mrb[0].mxu0
    %v584 = vadd.f32 0.0, %v583
    %v585 = vpop.f32.mrb[0].mxu0
    %v586 = vadd.f32 0.0, %v585
    %v587 = vpop.f32.mrb[0].mxu0
    %v588 = vadd.f32 0.0, %v587
    %589 = vmatprep.mubr.bf16.mxu0 0
    %590 = vmatmul.mubr.bf16.gmra.mrb[0].mxu0 %v247
    %v591 = vpop.f32.mrb[0].mxu0
    %v592 = vadd.f32 0.0, %v591
    %v593 = vpop.f32.mrb[0].mxu0
    %v594 = vadd.f32 0.0, %v593
    %v595 = vpop.f32.mrb[0].mxu0
    %v596 = vadd.f32 0.0, %v595
    %v597 = vpop.f32.mrb[0].mxu0
    %v598 = vadd.f32 0.0, %v597
    %599 = vmatprep.mubr.bf16.mxu0 0
    %600 = vmatmul.mubr.bf16.gmra.mrb[0].mxu0 %v248
    %v601 = vpop.f32.mrb[0].mxu0
    %v602 = vadd.f32 0.0, %v601
    %v603 = vpop.f32.mrb[0].mxu0
    %v604 = vadd.f32 0.0, %v603
    %v605 = vpop.f32.mrb[0].mxu0
    %v606 = vadd.f32 0.0, %v605
    %v607 = vpop.f32.mrb[0].mxu0
    %v608 = vadd.f32 0.0, %v607
    %609 = vdwg.mxu0
    %610 = vmatprep.subr.bf16.mxu0 %v404
    %611 = vmatpush1.bf16.msra.mxu0 %v403
    %612 = vmatprep.subr.bf16.mxu0 %v410
    %613 = vmatpush1.bf16.msra.mxu0 %v409
    %614 = vmatprep.subr.bf16.mxu0 %v416
    %615 = vmatpush1.bf16.msra.mxu0 %v415
    %616 = vmatprep.subr.bf16.mxu0 %v422
    %617 = vmatpush1.bf16.msra.mxu0 %v421
    %618 = vmatprep.subr.bf16.mxu0 %v428
    %619 = vmatpush1.bf16.msra.mxu0 %v427
    %620 = vmatprep.subr.bf16.mxu0 %v434
    %621 = vmatpush1.bf16.msra.mxu0 %v433
    %622 = vmatprep.subr.bf16.mxu0 %v440
    %623 = vmatpush1.bf16.msra.mxu0 %v439
    %624 = vmatprep.subr.bf16.mxu0 %v446
    %625 = vmatpush1.bf16.msra.mxu0 %v445
    %626 = vmatprep.subr.bf16.mxu0 0
    %627 = vmatpush1.bf16.msra.mxu0 0
    %628 = vmatprep.subr.bf16.mxu0 0
    %629 = vmatpush1.bf16.msra.mxu0 0
    %630 = vmatprep.subr.bf16.mxu0 0
    %631 = vmatpush1.bf16.msra.mxu0 0
    %632 = vmatprep.subr.bf16.mxu0 0
    %633 = vmatpush1.bf16.msra.mxu0 0
    %634 = vmatprep.subr.bf16.mxu0 0
    %635 = vmatpush1.bf16.msra.mxu0 0
    %636 = vmatprep.subr.bf16.mxu0 0
    %637 = vmatpush1.bf16.msra.mxu0 0
    %638 = vmatprep.subr.bf16.mxu0 0
    %639 = vmatpush1.bf16.msra.mxu0 0
    %640 = vmatprep.subr.bf16.mxu0 0
    %641 = vmatpush1.bf16.msra.mxu0 0
    %642 = vmatprep.mubr.bf16.mxu0 0
    %643 = vmatmul.mubr.bf16.gmra.mrb[0].mxu0 %v241
    %v644 = vpop.f32.mrb[0].mxu0
    %v645 = vadd.f32 0.0, %v644
    %v646 = vpop.f32.mrb[0].mxu0
    %v647 = vadd.f32 0.0, %v646
    %v648 = vpop.f32.mrb[0].mxu0
    %v649 = vadd.f32 0.0, %v648
    %v650 = vpop.f32.mrb[0].mxu0
    %v651 = vadd.f32 0.0, %v650
    %652 = vmatprep.mubr.bf16.mxu0 0
    %653 = vmatmul.mubr.bf16.gmra.mrb[0].mxu0 %v242
    %v654 = vpop.f32.mrb[0].mxu0
    %v655 = vadd.f32 0.0, %v654
    %v656 = vpop.f32.mrb[0].mxu0
    %v657 = vadd.f32 0.0, %v656
    %v658 = vpop.f32.mrb[0].mxu0
    %v659 = vadd.f32 0.0, %v658
    %v660 = vpop.f32.mrb[0].mxu0
    %v661 = vadd.f32 0.0, %v660
    %662 = vmatprep.mubr.bf16.mxu0 0
    %663 = vmatmul.mubr.bf16.gmra.mrb[0].mxu0 %v243
    %v664 = vpop.f32.mrb[0].mxu0
    %v665 = vadd.f32 0.0, %v664
    %v666 = vpop.f32.mrb[0].mxu0
    %v667 = vadd.f32 0.0, %v666
    %v668 = vpop.f32.mrb[0].mxu0
    %v669 = vadd.f32 0.0, %v668
    %v670 = vpop.f32.mrb[0].mxu0
    %v671 = vadd.f32 0.0, %v670
    %672 = vmatprep.mubr.bf16.mxu0 0
    %673 = vmatmul.mubr.bf16.gmra.mrb[0].mxu0 %v244
    %v674 = vpop.f32.mrb[0].mxu0
    %v675 = vadd.f32 0.0, %v674
    %v676 = vpop.f32.mrb[0].mxu0
    %v677 = vadd.f32 0.0, %v676
    %v678 = vpop.f32.mrb[0].mxu0
    %v679 = vadd.f32 0.0, %v678
    %v680 = vpop.f32.mrb[0].mxu0
    %v681 = vadd.f32 0.0, %v680
    %682 = vmatprep.mubr.bf16.mxu0 0
    %683 = vmatmul.mubr.bf16.gmra.mrb[0].mxu0 %v245
    %v684 = vpop.f32.mrb[0].mxu0
    %v685 = vadd.f32 0.0, %v684
    %v686 = vpop.f32.mrb[0].mxu0
    %v687 = vadd.f32 0.0, %v686
    %v688 = vpop.f32.mrb[0].mxu0
    %v689 = vadd.f32 0.0, %v688
    %v690 = vpop.f32.mrb[0].mxu0
    %v691 = vadd.f32 0.0, %v690
    %692 = vmatprep.mubr.bf16.mxu0 0
    %693 = vmatmul.mubr.bf16.gmra.mrb[0].mxu0 %v246
    %v694 = vpop.f32.mrb[0].mxu0
    %v695 = vadd.f32 0.0, %v694
    %v696 = vpop.f32.mrb[0].mxu0
    %v697 = vadd.f32 0.0, %v696
    %v698 = vpop.f32.mrb[0].mxu0
    %v699 = vadd.f32 0.0, %v698
    %v700 = vpop.f32.mrb[0].mxu0
    %v701 = vadd.f32 0.0, %v700
    %702 = vmatprep.mubr.bf16.mxu0 0
    %703 = vmatmul.mubr.bf16.gmra.mrb[0].mxu0 %v247
    %v704 = vpop.f32.mrb[0].mxu0
    %v705 = vadd.f32 0.0, %v704
    %v706 = vpop.f32.mrb[0].mxu0
    %v707 = vadd.f32 0.0, %v706
    %v708 = vpop.f32.mrb[0].mxu0
    %v709 = vadd.f32 0.0, %v708
    %v710 = vpop.f32.mrb[0].mxu0
    %v711 = vadd.f32 0.0, %v710
    %712 = vmatprep.mubr.bf16.mxu0 0
    %713 = vmatmul.mubr.bf16.gmra.mrb[0].mxu0 %v248
    %v714 = vpop.f32.mrb[0].mxu0
    %v715 = vadd.f32 0.0, %v714
    %v716 = vpop.f32.mrb[0].mxu0
    %v717 = vadd.f32 0.0, %v716
    %v718 = vpop.f32.mrb[0].mxu0
    %v719 = vadd.f32 0.0, %v718
    %v720 = vpop.f32.mrb[0].mxu0
    %v721 = vadd.f32 0.0, %v720
    %722 = vdwg.mxu0
    %723 = vmatprep.subr.bf16.mxu0 %v406
    %724 = vmatpush1.bf16.msra.mxu0 %v405
    %725 = vmatprep.subr.bf16.mxu0 %v412
    %726 = vmatpush1.bf16.msra.mxu0 %v411
    %727 = vmatprep.subr.bf16.mxu0 %v418
    %728 = vmatpush1.bf16.msra.mxu0 %v417
    %729 = vmatprep.subr.bf16.mxu0 %v424
    %730 = vmatpush1.bf16.msra.mxu0 %v423
    %731 = vmatprep.subr.bf16.mxu0 %v430
    %732 = vmatpush1.bf16.msra.mxu0 %v429
    %733 = vmatprep.subr.bf16.mxu0 %v436
    %734 = vmatpush1.bf16.msra.mxu0 %v435
    %735 = vmatprep.subr.bf16.mxu0 %v442
    %736 = vmatpush1.bf16.msra.mxu0 %v441
    %737 = vmatprep.subr.bf16.mxu0 %v448
    %738 = vmatpush1.bf16.msra.mxu0 %v447
    %739 = vmatprep.subr.bf16.mxu0 0
    %740 = vmatpush1.bf16.msra.mxu0 0
    %741 = vmatprep.subr.bf16.mxu0 0
    %742 = vmatpush1.bf16.msra.mxu0 0
    %743 = vmatprep.subr.bf16.mxu0 0
    %744 = vmatpush1.bf16.msra.mxu0 0
    %745 = vmatprep.subr.bf16.mxu0 0
    %746 = vmatpush1.bf16.msra.mxu0 0
    %747 = vmatprep.subr.bf16.mxu0 0
    %748 = vmatpush1.bf16.msra.mxu0 0
    %749 = vmatprep.subr.bf16.mxu0 0
    %750 = vmatpush1.bf16.msra.mxu0 0
    %751 = vmatprep.subr.bf16.mxu0 0
    %752 = vmatpush1.bf16.msra.mxu0 0
    %753 = vmatprep.subr.bf16.mxu0 0
    %754 = vmatpush1.bf16.msra.mxu0 0
    %755 = vmatprep.mubr.bf16.mxu0 0
    %756 = vmatmul.mubr.bf16.gmra.mrb[0].mxu0 %v241
    %v757 = vpop.f32.mrb[0].mxu0
    %v758 = vadd.f32 0.0, %v757
    %v759 = vpop.f32.mrb[0].mxu0
    %v760 = vadd.f32 0.0, %v759
    %v761 = vpop.f32.mrb[0].mxu0
    %v762 = vadd.f32 0.0, %v761
    %v763 = vpop.f32.mrb[0].mxu0
    %v764 = vadd.f32 0.0, %v763
    %765 = vmatprep.mubr.bf16.mxu0 0
    %766 = vmatmul.mubr.bf16.gmra.mrb[0].mxu0 %v242
    %v767 = vpop.f32.mrb[0].mxu0
    %v768 = vadd.f32 0.0, %v767
    %v769 = vpop.f32.mrb[0].mxu0
    %v770 = vadd.f32 0.0, %v769
    %v771 = vpop.f32.mrb[0].mxu0
    %v772 = vadd.f32 0.0, %v771
    %v773 = vpop.f32.mrb[0].mxu0
    %v774 = vadd.f32 0.0, %v773
    %775 = vmatprep.mubr.bf16.mxu0 0
    %776 = vmatmul.mubr.bf16.gmra.mrb[0].mxu0 %v243
    %v777 = vpop.f32.mrb[0].mxu0
    %v778 = vadd.f32 0.0, %v777
    %v779 = vpop.f32.mrb[0].mxu0
    %v780 = vadd.f32 0.0, %v779
    %v781 = vpop.f32.mrb[0].mxu0
    %v782 = vadd.f32 0.0, %v781
    %v783 = vpop.f32.mrb[0].mxu0
    %v784 = vadd.f32 0.0, %v783
    %785 = vmatprep.mubr.bf16.mxu0 0
    %786 = vmatmul.mubr.bf16.gmra.mrb[0].mxu0 %v244
    %v787 = vpop.f32.mrb[0].mxu0
    %v788 = vadd.f32 0.0, %v787
    %v789 = vpop.f32.mrb[0].mxu0
    %v790 = vadd.f32 0.0, %v789
    %v791 = vpop.f32.mrb[0].mxu0
    %v792 = vadd.f32 0.0, %v791
    %v793 = vpop.f32.mrb[0].mxu0
    %v794 = vadd.f32 0.0, %v793
    %795 = vmatprep.mubr.bf16.mxu0 0
    %796 = vmatmul.mubr.bf16.gmra.mrb[0].mxu0 %v245
    %v797 = vpop.f32.mrb[0].mxu0
    %v798 = vadd.f32 0.0, %v797
    %v799 = vpop.f32.mrb[0].mxu0
    %v800 = vadd.f32 0.0, %v799
    %v801 = vpop.f32.mrb[0].mxu0
    %v802 = vadd.f32 0.0, %v801
    %v803 = vpop.f32.mrb[0].mxu0
    %v804 = vadd.f32 0.0, %v803
    %805 = vmatprep.mubr.bf16.mxu0 0
    %806 = vmatmul.mubr.bf16.gmra.mrb[0].mxu0 %v246
    %v807 = vpop.f32.mrb[0].mxu0
    %v808 = vadd.f32 0.0, %v807
    %v809 = vpop.f32.mrb[0].mxu0
    %v810 = vadd.f32 0.0, %v809
    %v811 = vpop.f32.mrb[0].mxu0
    %v812 = vadd.f32 0.0, %v811
    %v813 = vpop.f32.mrb[0].mxu0
    %v814 = vadd.f32 0.0, %v813
    %815 = vmatprep.mubr.bf16.mxu0 0
    %816 = vmatmul.mubr.bf16.gmra.mrb[0].mxu0 %v247
    %v817 = vpop.f32.mrb[0].mxu0
    %v818 = vadd.f32 0.0, %v817
    %v819 = vpop.f32.mrb[0].mxu0
    %v820 = vadd.f32 0.0, %v819
    %v821 = vpop.f32.mrb[0].mxu0
    %v822 = vadd.f32 0.0, %v821
    %v823 = vpop.f32.mrb[0].mxu0
    %v824 = vadd.f32 0.0, %v823
    %825 = vmatprep.mubr.bf16.mxu0 0
    %826 = vmatmul.mubr.bf16.gmra.mrb[0].mxu0 %v248
    %v827 = vpop.f32.mrb[0].mxu0
    %v828 = vadd.f32 0.0, %v827
    %v829 = vpop.f32.mrb[0].mxu0
    %v830 = vadd.f32 0.0, %v829
    %v831 = vpop.f32.mrb[0].mxu0
    %v832 = vadd.f32 0.0, %v831
    %v833 = vpop.f32.mrb[0].mxu0
    %v834 = vadd.f32 0.0, %v833
    %835 = vdwg.mxu0
    %v836 = vadd.f32 %v532, %v645
    %v837 = vadd.f32 %v534, %v647
    %v838 = vadd.f32 %v536, %v649
    %v839 = vadd.f32 %v538, %v651
    %v840 = vadd.f32 %v542, %v655
    %v841 = vadd.f32 %v544, %v657
    %v842 = vadd.f32 %v546, %v659
    %v843 = vadd.f32 %v548, %v661
    %v844 = vadd.f32 %v552, %v665
    %v845 = vadd.f32 %v554, %v667
    %v846 = vadd.f32 %v556, %v669
    %v847 = vadd.f32 %v558, %v671
    %v848 = vadd.f32 %v562, %v675
    %v849 = vadd.f32 %v564, %v677
    %v850 = vadd.f32 %v566, %v679
    %v851 = vadd.f32 %v568, %v681
    %v852 = vadd.f32 %v572, %v685
    %v853 = vadd.f32 %v574, %v687
    %v854 = vadd.f32 %v576, %v689
    %v855 = vadd.f32 %v578, %v691
    %v856 = vadd.f32 %v582, %v695
    %v857 = vadd.f32 %v584, %v697
    %v858 = vadd.f32 %v586, %v699
    %v859 = vadd.f32 %v588, %v701
    %v860 = vadd.f32 %v592, %v705
    %v861 = vadd.f32 %v594, %v707
    %v862 = vadd.f32 %v596, %v709
    %v863 = vadd.f32 %v598, %v711
    %v864 = vadd.f32 %v602, %v715
    %v865 = vadd.f32 %v604, %v717
    %v866 = vadd.f32 %v606, %v719
    %v867 = vadd.f32 %v608, %v721
    %v868 = vpack.c.bf16 %v536, %v532
    %v869 = vpack.c.bf16 %v538, %v534
    %v870 = vpack.c.bf16 %v546, %v542
    %v871 = vpack.c.bf16 %v548, %v544
    %v872 = vpack.c.bf16 %v556, %v552
    %v873 = vpack.c.bf16 %v558, %v554
    %v874 = vpack.c.bf16 %v566, %v562
    %v875 = vpack.c.bf16 %v568, %v564
    %v876 = vpack.c.bf16 %v576, %v572
    %v877 = vpack.c.bf16 %v578, %v574
    %v878 = vpack.c.bf16 %v586, %v582
    %v879 = vpack.c.bf16 %v588, %v584
    %v880 = vpack.c.bf16 %v596, %v592
    %v881 = vpack.c.bf16 %v598, %v594
    %v882 = vpack.c.bf16 %v606, %v602
    %v883 = vpack.c.bf16 %v608, %v604
    %v892 = vunpack.c.l.b16 %v113
    %v893 = vunpack.c.l.b16 %v114
    %v894 = vunpack.c.l.b16 %v115
    %v895 = vunpack.c.l.b16 %v116
    %v896 = vunpack.c.l.b16 %v117
    %v897 = vunpack.c.l.b16 %v118
    %v898 = vunpack.c.l.b16 %v119
    %v899 = vunpack.c.l.b16 %v120
    %v900 = vpack.c.b16 %v893, %v892
    %v901 = vpack.c.b16 %v895, %v894
    %v902 = vpack.c.b16 %v897, %v896
    %v903 = vpack.c.b16 %v899, %v898
    %vm904 = vcmask 523264
    %v906 = vsel %vm904, %v900, 0
    %v909 = vsel %vm904, %v901, 0
    %v912 = vsel %vm904, %v902, 0
    %v915 = vsel %vm904, %v903, 0
    %917 = vmatprep.subr.bf16.mxu0 %v869
    %918 = vmatpush1.bf16.msra.mxu0 %v868
    %919 = vmatprep.subr.bf16.mxu0 %v871
    %920 = vmatpush1.bf16.msra.mxu0 %v870
    %921 = vmatprep.subr.bf16.mxu0 %v873
    %922 = vmatpush1.bf16.msra.mxu0 %v872
    %923 = vmatprep.subr.bf16.mxu0 %v875
    %924 = vmatpush1.bf16.msra.mxu0 %v874
    %925 = vmatprep.subr.bf16.mxu0 0
    %926 = vmatpush1.bf16.msra.mxu0 0
    %927 = vmatprep.subr.bf16.mxu0 0
    %928 = vmatpush1.bf16.msra.mxu0 0
    %929 = vmatprep.subr.bf16.mxu0 0
    %930 = vmatpush1.bf16.msra.mxu0 0
    %931 = vmatprep.subr.bf16.mxu0 0
    %932 = vmatpush1.bf16.msra.mxu0 0
    %933 = vmatprep.subr.bf16.mxu0 0
    %934 = vmatpush1.bf16.msra.mxu0 0
    %935 = vmatprep.subr.bf16.mxu0 0
    %936 = vmatpush1.bf16.msra.mxu0 0
    %937 = vmatprep.subr.bf16.mxu0 0
    %938 = vmatpush1.bf16.msra.mxu0 0
    %939 = vmatprep.subr.bf16.mxu0 0
    %940 = vmatpush1.bf16.msra.mxu0 0
    %941 = vmatprep.subr.bf16.mxu0 0
    %942 = vmatpush1.bf16.msra.mxu0 0
    %943 = vmatprep.subr.bf16.mxu0 0
    %944 = vmatpush1.bf16.msra.mxu0 0
    %945 = vmatprep.subr.bf16.mxu0 0
    %946 = vmatpush1.bf16.msra.mxu0 0
    %947 = vmatprep.subr.bf16.mxu0 0
    %948 = vmatpush1.bf16.msra.mxu0 0
    %949 = vmatprep.mubr.bf16.mxu0 0
    %950 = vmatmul.mubr.bf16.gmra.mrb[0].mxu0 %v906
    %v951 = vpop.f32.mrb[0].mxu0
    %v952 = vadd.f32 0.0, %v951
    %v953 = vpop.f32.mrb[0].mxu0
    %v954 = vadd.f32 0.0, %v953
    %v955 = vpop.f32.mrb[0].mxu0
    %v956 = vadd.f32 0.0, %v955
    %v957 = vpop.f32.mrb[0].mxu0
    %v958 = vadd.f32 0.0, %v957
    %959 = vmatprep.mubr.bf16.mxu0 0
    %960 = vmatmul.mubr.bf16.gmra.mrb[0].mxu0 %v909
    %v961 = vpop.f32.mrb[0].mxu0
    %v962 = vadd.f32 0.0, %v961
    %v963 = vpop.f32.mrb[0].mxu0
    %v964 = vadd.f32 0.0, %v963
    %v965 = vpop.f32.mrb[0].mxu0
    %v966 = vadd.f32 0.0, %v965
    %v967 = vpop.f32.mrb[0].mxu0
    %v968 = vadd.f32 0.0, %v967
    %969 = vmatprep.mubr.bf16.mxu0 0
    %970 = vmatmul.mubr.bf16.gmra.mrb[0].mxu0 %v912
    %v971 = vpop.f32.mrb[0].mxu0
    %v972 = vadd.f32 0.0, %v971
    %v973 = vpop.f32.mrb[0].mxu0
    %v974 = vadd.f32 0.0, %v973
    %v975 = vpop.f32.mrb[0].mxu0
    %v976 = vadd.f32 0.0, %v975
    %v977 = vpop.f32.mrb[0].mxu0
    %v978 = vadd.f32 0.0, %v977
    %979 = vmatprep.mubr.bf16.mxu0 0
    %980 = vmatmul.mubr.bf16.gmra.mrb[0].mxu0 %v915
    %v981 = vpop.f32.mrb[0].mxu0
    %v982 = vadd.f32 0.0, %v981
    %v983 = vpop.f32.mrb[0].mxu0
    %v984 = vadd.f32 0.0, %v983
    %v985 = vpop.f32.mrb[0].mxu0
    %v986 = vadd.f32 0.0, %v985
    %v987 = vpop.f32.mrb[0].mxu0
    %v988 = vadd.f32 0.0, %v987
    %989 = vdwg.mxu0
    %990 = vmatprep.subr.bf16.mxu0 %v877
    %991 = vmatpush1.bf16.msra.mxu0 %v876
    %992 = vmatprep.subr.bf16.mxu0 %v879
    %993 = vmatpush1.bf16.msra.mxu0 %v878
    %994 = vmatprep.subr.bf16.mxu0 %v881
    %995 = vmatpush1.bf16.msra.mxu0 %v880
    %996 = vmatprep.subr.bf16.mxu0 %v883
    %997 = vmatpush1.bf16.msra.mxu0 %v882
    %998 = vmatprep.subr.bf16.mxu0 0
    %999 = vmatpush1.bf16.msra.mxu0 0
    %1000 = vmatprep.subr.bf16.mxu0 0
    %1001 = vmatpush1.bf16.msra.mxu0 0
    %1002 = vmatprep.subr.bf16.mxu0 0
    %1003 = vmatpush1.bf16.msra.mxu0 0
    %1004 = vmatprep.subr.bf16.mxu0 0
    %1005 = vmatpush1.bf16.msra.mxu0 0
    %1006 = vmatprep.subr.bf16.mxu0 0
    %1007 = vmatpush1.bf16.msra.mxu0 0
    %1008 = vmatprep.subr.bf16.mxu0 0
    %1009 = vmatpush1.bf16.msra.mxu0 0
    %1010 = vmatprep.subr.bf16.mxu0 0
    %1011 = vmatpush1.bf16.msra.mxu0 0
    %1012 = vmatprep.subr.bf16.mxu0 0
    %1013 = vmatpush1.bf16.msra.mxu0 0
    %1014 = vmatprep.subr.bf16.mxu0 0
    %1015 = vmatpush1.bf16.msra.mxu0 0
    %1016 = vmatprep.subr.bf16.mxu0 0
    %1017 = vmatpush1.bf16.msra.mxu0 0
    %1018 = vmatprep.subr.bf16.mxu0 0
    %1019 = vmatpush1.bf16.msra.mxu0 0
    %1020 = vmatprep.subr.bf16.mxu0 0
    %1021 = vmatpush1.bf16.msra.mxu0 0
    %1022 = vmatprep.mubr.bf16.mxu0 0
    %1023 = vmatmul.mubr.bf16.gmra.mrb[0].mxu0 %v906
    %v1024 = vpop.f32.mrb[0].mxu0
    %v1025 = vadd.f32 0.0, %v1024
    %v1026 = vpop.f32.mrb[0].mxu0
    %v1027 = vadd.f32 0.0, %v1026
    %v1028 = vpop.f32.mrb[0].mxu0
    %v1029 = vadd.f32 0.0, %v1028
    %v1030 = vpop.f32.mrb[0].mxu0
    %v1031 = vadd.f32 0.0, %v1030
    %1032 = vmatprep.mubr.bf16.mxu0 0
    %1033 = vmatmul.mubr.bf16.gmra.mrb[0].mxu0 %v909
    %v1034 = vpop.f32.mrb[0].mxu0
    %v1035 = vadd.f32 0.0, %v1034
    %v1036 = vpop.f32.mrb[0].mxu0
    %v1037 = vadd.f32 0.0, %v1036
    %v1038 = vpop.f32.mrb[0].mxu0
    %v1039 = vadd.f32 0.0, %v1038
    %v1040 = vpop.f32.mrb[0].mxu0
    %v1041 = vadd.f32 0.0, %v1040
    %1042 = vmatprep.mubr.bf16.mxu0 0
    %1043 = vmatmul.mubr.bf16.gmra.mrb[0].mxu0 %v912
    %v1044 = vpop.f32.mrb[0].mxu0
    %v1045 = vadd.f32 0.0, %v1044
    %v1046 = vpop.f32.mrb[0].mxu0
    %v1047 = vadd.f32 0.0, %v1046
    %v1048 = vpop.f32.mrb[0].mxu0
    %v1049 = vadd.f32 0.0, %v1048
    %v1050 = vpop.f32.mrb[0].mxu0
    %v1051 = vadd.f32 0.0, %v1050
    %1052 = vmatprep.mubr.bf16.mxu0 0
    %1053 = vmatmul.mubr.bf16.gmra.mrb[0].mxu0 %v915
    %v1054 = vpop.f32.mrb[0].mxu0
    %v1055 = vadd.f32 0.0, %v1054
    %v1056 = vpop.f32.mrb[0].mxu0
    %v1057 = vadd.f32 0.0, %v1056
    %v1058 = vpop.f32.mrb[0].mxu0
    %v1059 = vadd.f32 0.0, %v1058
    %v1060 = vpop.f32.mrb[0].mxu0
    %v1061 = vadd.f32 0.0, %v1060
    %1062 = vdwg.mxu0
    %v1063 = vadd.f32 %v836, %v952
    %v1064 = vadd.f32 %v837, %v954
    %v1065 = vadd.f32 %v838, %v956
    %v1066 = vadd.f32 %v839, %v958
    %v1067 = vadd.f32 %v840, %v962
    %v1068 = vadd.f32 %v841, %v964
    %v1069 = vadd.f32 %v842, %v966
    %v1070 = vadd.f32 %v843, %v968
    %v1071 = vadd.f32 %v844, %v972
    %v1072 = vadd.f32 %v845, %v974
    %v1073 = vadd.f32 %v846, %v976
    %v1074 = vadd.f32 %v847, %v978
    %v1075 = vadd.f32 %v848, %v982
    %v1076 = vadd.f32 %v849, %v984
    %v1077 = vadd.f32 %v850, %v986
    %v1078 = vadd.f32 %v851, %v988
    %v1079 = vadd.f32 %v852, %v1025
    %v1080 = vadd.f32 %v853, %v1027
    %v1081 = vadd.f32 %v854, %v1029
    %v1082 = vadd.f32 %v855, %v1031
    %v1083 = vadd.f32 %v856, %v1035
    %v1084 = vadd.f32 %v857, %v1037
    %v1085 = vadd.f32 %v858, %v1039
    %v1086 = vadd.f32 %v859, %v1041
    %v1087 = vadd.f32 %v860, %v1045
    %v1088 = vadd.f32 %v861, %v1047
    %v1089 = vadd.f32 %v862, %v1049
    %v1090 = vadd.f32 %v863, %v1051
    %v1091 = vadd.f32 %v864, %v1055
    %v1092 = vadd.f32 %v865, %v1057
    %v1093 = vadd.f32 %v866, %v1059
    %v1094 = vadd.f32 %v867, %v1061
    %v1095 = vpack.c.bf16 %v649, %v645
    %v1096 = vpack.c.bf16 %v651, %v647
    %v1097 = vpack.c.bf16 %v659, %v655
    %v1098 = vpack.c.bf16 %v661, %v657
    %v1099 = vpack.c.bf16 %v669, %v665
    %v1100 = vpack.c.bf16 %v671, %v667
    %v1101 = vpack.c.bf16 %v679, %v675
    %v1102 = vpack.c.bf16 %v681, %v677
    %v1103 = vpack.c.bf16 %v689, %v685
    %v1104 = vpack.c.bf16 %v691, %v687
    %v1105 = vpack.c.bf16 %v699, %v695
    %v1106 = vpack.c.bf16 %v701, %v697
    %v1107 = vpack.c.bf16 %v709, %v705
    %v1108 = vpack.c.bf16 %v711, %v707
    %v1109 = vpack.c.bf16 %v719, %v715
    %v1110 = vpack.c.bf16 %v721, %v717
    %v1119 = vunpack.c.l.b16 %v121
    %v1120 = vunpack.c.l.b16 %v122
    %v1121 = vunpack.c.l.b16 %v123
    %v1122 = vunpack.c.l.b16 %v124
    %v1123 = vunpack.c.l.b16 %v125
    %v1124 = vunpack.c.l.b16 %v126
    %v1125 = vunpack.c.l.b16 %v127
    %v1126 = vunpack.c.l.b16 %v128
    %v1127 = vpack.c.b16 %v1120, %v1119
    %v1128 = vpack.c.b16 %v1122, %v1121
    %v1129 = vpack.c.b16 %v1124, %v1123
    %v1130 = vpack.c.b16 %v1126, %v1125
    %v1132 = vsel %vm904, %v1127, 0
    %v1135 = vsel %vm904, %v1128, 0
    %v1138 = vsel %vm904, %v1129, 0
    %v1141 = vsel %vm904, %v1130, 0
    %1143 = vmatprep.subr.bf16.mxu0 %v1096
    %1144 = vmatpush1.bf16.msra.mxu0 %v1095
    %1145 = vmatprep.subr.bf16.mxu0 %v1098
    %1146 = vmatpush1.bf16.msra.mxu0 %v1097
    %1147 = vmatprep.subr.bf16.mxu0 %v1100
    %1148 = vmatpush1.bf16.msra.mxu0 %v1099
    %1149 = vmatprep.subr.bf16.mxu0 %v1102
    %1150 = vmatpush1.bf16.msra.mxu0 %v1101
    %1151 = vmatprep.subr.bf16.mxu0 0
    %1152 = vmatpush1.bf16.msra.mxu0 0
    %1153 = vmatprep.subr.bf16.mxu0 0
    %1154 = vmatpush1.bf16.msra.mxu0 0
    %1155 = vmatprep.subr.bf16.mxu0 0
    %1156 = vmatpush1.bf16.msra.mxu0 0
    %1157 = vmatprep.subr.bf16.mxu0 0
    %1158 = vmatpush1.bf16.msra.mxu0 0
    %1159 = vmatprep.subr.bf16.mxu0 0
    %1160 = vmatpush1.bf16.msra.mxu0 0
    %1161 = vmatprep.subr.bf16.mxu0 0
    %1162 = vmatpush1.bf16.msra.mxu0 0
    %1163 = vmatprep.subr.bf16.mxu0 0
    %1164 = vmatpush1.bf16.msra.mxu0 0
    %1165 = vmatprep.subr.bf16.mxu0 0
    %1166 = vmatpush1.bf16.msra.mxu0 0
    %1167 = vmatprep.subr.bf16.mxu0 0
    %1168 = vmatpush1.bf16.msra.mxu0 0
    %1169 = vmatprep.subr.bf16.mxu0 0
    %1170 = vmatpush1.bf16.msra.mxu0 0
    %1171 = vmatprep.subr.bf16.mxu0 0
    %1172 = vmatpush1.bf16.msra.mxu0 0
    %1173 = vmatprep.subr.bf16.mxu0 0
    %1174 = vmatpush1.bf16.msra.mxu0 0
    %1175 = vmatprep.mubr.bf16.mxu0 0
    %1176 = vmatmul.mubr.bf16.gmra.mrb[0].mxu0 %v1132
    %v1177 = vpop.f32.mrb[0].mxu0
    %v1178 = vadd.f32 0.0, %v1177
    %v1179 = vpop.f32.mrb[0].mxu0
    %v1180 = vadd.f32 0.0, %v1179
    %v1181 = vpop.f32.mrb[0].mxu0
    %v1182 = vadd.f32 0.0, %v1181
    %v1183 = vpop.f32.mrb[0].mxu0
    %v1184 = vadd.f32 0.0, %v1183
    %1185 = vmatprep.mubr.bf16.mxu0 0
    %1186 = vmatmul.mubr.bf16.gmra.mrb[0].mxu0 %v1135
    %v1187 = vpop.f32.mrb[0].mxu0
    %v1188 = vadd.f32 0.0, %v1187
    %v1189 = vpop.f32.mrb[0].mxu0
    %v1190 = vadd.f32 0.0, %v1189
    %v1191 = vpop.f32.mrb[0].mxu0
    %v1192 = vadd.f32 0.0, %v1191
    %v1193 = vpop.f32.mrb[0].mxu0
    %v1194 = vadd.f32 0.0, %v1193
    %1195 = vmatprep.mubr.bf16.mxu0 0
    %1196 = vmatmul.mubr.bf16.gmra.mrb[0].mxu0 %v1138
    %v1197 = vpop.f32.mrb[0].mxu0
    %v1198 = vadd.f32 0.0, %v1197
    %v1199 = vpop.f32.mrb[0].mxu0
    %v1200 = vadd.f32 0.0, %v1199
    %v1201 = vpop.f32.mrb[0].mxu0
    %v1202 = vadd.f32 0.0, %v1201
    %v1203 = vpop.f32.mrb[0].mxu0
    %v1204 = vadd.f32 0.0, %v1203
    %1205 = vmatprep.mubr.bf16.mxu0 0
    %1206 = vmatmul.mubr.bf16.gmra.mrb[0].mxu0 %v1141
    %v1207 = vpop.f32.mrb[0].mxu0
    %v1208 = vadd.f32 0.0, %v1207
    %v1209 = vpop.f32.mrb[0].mxu0
    %v1210 = vadd.f32 0.0, %v1209
    %v1211 = vpop.f32.mrb[0].mxu0
    %v1212 = vadd.f32 0.0, %v1211
    %v1213 = vpop.f32.mrb[0].mxu0
    %v1214 = vadd.f32 0.0, %v1213
    %1215 = vdwg.mxu0
    %1216 = vmatprep.subr.bf16.mxu0 %v1104
    %1217 = vmatpush1.bf16.msra.mxu0 %v1103
    %1218 = vmatprep.subr.bf16.mxu0 %v1106
    %1219 = vmatpush1.bf16.msra.mxu0 %v1105
    %1220 = vmatprep.subr.bf16.mxu0 %v1108
    %1221 = vmatpush1.bf16.msra.mxu0 %v1107
    %1222 = vmatprep.subr.bf16.mxu0 %v1110
    %1223 = vmatpush1.bf16.msra.mxu0 %v1109
    %1224 = vmatprep.subr.bf16.mxu0 0
    %1225 = vmatpush1.bf16.msra.mxu0 0
    %1226 = vmatprep.subr.bf16.mxu0 0
    %1227 = vmatpush1.bf16.msra.mxu0 0
    %1228 = vmatprep.subr.bf16.mxu0 0
    %1229 = vmatpush1.bf16.msra.mxu0 0
    %1230 = vmatprep.subr.bf16.mxu0 0
    %1231 = vmatpush1.bf16.msra.mxu0 0
    %1232 = vmatprep.subr.bf16.mxu0 0
    %1233 = vmatpush1.bf16.msra.mxu0 0
    %1234 = vmatprep.subr.bf16.mxu0 0
    %1235 = vmatpush1.bf16.msra.mxu0 0
    %1236 = vmatprep.subr.bf16.mxu0 0
    %1237 = vmatpush1.bf16.msra.mxu0 0
    %1238 = vmatprep.subr.bf16.mxu0 0
    %1239 = vmatpush1.bf16.msra.mxu0 0
    %1240 = vmatprep.subr.bf16.mxu0 0
    %1241 = vmatpush1.bf16.msra.mxu0 0
    %1242 = vmatprep.subr.bf16.mxu0 0
    %1243 = vmatpush1.bf16.msra.mxu0 0
    %1244 = vmatprep.subr.bf16.mxu0 0
    %1245 = vmatpush1.bf16.msra.mxu0 0
    %1246 = vmatprep.subr.bf16.mxu0 0
    %1247 = vmatpush1.bf16.msra.mxu0 0
    %1248 = vmatprep.mubr.bf16.mxu0 0
    %1249 = vmatmul.mubr.bf16.gmra.mrb[0].mxu0 %v1132
    %v1250 = vpop.f32.mrb[0].mxu0
    %v1251 = vadd.f32 0.0, %v1250
    %v1252 = vpop.f32.mrb[0].mxu0
    %v1253 = vadd.f32 0.0, %v1252
    %v1254 = vpop.f32.mrb[0].mxu0
    %v1255 = vadd.f32 0.0, %v1254
    %v1256 = vpop.f32.mrb[0].mxu0
    %v1257 = vadd.f32 0.0, %v1256
    %1258 = vmatprep.mubr.bf16.mxu0 0
    %1259 = vmatmul.mubr.bf16.gmra.mrb[0].mxu0 %v1135
    %v1260 = vpop.f32.mrb[0].mxu0
    %v1261 = vadd.f32 0.0, %v1260
    %v1262 = vpop.f32.mrb[0].mxu0
    %v1263 = vadd.f32 0.0, %v1262
    %v1264 = vpop.f32.mrb[0].mxu0
    %v1265 = vadd.f32 0.0, %v1264
    %v1266 = vpop.f32.mrb[0].mxu0
    %v1267 = vadd.f32 0.0, %v1266
    %1268 = vmatprep.mubr.bf16.mxu0 0
    %1269 = vmatmul.mubr.bf16.gmra.mrb[0].mxu0 %v1138
    %v1270 = vpop.f32.mrb[0].mxu0
    %v1271 = vadd.f32 0.0, %v1270
    %v1272 = vpop.f32.mrb[0].mxu0
    %v1273 = vadd.f32 0.0, %v1272
    %v1274 = vpop.f32.mrb[0].mxu0
    %v1275 = vadd.f32 0.0, %v1274
    %v1276 = vpop.f32.mrb[0].mxu0
    %v1277 = vadd.f32 0.0, %v1276
    %1278 = vmatprep.mubr.bf16.mxu0 0
    %1279 = vmatmul.mubr.bf16.gmra.mrb[0].mxu0 %v1141
    %v1280 = vpop.f32.mrb[0].mxu0
    %v1281 = vadd.f32 0.0, %v1280
    %v1282 = vpop.f32.mrb[0].mxu0
    %v1283 = vadd.f32 0.0, %v1282
    %v1284 = vpop.f32.mrb[0].mxu0
    %v1285 = vadd.f32 0.0, %v1284
    %v1286 = vpop.f32.mrb[0].mxu0
    %v1287 = vadd.f32 0.0, %v1286
    %1288 = vdwg.mxu0
    %v1289 = vadd.f32 %v1063, %v1178
    %v1290 = vadd.f32 %v1064, %v1180
    %v1291 = vadd.f32 %v1065, %v1182
    %v1292 = vadd.f32 %v1066, %v1184
    %v1293 = vadd.f32 %v1067, %v1188
    %v1294 = vadd.f32 %v1068, %v1190
    %v1295 = vadd.f32 %v1069, %v1192
    %v1296 = vadd.f32 %v1070, %v1194
    %v1297 = vadd.f32 %v1071, %v1198
    %v1298 = vadd.f32 %v1072, %v1200
    %v1299 = vadd.f32 %v1073, %v1202
    %v1300 = vadd.f32 %v1074, %v1204
    %v1301 = vadd.f32 %v1075, %v1208
    %v1302 = vadd.f32 %v1076, %v1210
    %v1303 = vadd.f32 %v1077, %v1212
    %v1304 = vadd.f32 %v1078, %v1214
    %v1305 = vadd.f32 %v1079, %v1251
    %v1306 = vadd.f32 %v1080, %v1253
    %v1307 = vadd.f32 %v1081, %v1255
    %v1308 = vadd.f32 %v1082, %v1257
    %v1309 = vadd.f32 %v1083, %v1261
    %v1310 = vadd.f32 %v1084, %v1263
    %v1311 = vadd.f32 %v1085, %v1265
    %v1312 = vadd.f32 %v1086, %v1267
    %v1313 = vadd.f32 %v1087, %v1271
    %v1314 = vadd.f32 %v1088, %v1273
    %v1315 = vadd.f32 %v1089, %v1275
    %v1316 = vadd.f32 %v1090, %v1277
    %v1317 = vadd.f32 %v1091, %v1281
    %v1318 = vadd.f32 %v1092, %v1283
    %v1319 = vadd.f32 %v1093, %v1285
    %v1320 = vadd.f32 %v1094, %v1287
    %v1321 = vld [vmem:[%s6] sm:$0x3]
    %v1323 = vlaneseq
    %v1324 = vshrl.u32 %v1323, 7
    %v1325 = vsub.s32 0, %v1324
    %v1326 = vrot.slane %v1321, %v1325
    %v1327 = vlaneseq
    %v1328 = vshrl.u32 %v1327, 7
    %v1329 = vsub.s32 1, %v1328
    %v1330 = vrot.slane %v1321, %v1329
    %v1333 = vadd.f32 %v1289, %v1326
    %v1334 = vadd.f32 %v1290, %v1330
    %v1335 = vadd.f32 %v1291, %v1326
    %v1336 = vadd.f32 %v1292, %v1330
    %v1337 = vadd.f32 %v1293, %v1326
    %v1338 = vadd.f32 %v1294, %v1330
    %v1339 = vadd.f32 %v1295, %v1326
    %v1340 = vadd.f32 %v1296, %v1330
    %v1341 = vadd.f32 %v1297, %v1326
    %v1342 = vadd.f32 %v1298, %v1330
    %v1343 = vadd.f32 %v1299, %v1326
    %v1344 = vadd.f32 %v1300, %v1330
    %v1345 = vadd.f32 %v1301, %v1326
    %v1346 = vadd.f32 %v1302, %v1330
    %v1347 = vadd.f32 %v1303, %v1326
    %v1348 = vadd.f32 %v1304, %v1330
    %v1349 = vadd.f32 %v1305, %v1326
    %v1350 = vadd.f32 %v1306, %v1330
    %v1351 = vadd.f32 %v1307, %v1326
    %v1352 = vadd.f32 %v1308, %v1330
    %v1353 = vadd.f32 %v1309, %v1326
    %v1354 = vadd.f32 %v1310, %v1330
    %v1355 = vadd.f32 %v1311, %v1326
    %v1356 = vadd.f32 %v1312, %v1330
    %v1357 = vadd.f32 %v1313, %v1326
    %v1358 = vadd.f32 %v1314, %v1330
    %v1359 = vadd.f32 %v1315, %v1326
    %v1360 = vadd.f32 %v1316, %v1330
    %v1361 = vadd.f32 %v1317, %v1326
    %v1362 = vadd.f32 %v1318, %v1330
    %v1363 = vadd.f32 %v1319, %v1326
    %v1364 = vadd.f32 %v1320, %v1330
    %v1365 = vxor.u32 %v1333, 2147483648
    %v1366 = vxor.u32 %v1335, 2147483648
    %v1367 = vxor.u32 %v1337, 2147483648
    %v1368 = vxor.u32 %v1339, 2147483648
    %v1369 = vxor.u32 %v1341, 2147483648
    %v1370 = vxor.u32 %v1343, 2147483648
    %v1371 = vxor.u32 %v1345, 2147483648
    %v1372 = vxor.u32 %v1347, 2147483648
    %v1373 = vxor.u32 %v1349, 2147483648
    %v1374 = vxor.u32 %v1351, 2147483648
    %v1375 = vxor.u32 %v1353, 2147483648
    %v1376 = vxor.u32 %v1355, 2147483648
    %v1377 = vxor.u32 %v1357, 2147483648
    %v1378 = vxor.u32 %v1359, 2147483648
    %v1379 = vxor.u32 %v1361, 2147483648
    %v1380 = vxor.u32 %v1363, 2147483648
    %v1381 = vmul.f32 %v1365, 1.442695
    %v1382 = vpow.pop %v1381
    %v1383 = vmul.f32 %v1366, 1.442695
    %v1384 = vpow.pop %v1383
    %v1385 = vmul.f32 %v1367, 1.442695
    %v1386 = vpow.pop %v1385
    %v1387 = vmul.f32 %v1368, 1.442695
    %v1388 = vpow.pop %v1387
    %v1389 = vmul.f32 %v1369, 1.442695
    %v1390 = vpow.pop %v1389
    %v1391 = vmul.f32 %v1370, 1.442695
    %v1392 = vpow.pop %v1391
    %v1393 = vmul.f32 %v1371, 1.442695
    %v1394 = vpow.pop %v1393
    %v1395 = vmul.f32 %v1372, 1.442695
    %v1396 = vpow.pop %v1395
    %v1397 = vmul.f32 %v1373, 1.442695
    %v1398 = vpow.pop %v1397
    %v1399 = vmul.f32 %v1374, 1.442695
    %v1400 = vpow.pop %v1399
    %v1401 = vmul.f32 %v1375, 1.442695
    %v1402 = vpow.pop %v1401
    %v1403 = vmul.f32 %v1376, 1.442695
    %v1404 = vpow.pop %v1403
    %v1405 = vmul.f32 %v1377, 1.442695
    %v1406 = vpow.pop %v1405
    %v1407 = vmul.f32 %v1378, 1.442695
    %v1408 = vpow.pop %v1407
    %v1409 = vmul.f32 %v1379, 1.442695
    %v1410 = vpow.pop %v1409
    %v1411 = vmul.f32 %v1380, 1.442695
    %v1412 = vpow.pop %v1411
    %v1413 = vadd.f32 %v1382, 1.0
    %v1414 = vadd.f32 %v1384, 1.0
    %v1415 = vadd.f32 %v1386, 1.0
    %v1416 = vadd.f32 %v1388, 1.0
    %v1417 = vadd.f32 %v1390, 1.0
    %v1418 = vadd.f32 %v1392, 1.0
    %v1419 = vadd.f32 %v1394, 1.0
    %v1420 = vadd.f32 %v1396, 1.0
    %v1421 = vadd.f32 %v1398, 1.0
    %v1422 = vadd.f32 %v1400, 1.0
    %v1423 = vadd.f32 %v1402, 1.0
    %v1424 = vadd.f32 %v1404, 1.0
    %v1425 = vadd.f32 %v1406, 1.0
    %v1426 = vadd.f32 %v1408, 1.0
    %v1427 = vadd.f32 %v1410, 1.0
    %v1428 = vadd.f32 %v1412, 1.0
    %v1429 = vrcp.pop %v1413
    %v1430 = vmul.f32 1.0, %v1429
    %v1431 = vrcp.pop %v1414
    %v1432 = vmul.f32 1.0, %v1431
    %v1433 = vrcp.pop %v1415
    %v1434 = vmul.f32 1.0, %v1433
    %v1435 = vrcp.pop %v1416
    %v1436 = vmul.f32 1.0, %v1435
    %v1437 = vrcp.pop %v1417
    %v1438 = vmul.f32 1.0, %v1437
    %v1439 = vrcp.pop %v1418
    %v1440 = vmul.f32 1.0, %v1439
    %v1441 = vrcp.pop %v1419
    %v1442 = vmul.f32 1.0, %v1441
    %v1443 = vrcp.pop %v1420
    %v1444 = vmul.f32 1.0, %v1443
    %v1445 = vrcp.pop %v1421
    %v1446 = vmul.f32 1.0, %v1445
    %v1447 = vrcp.pop %v1422
    %v1448 = vmul.f32 1.0, %v1447
    %v1449 = vrcp.pop %v1423
    %v1450 = vmul.f32 1.0, %v1449
    %v1451 = vrcp.pop %v1424
    %v1452 = vmul.f32 1.0, %v1451
    %v1453 = vrcp.pop %v1425
    %v1454 = vmul.f32 1.0, %v1453
    %v1455 = vrcp.pop %v1426
    %v1456 = vmul.f32 1.0, %v1455
    %v1457 = vrcp.pop %v1427
    %v1458 = vmul.f32 1.0, %v1457
    %v1459 = vrcp.pop %v1428
    %v1460 = vmul.f32 1.0, %v1459
    %v1461 = vxor.u32 %v1334, 2147483648
    %v1462 = vxor.u32 %v1336, 2147483648
    %v1463 = vxor.u32 %v1338, 2147483648
    %v1464 = vxor.u32 %v1340, 2147483648
    %v1465 = vxor.u32 %v1342, 2147483648
    %v1466 = vxor.u32 %v1344, 2147483648
    %v1467 = vxor.u32 %v1346, 2147483648
    %v1468 = vxor.u32 %v1348, 2147483648
    %v1469 = vxor.u32 %v1350, 2147483648
    %v1470 = vxor.u32 %v1352, 2147483648
    %v1471 = vxor.u32 %v1354, 2147483648
    %v1472 = vxor.u32 %v1356, 2147483648
    %v1473 = vxor.u32 %v1358, 2147483648
    %v1474 = vxor.u32 %v1360, 2147483648
    %v1475 = vxor.u32 %v1362, 2147483648
    %v1476 = vxor.u32 %v1364, 2147483648
    %v1477 = vmul.f32 %v1461, 1.442695
    %v1478 = vpow.pop %v1477
    %v1479 = vmul.f32 %v1462, 1.442695
    %v1480 = vpow.pop %v1479
    %v1481 = vmul.f32 %v1463, 1.442695
    %v1482 = vpow.pop %v1481
    %v1483 = vmul.f32 %v1464, 1.442695
    %v1484 = vpow.pop %v1483
    %v1485 = vmul.f32 %v1465, 1.442695
    %v1486 = vpow.pop %v1485
    %v1487 = vmul.f32 %v1466, 1.442695
    %v1488 = vpow.pop %v1487
    %v1489 = vmul.f32 %v1467, 1.442695
    %v1490 = vpow.pop %v1489
    %v1491 = vmul.f32 %v1468, 1.442695
    %v1492 = vpow.pop %v1491
    %v1493 = vmul.f32 %v1469, 1.442695
    %v1494 = vpow.pop %v1493
    %v1495 = vmul.f32 %v1470, 1.442695
    %v1496 = vpow.pop %v1495
    %v1497 = vmul.f32 %v1471, 1.442695
    %v1498 = vpow.pop %v1497
    %v1499 = vmul.f32 %v1472, 1.442695
    %v1500 = vpow.pop %v1499
    %v1501 = vmul.f32 %v1473, 1.442695
    %v1502 = vpow.pop %v1501
    %v1503 = vmul.f32 %v1474, 1.442695
    %v1504 = vpow.pop %v1503
    %v1505 = vmul.f32 %v1475, 1.442695
    %v1506 = vpow.pop %v1505
    %v1507 = vmul.f32 %v1476, 1.442695
    %v1508 = vpow.pop %v1507
    %v1509 = vadd.f32 %v1478, 1.0
    %v1510 = vadd.f32 %v1480, 1.0
    %v1511 = vadd.f32 %v1482, 1.0
    %v1512 = vadd.f32 %v1484, 1.0
    %v1513 = vadd.f32 %v1486, 1.0
    %v1514 = vadd.f32 %v1488, 1.0
    %v1515 = vadd.f32 %v1490, 1.0
    %v1516 = vadd.f32 %v1492, 1.0
    %v1517 = vadd.f32 %v1494, 1.0
    %v1518 = vadd.f32 %v1496, 1.0
    %v1519 = vadd.f32 %v1498, 1.0
    %v1520 = vadd.f32 %v1500, 1.0
    %v1521 = vadd.f32 %v1502, 1.0
    %v1522 = vadd.f32 %v1504, 1.0
    %v1523 = vadd.f32 %v1506, 1.0
    %v1524 = vadd.f32 %v1508, 1.0
    %v1525 = vrcp.pop %v1509
    %v1526 = vmul.f32 1.0, %v1525
    %v1527 = vrcp.pop %v1510
    %v1528 = vmul.f32 1.0, %v1527
    %v1529 = vrcp.pop %v1511
    %v1530 = vmul.f32 1.0, %v1529
    %v1531 = vrcp.pop %v1512
    %v1532 = vmul.f32 1.0, %v1531
    %v1533 = vrcp.pop %v1513
    %v1534 = vmul.f32 1.0, %v1533
    %v1535 = vrcp.pop %v1514
    %v1536 = vmul.f32 1.0, %v1535
    %v1537 = vrcp.pop %v1515
    %v1538 = vmul.f32 1.0, %v1537
    %v1539 = vrcp.pop %v1516
    %v1540 = vmul.f32 1.0, %v1539
    %v1541 = vrcp.pop %v1517
    %v1542 = vmul.f32 1.0, %v1541
    %v1543 = vrcp.pop %v1518
    %v1544 = vmul.f32 1.0, %v1543
    %v1545 = vrcp.pop %v1519
    %v1546 = vmul.f32 1.0, %v1545
    %v1547 = vrcp.pop %v1520
    %v1548 = vmul.f32 1.0, %v1547
    %v1549 = vrcp.pop %v1521
    %v1550 = vmul.f32 1.0, %v1549
    %v1551 = vrcp.pop %v1522
    %v1552 = vmul.f32 1.0, %v1551
    %v1553 = vrcp.pop %v1523
    %v1554 = vmul.f32 1.0, %v1553
    %v1555 = vrcp.pop %v1524
    %v1556 = vmul.f32 1.0, %v1555
    %v1557 = vmul.f32 %v1526, %v145
    %v1558 = vmul.f32 %v1528, %v146
    %v1559 = vmul.f32 %v1530, %v147
    %v1560 = vmul.f32 %v1532, %v148
    %v1561 = vmul.f32 %v1534, %v149
    %v1562 = vmul.f32 %v1536, %v150
    %v1563 = vmul.f32 %v1538, %v151
    %v1564 = vmul.f32 %v1540, %v152
    %v1565 = vmul.f32 %v1542, %v153
    %v1566 = vmul.f32 %v1544, %v154
    %v1567 = vmul.f32 %v1546, %v155
    %v1568 = vmul.f32 %v1548, %v156
    %v1569 = vmul.f32 %v1550, %v157
    %v1570 = vmul.f32 %v1552, %v158
    %v1571 = vmul.f32 %v1554, %v159
    %v1572 = vmul.f32 %v1556, %v160
    %v1573 = vpack.c.bf16 %v1558, %v1557
    %v1574 = vpack.c.bf16 %v1560, %v1559
    %v1575 = vpack.c.bf16 %v1562, %v1561
    %v1576 = vpack.c.bf16 %v1564, %v1563
    %v1577 = vpack.c.bf16 %v1566, %v1565
    %v1578 = vpack.c.bf16 %v1568, %v1567
    %v1579 = vpack.c.bf16 %v1570, %v1569
    %v1580 = vpack.c.bf16 %v1572, %v1571
    %v1581 = vld [vmem:[#allocation11] sm:$0xff]
    %v1582 = vld [vmem:[#allocation11 + $0x8] sm:$0xff]
    %v1583 = vld [vmem:[#allocation11 + $0x10] sm:$0xff]
    %v1584 = vld [vmem:[#allocation11 + $0x18] sm:$0xff]
    %v1585 = vld [vmem:[#allocation11 + $0x20] sm:$0xff]
    %v1586 = vld [vmem:[#allocation11 + $0x28] sm:$0xff]
    %v1587 = vld [vmem:[#allocation11 + $0x30] sm:$0xff]
    %v1588 = vld [vmem:[#allocation11 + $0x38] sm:$0xff]
    %v1589 = vld [vmem:[#allocation11 + $0x40] sm:$0xff]
    %v1590 = vld [vmem:[#allocation11 + $0x48] sm:$0xff]
    %v1591 = vld [vmem:[#allocation11 + $0x50] sm:$0xff]
    %v1592 = vld [vmem:[#allocation11 + $0x58] sm:$0xff]
    %v1593 = vld [vmem:[#allocation11 + $0x60] sm:$0xff]
    %v1594 = vld [vmem:[#allocation11 + $0x68] sm:$0xff]
    %v1595 = vld [vmem:[#allocation11 + $0x70] sm:$0xff]
    %v1596 = vld [vmem:[#allocation11 + $0x78] sm:$0xff]
    %v1613 = vunpack.c.l.b16 %v1581
    %v1614 = vunpack.c.h.b16 %v1581
    %v1615 = vunpack.c.l.b16 %v1582
    %v1616 = vunpack.c.h.b16 %v1582
    %v1617 = vunpack.c.l.b16 %v1583
    %v1618 = vunpack.c.h.b16 %v1583
    %v1619 = vunpack.c.l.b16 %v1584
    %v1620 = vunpack.c.h.b16 %v1584
    %v1621 = vunpack.c.l.b16 %v1585
    %v1622 = vunpack.c.h.b16 %v1585
    %v1623 = vunpack.c.l.b16 %v1586
    %v1624 = vunpack.c.h.b16 %v1586
    %v1625 = vunpack.c.l.b16 %v1587
    %v1626 = vunpack.c.h.b16 %v1587
    %v1627 = vunpack.c.l.b16 %v1588
    %v1628 = vunpack.c.h.b16 %v1588
    %v1629 = vunpack.c.l.b16 %v1589
    %v1630 = vunpack.c.h.b16 %v1589
    %v1631 = vunpack.c.l.b16 %v1590
    %v1632 = vunpack.c.h.b16 %v1590
    %v1633 = vunpack.c.l.b16 %v1591
    %v1634 = vunpack.c.h.b16 %v1591
    %v1635 = vunpack.c.l.b16 %v1592
    %v1636 = vunpack.c.h.b16 %v1592
    %v1637 = vunpack.c.l.b16 %v1593
    %v1638 = vunpack.c.h.b16 %v1593
    %v1639 = vunpack.c.l.b16 %v1594
    %v1640 = vunpack.c.h.b16 %v1594
    %v1641 = vunpack.c.l.b16 %v1595
    %v1642 = vunpack.c.h.b16 %v1595
    %v1643 = vunpack.c.l.b16 %v1596
    %v1644 = vunpack.c.h.b16 %v1596
    %v1645 = vpack.c.b16 %v1615, %v1613
    %v1646 = vpack.c.b16 %v1616, %v1614
    %v1647 = vpack.c.b16 %v1619, %v1617
    %v1648 = vpack.c.b16 %v1620, %v1618
    %v1649 = vpack.c.b16 %v1623, %v1621
    %v1650 = vpack.c.b16 %v1624, %v1622
    %v1651 = vpack.c.b16 %v1627, %v1625
    %v1652 = vpack.c.b16 %v1628, %v1626
    %v1653 = vpack.c.b16 %v1631, %v1629
    %v1654 = vpack.c.b16 %v1632, %v1630
    %v1655 = vpack.c.b16 %v1635, %v1633
    %v1656 = vpack.c.b16 %v1636, %v1634
    %v1657 = vpack.c.b16 %v1639, %v1637
    %v1658 = vpack.c.b16 %v1640, %v1638
    %v1659 = vpack.c.b16 %v1643, %v1641
    %v1660 = vpack.c.b16 %v1644, %v1642
    %1677 = vmatprep.subr.bf16.mxu0 %v1646
    %1678 = vmatpush1.bf16.msra.mxu0 %v1645
    %1679 = vmatprep.subr.bf16.mxu0 %v1648
    %1680 = vmatpush1.bf16.msra.mxu0 %v1647
    %1681 = vmatprep.subr.bf16.mxu0 %v1650
    %1682 = vmatpush1.bf16.msra.mxu0 %v1649
    %1683 = vmatprep.subr.bf16.mxu0 %v1652
    %1684 = vmatpush1.bf16.msra.mxu0 %v1651
    %1685 = vmatprep.subr.bf16.mxu0 %v1654
    %1686 = vmatpush1.bf16.msra.mxu0 %v1653
    %1687 = vmatprep.subr.bf16.mxu0 %v1656
    %1688 = vmatpush1.bf16.msra.mxu0 %v1655
    %1689 = vmatprep.subr.bf16.mxu0 %v1658
    %1690 = vmatpush1.bf16.msra.mxu0 %v1657
    %1691 = vmatprep.subr.bf16.mxu0 %v1660
    %1692 = vmatpush1.bf16.msra.mxu0 %v1659
    %1693 = vmatprep.subr.bf16.mxu0 0
    %1694 = vmatpush1.bf16.msra.mxu0 0
    %1695 = vmatprep.subr.bf16.mxu0 0
    %1696 = vmatpush1.bf16.msra.mxu0 0
    %1697 = vmatprep.subr.bf16.mxu0 0
    %1698 = vmatpush1.bf16.msra.mxu0 0
    %1699 = vmatprep.subr.bf16.mxu0 0
    %1700 = vmatpush1.bf16.msra.mxu0 0
    %1701 = vmatprep.subr.bf16.mxu0 0
    %1702 = vmatpush1.bf16.msra.mxu0 0
    %1703 = vmatprep.subr.bf16.mxu0 0
    %1704 = vmatpush1.bf16.msra.mxu0 0
    %1705 = vmatprep.subr.bf16.mxu0 0
    %1706 = vmatpush1.bf16.msra.mxu0 0
    %1707 = vmatprep.subr.bf16.mxu0 0
    %1708 = vmatpush1.bf16.msra.mxu0 0
    %1709 = vmatprep.mubr.bf16.mxu0 0
    %1710 = vmatmul.mubr.bf16.gmra.mrb[0].mxu0 %v1573
    %v1711 = vpop.f32.mrb[0].mxu0
    %v1712 = vadd.f32 0.0, %v1711
    %v1713 = vpop.f32.mrb[0].mxu0
    %v1714 = vadd.f32 0.0, %v1713
    %v1715 = vpop.f32.mrb[0].mxu0
    %v1716 = vadd.f32 0.0, %v1715
    %v1717 = vpop.f32.mrb[0].mxu0
    %v1718 = vadd.f32 0.0, %v1717
    %1719 = vmatprep.mubr.bf16.mxu0 0
    %1720 = vmatmul.mubr.bf16.gmra.mrb[0].mxu0 %v1574
    %v1721 = vpop.f32.mrb[0].mxu0
    %v1722 = vadd.f32 0.0, %v1721
    %v1723 = vpop.f32.mrb[0].mxu0
    %v1724 = vadd.f32 0.0, %v1723
    %v1725 = vpop.f32.mrb[0].mxu0
    %v1726 = vadd.f32 0.0, %v1725
    %v1727 = vpop.f32.mrb[0].mxu0
    %v1728 = vadd.f32 0.0, %v1727
    %1729 = vmatprep.mubr.bf16.mxu0 0
    %1730 = vmatmul.mubr.bf16.gmra.mrb[0].mxu0 %v1575
    %v1731 = vpop.f32.mrb[0].mxu0
    %v1732 = vadd.f32 0.0, %v1731
    %v1733 = vpop.f32.mrb[0].mxu0
    %v1734 = vadd.f32 0.0, %v1733
    %v1735 = vpop.f32.mrb[0].mxu0
    %v1736 = vadd.f32 0.0, %v1735
    %v1737 = vpop.f32.mrb[0].mxu0
    %v1738 = vadd.f32 0.0, %v1737
    %1739 = vmatprep.mubr.bf16.mxu0 0
    %1740 = vmatmul.mubr.bf16.gmra.mrb[0].mxu0 %v1576
    %v1741 = vpop.f32.mrb[0].mxu0
    %v1742 = vadd.f32 0.0, %v1741
    %v1743 = vpop.f32.mrb[0].mxu0
    %v1744 = vadd.f32 0.0, %v1743
    %v1745 = vpop.f32.mrb[0].mxu0
    %v1746 = vadd.f32 0.0, %v1745
    %v1747 = vpop.f32.mrb[0].mxu0
    %v1748 = vadd.f32 0.0, %v1747
    %1749 = vmatprep.mubr.bf16.mxu0 0
    %1750 = vmatmul.mubr.bf16.gmra.mrb[0].mxu0 %v1577
    %v1751 = vpop.f32.mrb[0].mxu0
    %v1752 = vadd.f32 0.0, %v1751
    %v1753 = vpop.f32.mrb[0].mxu0
    %v1754 = vadd.f32 0.0, %v1753
    %v1755 = vpop.f32.mrb[0].mxu0
    %v1756 = vadd.f32 0.0, %v1755
    %v1757 = vpop.f32.mrb[0].mxu0
    %v1758 = vadd.f32 0.0, %v1757
    %1759 = vmatprep.mubr.bf16.mxu0 0
    %1760 = vmatmul.mubr.bf16.gmra.mrb[0].mxu0 %v1578
    %v1761 = vpop.f32.mrb[0].mxu0
    %v1762 = vadd.f32 0.0, %v1761
    %v1763 = vpop.f32.mrb[0].mxu0
    %v1764 = vadd.f32 0.0, %v1763
    %v1765 = vpop.f32.mrb[0].mxu0
    %v1766 = vadd.f32 0.0, %v1765
    %v1767 = vpop.f32.mrb[0].mxu0
    %v1768 = vadd.f32 0.0, %v1767
    %1769 = vmatprep.mubr.bf16.mxu0 0
    %1770 = vmatmul.mubr.bf16.gmra.mrb[0].mxu0 %v1579
    %v1771 = vpop.f32.mrb[0].mxu0
    %v1772 = vadd.f32 0.0, %v1771
    %v1773 = vpop.f32.mrb[0].mxu0
    %v1774 = vadd.f32 0.0, %v1773
    %v1775 = vpop.f32.mrb[0].mxu0
    %v1776 = vadd.f32 0.0, %v1775
    %v1777 = vpop.f32.mrb[0].mxu0
    %v1778 = vadd.f32 0.0, %v1777
    %1779 = vmatprep.mubr.bf16.mxu0 0
    %1780 = vmatmul.mubr.bf16.gmra.mrb[0].mxu0 %v1580
    %v1781 = vpop.f32.mrb[0].mxu0
    %v1782 = vadd.f32 0.0, %v1781
    %v1783 = vpop.f32.mrb[0].mxu0
    %v1784 = vadd.f32 0.0, %v1783
    %v1785 = vpop.f32.mrb[0].mxu0
    %v1786 = vadd.f32 0.0, %v1785
    %v1787 = vpop.f32.mrb[0].mxu0
    %v1788 = vadd.f32 0.0, %v1787
    %1789 = vdwg.mxu0
    %v1790 = vadd.f32 %v758, %v1712
    %v1791 = vadd.f32 %v760, %v1714
    %v1792 = vadd.f32 %v762, %v1716
    %v1793 = vadd.f32 %v764, %v1718
    %v1794 = vadd.f32 %v768, %v1722
    %v1795 = vadd.f32 %v770, %v1724
    %v1796 = vadd.f32 %v772, %v1726
    %v1797 = vadd.f32 %v774, %v1728
    %v1798 = vadd.f32 %v778, %v1732
    %v1799 = vadd.f32 %v780, %v1734
    %v1800 = vadd.f32 %v782, %v1736
    %v1801 = vadd.f32 %v784, %v1738
    %v1802 = vadd.f32 %v788, %v1742
    %v1803 = vadd.f32 %v790, %v1744
    %v1804 = vadd.f32 %v792, %v1746
    %v1805 = vadd.f32 %v794, %v1748
    %v1806 = vadd.f32 %v798, %v1752
    %v1807 = vadd.f32 %v800, %v1754
    %v1808 = vadd.f32 %v802, %v1756
    %v1809 = vadd.f32 %v804, %v1758
    %v1810 = vadd.f32 %v808, %v1762
    %v1811 = vadd.f32 %v810, %v1764
    %v1812 = vadd.f32 %v812, %v1766
    %v1813 = vadd.f32 %v814, %v1768
    %v1814 = vadd.f32 %v818, %v1772
    %v1815 = vadd.f32 %v820, %v1774
    %v1816 = vadd.f32 %v822, %v1776
    %v1817 = vadd.f32 %v824, %v1778
    %v1818 = vadd.f32 %v828, %v1782
    %v1819 = vadd.f32 %v830, %v1784
    %v1820 = vadd.f32 %v832, %v1786
    %v1821 = vadd.f32 %v834, %v1788
    %v1822 = vadd.f32 %v1790, %v1791
    %v1823 = vadd.f32 %v1792, %v1793
    %v1824 = vadd.f32 %v1794, %v1795
    %v1825 = vadd.f32 %v1796, %v1797
    %v1826 = vadd.f32 %v1798, %v1799
    %v1827 = vadd.f32 %v1800, %v1801
    %v1828 = vadd.f32 %v1802, %v1803
    %v1829 = vadd.f32 %v1804, %v1805
    %v1830 = vadd.f32 %v1806, %v1807
    %v1831 = vadd.f32 %v1808, %v1809
    %v1832 = vadd.f32 %v1810, %v1811
    %v1833 = vadd.f32 %v1812, %v1813
    %v1834 = vadd.f32 %v1814, %v1815
    %v1835 = vadd.f32 %v1816, %v1817
    %v1836 = vadd.f32 %v1818, %v1819
    %v1837 = vadd.f32 %v1820, %v1821
    %v1838 = vpack.c.bf16 %v1792, %v1790
    %v1839 = vpack.c.bf16 %v1796, %v1794
    %v1840 = vpack.c.bf16 %v1800, %v1798
    %v1841 = vpack.c.bf16 %v1804, %v1802
    %v1842 = vpack.c.bf16 %v1808, %v1806
    %v1843 = vpack.c.bf16 %v1812, %v1810
    %v1844 = vpack.c.bf16 %v1816, %v1814
    %v1845 = vpack.c.bf16 %v1820, %v1818
    %1846 = vmatprep.subr.bf16.mxu0 0
    %1847 = vmatpush1.bf16.msra.mxu0 %v1838
    %1848 = vmatprep.subr.bf16.mxu0 0
    %1849 = vmatpush1.bf16.msra.mxu0 %v1839
    %1850 = vmatprep.subr.bf16.mxu0 0
    %1851 = vmatpush1.bf16.msra.mxu0 %v1840
    %1852 = vmatprep.subr.bf16.mxu0 0
    %1853 = vmatpush1.bf16.msra.mxu0 %v1841
    %1854 = vmatprep.subr.bf16.mxu0 0
    %1855 = vmatpush1.bf16.msra.mxu0 0
    %1856 = vmatprep.subr.bf16.mxu0 0
    %1857 = vmatpush1.bf16.msra.mxu0 0
    %1858 = vmatprep.subr.bf16.mxu0 0
    %1859 = vmatpush1.bf16.msra.mxu0 0
    %1860 = vmatprep.subr.bf16.mxu0 0
    %1861 = vmatpush1.bf16.msra.mxu0 0
    %1862 = vmatprep.subr.bf16.mxu0 0
    %1863 = vmatpush1.bf16.msra.mxu0 0
    %1864 = vmatprep.subr.bf16.mxu0 0
    %1865 = vmatpush1.bf16.msra.mxu0 0
    %1866 = vmatprep.subr.bf16.mxu0 0
    %1867 = vmatpush1.bf16.msra.mxu0 0
    %1868 = vmatprep.subr.bf16.mxu0 0
    %1869 = vmatpush1.bf16.msra.mxu0 0
    %1870 = vmatprep.subr.bf16.mxu0 0
    %1871 = vmatpush1.bf16.msra.mxu0 0
    %1872 = vmatprep.subr.bf16.mxu0 0
    %1873 = vmatpush1.bf16.msra.mxu0 0
    %1874 = vmatprep.subr.bf16.mxu0 0
    %1875 = vmatpush1.bf16.msra.mxu0 0
    %1876 = vmatprep.subr.bf16.mxu0 0
    %1877 = vmatpush1.bf16.msra.mxu0 0
    %1878 = vmatprep.mubr.bf16.mxu0 0
    %1879 = vmatmul.mubr.bf16.gmra.mrb[0].mxu0 %v906
    %v1880 = vpop.f32.mrb[0].mxu0
    %v1881 = vadd.f32 0.0, %v1880
    %v1882 = vpop.f32.mrb[0].mxu0
    %v1883 = vpop.f32.mrb[0].mxu0
    %v1884 = vadd.f32 0.0, %v1883
    %v1885 = vpop.f32.mrb[0].mxu0
    %1886 = vmatprep.mubr.bf16.mxu0 0
    %1887 = vmatmul.mubr.bf16.gmra.mrb[0].mxu0 %v909
    %v1888 = vpop.f32.mrb[0].mxu0
    %v1889 = vadd.f32 0.0, %v1888
    %v1890 = vpop.f32.mrb[0].mxu0
    %v1891 = vpop.f32.mrb[0].mxu0
    %v1892 = vadd.f32 0.0, %v1891
    %v1893 = vpop.f32.mrb[0].mxu0
    %1894 = vmatprep.mubr.bf16.mxu0 0
    %1895 = vmatmul.mubr.bf16.gmra.mrb[0].mxu0 %v912
    %v1896 = vpop.f32.mrb[0].mxu0
    %v1897 = vadd.f32 0.0, %v1896
    %v1898 = vpop.f32.mrb[0].mxu0
    %v1899 = vpop.f32.mrb[0].mxu0
    %v1900 = vadd.f32 0.0, %v1899
    %v1901 = vpop.f32.mrb[0].mxu0
    %1902 = vmatprep.mubr.bf16.mxu0 0
    %1903 = vmatmul.mubr.bf16.gmra.mrb[0].mxu0 %v915
    %v1904 = vpop.f32.mrb[0].mxu0
    %v1905 = vadd.f32 0.0, %v1904
    %v1906 = vpop.f32.mrb[0].mxu0
    %v1907 = vpop.f32.mrb[0].mxu0
    %v1908 = vadd.f32 0.0, %v1907
    %v1909 = vpop.f32.mrb[0].mxu0
    %1910 = vdwg.mxu0
    %1911 = vmatprep.subr.bf16.mxu0 0
    %1912 = vmatpush1.bf16.msra.mxu0 %v1842
    %1913 = vmatprep.subr.bf16.mxu0 0
    %1914 = vmatpush1.bf16.msra.mxu0 %v1843
    %1915 = vmatprep.subr.bf16.mxu0 0
    %1916 = vmatpush1.bf16.msra.mxu0 %v1844
    %1917 = vmatprep.subr.bf16.mxu0 0
    %1918 = vmatpush1.bf16.msra.mxu0 %v1845
    %1919 = vmatprep.subr.bf16.mxu0 0
    %1920 = vmatpush1.bf16.msra.mxu0 0
    %1921 = vmatprep.subr.bf16.mxu0 0
    %1922 = vmatpush1.bf16.msra.mxu0 0
    %1923 = vmatprep.subr.bf16.mxu0 0
    %1924 = vmatpush1.bf16.msra.mxu0 0
    %1925 = vmatprep.subr.bf16.mxu0 0
    %1926 = vmatpush1.bf16.msra.mxu0 0
    %1927 = vmatprep.subr.bf16.mxu0 0
    %1928 = vmatpush1.bf16.msra.mxu0 0
    %1929 = vmatprep.subr.bf16.mxu0 0
    %1930 = vmatpush1.bf16.msra.mxu0 0
    %1931 = vmatprep.subr.bf16.mxu0 0
    %1932 = vmatpush1.bf16.msra.mxu0 0
    %1933 = vmatprep.subr.bf16.mxu0 0
    %1934 = vmatpush1.bf16.msra.mxu0 0
    %1935 = vmatprep.subr.bf16.mxu0 0
    %1936 = vmatpush1.bf16.msra.mxu0 0
    %1937 = vmatprep.subr.bf16.mxu0 0
    %1938 = vmatpush1.bf16.msra.mxu0 0
    %1939 = vmatprep.subr.bf16.mxu0 0
    %1940 = vmatpush1.bf16.msra.mxu0 0
    %1941 = vmatprep.subr.bf16.mxu0 0
    %1942 = vmatpush1.bf16.msra.mxu0 0
    %1943 = vmatprep.mubr.bf16.mxu0 0
    %1944 = vmatmul.mubr.bf16.gmra.mrb[0].mxu0 %v906
    %v1945 = vpop.f32.mrb[0].mxu0
    %v1946 = vadd.f32 0.0, %v1945
    %v1947 = vpop.f32.mrb[0].mxu0
    %v1948 = vpop.f32.mrb[0].mxu0
    %v1949 = vadd.f32 0.0, %v1948
    %v1950 = vpop.f32.mrb[0].mxu0
    %1951 = vmatprep.mubr.bf16.mxu0 0
    %1952 = vmatmul.mubr.bf16.gmra.mrb[0].mxu0 %v909
    %v1953 = vpop.f32.mrb[0].mxu0
    %v1954 = vadd.f32 0.0, %v1953
    %v1955 = vpop.f32.mrb[0].mxu0
    %v1956 = vpop.f32.mrb[0].mxu0
    %v1957 = vadd.f32 0.0, %v1956
    %v1958 = vpop.f32.mrb[0].mxu0
    %1959 = vmatprep.mubr.bf16.mxu0 0
    %1960 = vmatmul.mubr.bf16.gmra.mrb[0].mxu0 %v912
    %v1961 = vpop.f32.mrb[0].mxu0
    %v1962 = vadd.f32 0.0, %v1961
    %v1963 = vpop.f32.mrb[0].mxu0
    %v1964 = vpop.f32.mrb[0].mxu0
    %v1965 = vadd.f32 0.0, %v1964
    %v1966 = vpop.f32.mrb[0].mxu0
    %1967 = vmatprep.mubr.bf16.mxu0 0
    %1968 = vmatmul.mubr.bf16.gmra.mrb[0].mxu0 %v915
    %v1969 = vpop.f32.mrb[0].mxu0
    %v1970 = vadd.f32 0.0, %v1969
    %v1971 = vpop.f32.mrb[0].mxu0
    %v1972 = vpop.f32.mrb[0].mxu0
    %v1973 = vadd.f32 0.0, %v1972
    %v1974 = vpop.f32.mrb[0].mxu0
    %1975 = vdwg.mxu0
    %v1976 = vadd.f32 %v1822, %v1881
    %v1977 = vadd.f32 %v1823, %v1884
    %v1978 = vadd.f32 %v1824, %v1889
    %v1979 = vadd.f32 %v1825, %v1892
    %v1980 = vadd.f32 %v1826, %v1897
    %v1981 = vadd.f32 %v1827, %v1900
    %v1982 = vadd.f32 %v1828, %v1905
    %v1983 = vadd.f32 %v1829, %v1908
    %v1984 = vadd.f32 %v1830, %v1946
    %v1985 = vadd.f32 %v1831, %v1949
    %v1986 = vadd.f32 %v1832, %v1954
    %v1987 = vadd.f32 %v1833, %v1957
    %v1988 = vadd.f32 %v1834, %v1962
    %v1989 = vadd.f32 %v1835, %v1965
    %v1990 = vadd.f32 %v1836, %v1970
    %v1991 = vadd.f32 %v1837, %v1973
    %v1992 = vpack.c.bf16 %v1793, %v1791
    %v1993 = vpack.c.bf16 %v1797, %v1795
    %v1994 = vpack.c.bf16 %v1801, %v1799
    %v1995 = vpack.c.bf16 %v1805, %v1803
    %v1996 = vpack.c.bf16 %v1809, %v1807
    %v1997 = vpack.c.bf16 %v1813, %v1811
    %v1998 = vpack.c.bf16 %v1817, %v1815
    %v1999 = vpack.c.bf16 %v1821, %v1819
    %2000 = vmatprep.subr.bf16.mxu0 0
    %2001 = vmatpush1.bf16.msra.mxu0 %v1992
    %2002 = vmatprep.subr.bf16.mxu0 0
    %2003 = vmatpush1.bf16.msra.mxu0 %v1993
    %2004 = vmatprep.subr.bf16.mxu0 0
    %2005 = vmatpush1.bf16.msra.mxu0 %v1994
    %2006 = vmatprep.subr.bf16.mxu0 0
    %2007 = vmatpush1.bf16.msra.mxu0 %v1995
    %2008 = vmatprep.subr.bf16.mxu0 0
    %2009 = vmatpush1.bf16.msra.mxu0 0
    %2010 = vmatprep.subr.bf16.mxu0 0
    %2011 = vmatpush1.bf16.msra.mxu0 0
    %2012 = vmatprep.subr.bf16.mxu0 0
    %2013 = vmatpush1.bf16.msra.mxu0 0
    %2014 = vmatprep.subr.bf16.mxu0 0
    %2015 = vmatpush1.bf16.msra.mxu0 0
    %2016 = vmatprep.subr.bf16.mxu0 0
    %2017 = vmatpush1.bf16.msra.mxu0 0
    %2018 = vmatprep.subr.bf16.mxu0 0
    %2019 = vmatpush1.bf16.msra.mxu0 0
    %2020 = vmatprep.subr.bf16.mxu0 0
    %2021 = vmatpush1.bf16.msra.mxu0 0
    %2022 = vmatprep.subr.bf16.mxu0 0
    %2023 = vmatpush1.bf16.msra.mxu0 0
    %2024 = vmatprep.subr.bf16.mxu0 0
    %2025 = vmatpush1.bf16.msra.mxu0 0
    %2026 = vmatprep.subr.bf16.mxu0 0
    %2027 = vmatpush1.bf16.msra.mxu0 0
    %2028 = vmatprep.subr.bf16.mxu0 0
    %2029 = vmatpush1.bf16.msra.mxu0 0
    %2030 = vmatprep.subr.bf16.mxu0 0
    %2031 = vmatpush1.bf16.msra.mxu0 0
    %2032 = vmatprep.mubr.bf16.mxu0 0
    %2033 = vmatmul.mubr.bf16.gmra.mrb[0].mxu0 %v1132
    %v2034 = vpop.f32.mrb[0].mxu0
    %v2035 = vadd.f32 0.0, %v2034
    %v2036 = vpop.f32.mrb[0].mxu0
    %v2037 = vpop.f32.mrb[0].mxu0
    %v2038 = vadd.f32 0.0, %v2037
    %v2039 = vpop.f32.mrb[0].mxu0
    %2040 = vmatprep.mubr.bf16.mxu0 0
    %2041 = vmatmul.mubr.bf16.gmra.mrb[0].mxu0 %v1135
    %v2042 = vpop.f32.mrb[0].mxu0
    %v2043 = vadd.f32 0.0, %v2042
    %v2044 = vpop.f32.mrb[0].mxu0
    %v2045 = vpop.f32.mrb[0].mxu0
    %v2046 = vadd.f32 0.0, %v2045
    %v2047 = vpop.f32.mrb[0].mxu0
    %2048 = vmatprep.mubr.bf16.mxu0 0
    %2049 = vmatmul.mubr.bf16.gmra.mrb[0].mxu0 %v1138
    %v2050 = vpop.f32.mrb[0].mxu0
    %v2051 = vadd.f32 0.0, %v2050
    %v2052 = vpop.f32.mrb[0].mxu0
    %v2053 = vpop.f32.mrb[0].mxu0
    %v2054 = vadd.f32 0.0, %v2053
    %v2055 = vpop.f32.mrb[0].mxu0
    %2056 = vmatprep.mubr.bf16.mxu0 0
    %2057 = vmatmul.mubr.bf16.gmra.mrb[0].mxu0 %v1141
    %v2058 = vpop.f32.mrb[0].mxu0
    %v2059 = vadd.f32 0.0, %v2058
    %v2060 = vpop.f32.mrb[0].mxu0
    %v2061 = vpop.f32.mrb[0].mxu0
    %v2062 = vadd.f32 0.0, %v2061
    %v2063 = vpop.f32.mrb[0].mxu0
    %2064 = vdwg.mxu0
    %2065 = vmatprep.subr.bf16.mxu0 0
    %2066 = vmatpush1.bf16.msra.mxu0 %v1996
    %2067 = vmatprep.subr.bf16.mxu0 0
    %2068 = vmatpush1.bf16.msra.mxu0 %v1997
    %2069 = vmatprep.subr.bf16.mxu0 0
    %2070 = vmatpush1.bf16.msra.mxu0 %v1998
    %2071 = vmatprep.subr.bf16.mxu0 0
    %2072 = vmatpush1.bf16.msra.mxu0 %v1999
    %2073 = vmatprep.subr.bf16.mxu0 0
    %2074 = vmatpush1.bf16.msra.mxu0 0
    %2075 = vmatprep.subr.bf16.mxu0 0
    %2076 = vmatpush1.bf16.msra.mxu0 0
    %2077 = vmatprep.subr.bf16.mxu0 0
    %2078 = vmatpush1.bf16.msra.mxu0 0
    %2079 = vmatprep.subr.bf16.mxu0 0
    %2080 = vmatpush1.bf16.msra.mxu0 0
    %2081 = vmatprep.subr.bf16.mxu0 0
    %2082 = vmatpush1.bf16.msra.mxu0 0
    %2083 = vmatprep.subr.bf16.mxu0 0
    %2084 = vmatpush1.bf16.msra.mxu0 0
    %2085 = vmatprep.subr.bf16.mxu0 0
    %2086 = vmatpush1.bf16.msra.mxu0 0
    %2087 = vmatprep.subr.bf16.mxu0 0
    %2088 = vmatpush1.bf16.msra.mxu0 0
    %2089 = vmatprep.subr.bf16.mxu0 0
    %2090 = vmatpush1.bf16.msra.mxu0 0
    %2091 = vmatprep.subr.bf16.mxu0 0
    %2092 = vmatpush1.bf16.msra.mxu0 0
    %2093 = vmatprep.subr.bf16.mxu0 0
    %2094 = vmatpush1.bf16.msra.mxu0 0
    %2095 = vmatprep.subr.bf16.mxu0 0
    %2096 = vmatpush1.bf16.msra.mxu0 0
    %2097 = vmatprep.mubr.bf16.mxu0 0
    %2098 = vmatmul.mubr.bf16.gmra.mrb[0].mxu0 %v1132
    %v2099 = vpop.f32.mrb[0].mxu0
    %v2100 = vadd.f32 0.0, %v2099
    %v2101 = vpop.f32.mrb[0].mxu0
    %v2102 = vpop.f32.mrb[0].mxu0
    %v2103 = vadd.f32 0.0, %v2102
    %v2104 = vpop.f32.mrb[0].mxu0
    %2105 = vmatprep.mubr.bf16.mxu0 0
    %2106 = vmatmul.mubr.bf16.gmra.mrb[0].mxu0 %v1135
    %v2107 = vpop.f32.mrb[0].mxu0
    %v2108 = vadd.f32 0.0, %v2107
    %v2109 = vpop.f32.mrb[0].mxu0
    %v2110 = vpop.f32.mrb[0].mxu0
    %v2111 = vadd.f32 0.0, %v2110
    %v2112 = vpop.f32.mrb[0].mxu0
    %2113 = vmatprep.mubr.bf16.mxu0 0
    %2114 = vmatmul.mubr.bf16.gmra.mrb[0].mxu0 %v1138
    %v2115 = vpop.f32.mrb[0].mxu0
    %v2116 = vadd.f32 0.0, %v2115
    %v2117 = vpop.f32.mrb[0].mxu0
    %v2118 = vpop.f32.mrb[0].mxu0
    %v2119 = vadd.f32 0.0, %v2118
    %v2120 = vpop.f32.mrb[0].mxu0
    %2121 = vmatprep.mubr.bf16.mxu0 0
    %2122 = vmatmul.mubr.bf16.gmra.mrb[0].mxu0 %v1141
    %v2123 = vpop.f32.mrb[0].mxu0
    %v2124 = vadd.f32 0.0, %v2123
    %v2125 = vpop.f32.mrb[0].mxu0
    %v2126 = vpop.f32.mrb[0].mxu0
    %v2127 = vadd.f32 0.0, %v2126
    %v2128 = vpop.f32.mrb[0].mxu0
    %2129 = vdwg.mxu0
    %v2130 = vadd.f32 %v1976, %v2035
    %v2131 = vadd.f32 %v1977, %v2038
    %v2132 = vadd.f32 %v1978, %v2043
    %v2133 = vadd.f32 %v1979, %v2046
    %v2134 = vadd.f32 %v1980, %v2051
    %v2135 = vadd.f32 %v1981, %v2054
    %v2136 = vadd.f32 %v1982, %v2059
    %v2137 = vadd.f32 %v1983, %v2062
    %v2138 = vadd.f32 %v1984, %v2100
    %v2139 = vadd.f32 %v1985, %v2103
    %v2140 = vadd.f32 %v1986, %v2108
    %v2141 = vadd.f32 %v1987, %v2111
    %v2142 = vadd.f32 %v1988, %v2116
    %v2143 = vadd.f32 %v1989, %v2119
    %v2144 = vadd.f32 %v1990, %v2124
    %v2145 = vadd.f32 %v1991, %v2127
    %v2146 = vld [vmem:[%s7] sm:$0x1]
    %v2148 = vlaneseq
    %v2149 = vshrl.u32 %v2148, 7
    %v2150 = vsub.s32 0, %v2149
    %v2151 = vrot.slane %v2146, %v2150
    %v2153 = vadd.f32 %v2130, %v2151
    %v2154 = vadd.f32 %v2131, %v2151
    %v2155 = vadd.f32 %v2132, %v2151
    %v2156 = vadd.f32 %v2133, %v2151
    %v2157 = vadd.f32 %v2134, %v2151
    %v2158 = vadd.f32 %v2135, %v2151
    %v2159 = vadd.f32 %v2136, %v2151
    %v2160 = vadd.f32 %v2137, %v2151
    %v2161 = vadd.f32 %v2138, %v2151
    %v2162 = vadd.f32 %v2139, %v2151
    %v2163 = vadd.f32 %v2140, %v2151
    %v2164 = vadd.f32 %v2141, %v2151
    %v2165 = vadd.f32 %v2142, %v2151
    %v2166 = vadd.f32 %v2143, %v2151
    %v2167 = vadd.f32 %v2144, %v2151
    %v2168 = vadd.f32 %v2145, %v2151
    %v2169 = vtanh.pop %v2153
    %v2170 = vtanh.pop %v2154
    %v2171 = vtanh.pop %v2155
    %v2172 = vtanh.pop %v2156
    %v2173 = vtanh.pop %v2157
    %v2174 = vtanh.pop %v2158
    %v2175 = vtanh.pop %v2159
    %v2176 = vtanh.pop %v2160
    %v2177 = vtanh.pop %v2161
    %v2178 = vtanh.pop %v2162
    %v2179 = vtanh.pop %v2163
    %v2180 = vtanh.pop %v2164
    %v2181 = vtanh.pop %v2165
    %v2182 = vtanh.pop %v2166
    %v2183 = vtanh.pop %v2167
    %v2184 = vtanh.pop %v2168
    %v2185 = vsub.f32 1.0, %v1430
    %v2186 = vsub.f32 1.0, %v1432
    %v2187 = vsub.f32 1.0, %v1434
    %v2188 = vsub.f32 1.0, %v1436
    %v2189 = vsub.f32 1.0, %v1438
    %v2190 = vsub.f32 1.0, %v1440
    %v2191 = vsub.f32 1.0, %v1442
    %v2192 = vsub.f32 1.0, %v1444
    %v2193 = vsub.f32 1.0, %v1446
    %v2194 = vsub.f32 1.0, %v1448
    %v2195 = vsub.f32 1.0, %v1450
    %v2196 = vsub.f32 1.0, %v1452
    %v2197 = vsub.f32 1.0, %v1454
    %v2198 = vsub.f32 1.0, %v1456
    %v2199 = vsub.f32 1.0, %v1458
    %v2200 = vsub.f32 1.0, %v1460
    %v2201 = vmul.f32 %v2185, %v145
    %v2202 = vmul.f32 %v2186, %v146
    %v2203 = vmul.f32 %v2187, %v147
    %v2204 = vmul.f32 %v2188, %v148
    %v2205 = vmul.f32 %v2189, %v149
    %v2206 = vmul.f32 %v2190, %v150
    %v2207 = vmul.f32 %v2191, %v151
    %v2208 = vmul.f32 %v2192, %v152
    %v2209 = vmul.f32 %v2193, %v153
    %v2210 = vmul.f32 %v2194, %v154
    %v2211 = vmul.f32 %v2195, %v155
    %v2212 = vmul.f32 %v2196, %v156
    %v2213 = vmul.f32 %v2197, %v157
    %v2214 = vmul.f32 %v2198, %v158
    %v2215 = vmul.f32 %v2199, %v159
    %v2216 = vmul.f32 %v2200, %v160
    %v2217 = vmul.f32 %v1430, %v2169
    %v2218 = vmul.f32 %v1432, %v2170
    %v2219 = vmul.f32 %v1434, %v2171
    %v2220 = vmul.f32 %v1436, %v2172
    %v2221 = vmul.f32 %v1438, %v2173
    %v2222 = vmul.f32 %v1440, %v2174
    %v2223 = vmul.f32 %v1442, %v2175
    %v2224 = vmul.f32 %v1444, %v2176
    %v2225 = vmul.f32 %v1446, %v2177
    %v2226 = vmul.f32 %v1448, %v2178
    %v2227 = vmul.f32 %v1450, %v2179
    %v2228 = vmul.f32 %v1452, %v2180
    %v2229 = vmul.f32 %v1454, %v2181
    %v2230 = vmul.f32 %v1456, %v2182
    %v2231 = vmul.f32 %v1458, %v2183
    %v2232 = vmul.f32 %v1460, %v2184
    %v2233 = vadd.f32 %v2201, %v2217
    %v2234 = vadd.f32 %v2202, %v2218
    %v2235 = vadd.f32 %v2203, %v2219
    %v2236 = vadd.f32 %v2204, %v2220
    %v2237 = vadd.f32 %v2205, %v2221
    %v2238 = vadd.f32 %v2206, %v2222
    %v2239 = vadd.f32 %v2207, %v2223
    %v2240 = vadd.f32 %v2208, %v2224
    %v2241 = vadd.f32 %v2209, %v2225
    %v2242 = vadd.f32 %v2210, %v2226
    %v2243 = vadd.f32 %v2211, %v2227
    %v2244 = vadd.f32 %v2212, %v2228
    %v2245 = vadd.f32 %v2213, %v2229
    %v2246 = vadd.f32 %v2214, %v2230
    %v2247 = vadd.f32 %v2215, %v2231
    %v2248 = vadd.f32 %v2216, %v2232
    %2249 = vst [vmem:[#allocation13] sm:$0xff] %v2233
    %2250 = vst [vmem:[#allocation13 + $0x8] sm:$0xff] %v2234
    %2251 = vst [vmem:[#allocation13 + $0x10] sm:$0xff] %v2235
    %2252 = vst [vmem:[#allocation13 + $0x18] sm:$0xff] %v2236
    %2253 = vst [vmem:[#allocation13 + $0x20] sm:$0xff] %v2237
    %2254 = vst [vmem:[#allocation13 + $0x28] sm:$0xff] %v2238
    %2255 = vst [vmem:[#allocation13 + $0x30] sm:$0xff] %v2239
    %2256 = vst [vmem:[#allocation13 + $0x38] sm:$0xff] %v2240
    %2257 = vst [vmem:[#allocation13 + $0x40] sm:$0xff] %v2241
    %2258 = vst [vmem:[#allocation13 + $0x48] sm:$0xff] %v2242
    %2259 = vst [vmem:[#allocation13 + $0x50] sm:$0xff] %v2243
    %2260 = vst [vmem:[#allocation13 + $0x58] sm:$0xff] %v2244
    %2261 = vst [vmem:[#allocation13 + $0x60] sm:$0xff] %v2245
    %2262 = vst [vmem:[#allocation13 + $0x68] sm:$0xff] %v2246
    %2263 = vst [vmem:[#allocation13 + $0x70] sm:$0xff] %v2247
    %2264 = vst [vmem:[#allocation13 + $0x78] sm:$0xff] %v2248
    // Predicated region
    $region58: #{tpu_custom_call.1} parent=1 // pred_check
      _
    $region59: #{tpu_custom_call.1} parent=1 // pred_check_branch
      %2266 = sbr.rel (0) target = $region61
    $region60: #{tpu_custom_call.1} parent=1 // pred_region
      %s2268 = ssub.s32 2048, 2048
      %2269 = vsyncadd [#allocation4], %s2268
      %s2270 = sshll.u32 [#allocation13], 4
      %s2271 = int_to_ptr.vmem [resolvable:$true] %s2270
      %2276 = dma.vmem_to_hbm [thread:$0]  %s2271, 2048, %s8, [#allocation4], 128, 128, 8
    $region61: #{tpu_custom_call.1} parent=1 // pred_fallthru
      _
    // Predicated region
    $region62: #{tpu_custom_call.1} parent=1 // pred_check
      _
    $region63: #{tpu_custom_call.1} parent=1 // pred_check_branch
      %2278 = sbr.rel (0) target = $region65
    $region64: #{tpu_custom_call.1} parent=1 // pred_region
      %2279 = dma.done [#allocation4], 2048
    $region65: #{tpu_custom_call.1} parent=1 // pred_fallthru
      _
    %2280 = vsyncpa [#allocation3], 1
    %2281 = vsyncpa [#allocation6], 1
    %2282 = vsyncpa [#allocation9], 1
    %2283 = vsyncpa [#allocation12], 1
    %2284 = vsyncpa [#allocation4], 1

// kernel: tpu_custom_call.1
$region0: #{tpu_custom_call.1}
  #allocation0 [shape = 'u32[]', space=smem, size = 0x4, offset = 0x4, fixed_abs, tag = 'smem constant byte address 0x4 - core index']
  #allocation1 [shape = 'u32[144,128]{1,0:T(1,128)}', space=vmem, size = 0x12000, scoped, tag = 'internal scratch']
  %s0 = inlined_call_operand.hbm [shape: bf16[128,128], index: 0, kind: input, shape index: {}]
  %s1 = inlined_call_operand.hbm [shape: f32[128,128], index: 1, kind: input, shape index: {}]
  %s2 = inlined_call_operand.hbm [shape: bf16[64,64], index: 2, kind: input, shape index: {}]
  %s3 = inlined_call_operand.hbm [shape: bf16[64,64], index: 3, kind: input, shape index: {}]
  %s4 = inlined_call_operand.hbm [shape: bf16[128,768], index: 4, kind: input, shape index: {}]
  %s5 = inlined_call_operand.hbm [shape: bf16[128,256], index: 5, kind: input, shape index: {}]
  %s6 = inlined_call_operand.vmem [shape: f32[1,256], index: 6, kind: input, shape index: {}]
  %s7 = inlined_call_operand.vmem [shape: f32[1,128], index: 7, kind: input, shape index: {}]
  %s8 = inlined_call_operand.hbm [shape: f32[128,128], index: 8, kind: output, shape index: {}]
  %s9 = sld [smem:[#allocation0]]
  $region66: #{tpu_custom_call.1} parent=0
    _
  %s11 = ssub.s32 1, %s9
  %s12 = scalar_select 0, %s11, %s9
  $region1: #{tpu_custom_call.1} parent=0
    #allocation2 [shape = 'u8[32768]{0}', space=vmem, size = 0x8000, scoped, tag = 'input window, operand 0, single buffered']
    #allocation3 [shape = 's32[1]{0}', space=sflag, size = 0x4, scoped, tag = 'scoped memory for tpu_custom_call.1']
    #allocation4 [shape = 's32[1]{0}', space=sflag, size = 0x4, scoped, tag = 'scoped memory for tpu_custom_call.1']
    #allocation5 [shape = 'u8[65536]{0}', space=vmem, size = 0x10000, scoped, tag = 'input window, operand 1, single buffered']
    #allocation6 [shape = 's32[1]{0}', space=sflag, size = 0x4, scoped, tag = 'scoped memory for tpu_custom_call.1']
    #allocation7 [shape = 'u8[16384]{0}', space=vmem, size = 0x4000, scoped, tag = 'input window, operand 2, single buffered']
    #allocation8 [shape = 'u8[16384]{0}', space=vmem, size = 0x4000, scoped, tag = 'input window, operand 3, single buffered']
    #allocation9 [shape = 's32[1]{0}', space=sflag, size = 0x4, scoped, tag = 'scoped memory for tpu_custom_call.1']
    #allocation10 [shape = 'u8[196608]{0}', space=vmem, size = 0x30000, scoped, tag = 'input window, operand 4, single buffered']
    #allocation11 [shape = 'u8[65536]{0}', space=vmem, size = 0x10000, scoped, tag = 'input window, operand 5, single buffered']
    #allocation12 [shape = 's32[1]{0}', space=sflag, size = 0x4, scoped, tag = 'scoped memory for tpu_custom_call.1']
    #allocation13 [shape = 'u8[65536]{0}', space=vmem, size = 0x10000, scoped, tag = 'output window, operand 0, single buffered']
    %13 = vsyncpa [#allocation3], 0
    %14 = vsyncpa [#allocation6], 0
    %15 = vsyncpa [#allocation9], 0
    %16 = vsyncpa [#allocation12], 0
    %17 = vsyncpa [#allocation4], 0
    // Predicated region
    $region2: #{tpu_custom_call.1} parent=1 // pred_check
      _
    $region3: #{tpu_custom_call.1} parent=1 // pred_check_branch
      %19 = sbr.rel (0) target = $region5
    $region4: #{tpu_custom_call.1} parent=1 // pred_region
      %s21 = ssub.s32 1024, 1024
      %22 = vsyncadd [#allocation3], %s21
      %s23 = sshll.u32 [#allocation2], 4
      %s24 = int_to_ptr.vmem [resolvable:$true] %s23
      %29 = dma.hbm_to_vmem [thread:$0]  %s0, 1024, %s24, [#allocation3], 64, 64, 4
    $region5: #{tpu_custom_call.1} parent=1 // pred_fallthru
      _
    // Predicated region
    $region6: #{tpu_custom_call.1} parent=1 // pred_check
      _
    $region7: #{tpu_custom_call.1} parent=1 // pred_check_branch
      %31 = sbr.rel (0) target = $region9
    $region8: #{tpu_custom_call.1} parent=1 // pred_region
      %s33 = ssub.s32 2048, 2048
      %34 = vsyncadd [#allocation6], %s33
      %s35 = sshll.u32 [#allocation5], 4
      %s36 = int_to_ptr.vmem [resolvable:$true] %s35
      %41 = dma.hbm_to_vmem [thread:$0]  %s1, 2048, %s36, [#allocation6], 128, 128, 8
    $region9: #{tpu_custom_call.1} parent=1 // pred_fallthru
      _
    // Predicated region
    $region10: #{tpu_custom_call.1} parent=1 // pred_check
      _
    $region11: #{tpu_custom_call.1} parent=1 // pred_check_branch
      %43 = sbr.rel (0) target = $region13
    $region12: #{tpu_custom_call.1} parent=1 // pred_region
      %s45 = ssub.s32 512, 512
      %46 = vsyncadd [#allocation6], %s45
      %s47 = sshll.u32 [#allocation7], 4
      %s48 = int_to_ptr.vmem [resolvable:$true] %s47
      %53 = dma.hbm_to_vmem [thread:$0]  %s2, 512, %s48, [#allocation6], 64, 64, 4
    $region13: #{tpu_custom_call.1} parent=1 // pred_fallthru
      _
    // Predicated region
    $region14: #{tpu_custom_call.1} parent=1 // pred_check
      _
    $region15: #{tpu_custom_call.1} parent=1 // pred_check_branch
      %55 = sbr.rel (0) target = $region17
    $region16: #{tpu_custom_call.1} parent=1 // pred_region
      %s57 = ssub.s32 512, 512
      %58 = vsyncadd [#allocation9], %s57
      %s59 = sshll.u32 [#allocation8], 4
      %s60 = int_to_ptr.vmem [resolvable:$true] %s59
      %65 = dma.hbm_to_vmem [thread:$0]  %s3, 512, %s60, [#allocation9], 64, 64, 4
    $region17: #{tpu_custom_call.1} parent=1 // pred_fallthru
      _
    // Predicated region
    $region18: #{tpu_custom_call.1} parent=1 // pred_check
      _
    $region19: #{tpu_custom_call.1} parent=1 // pred_check_branch
      %67 = sbr.rel (0) target = $region21
    $region20: #{tpu_custom_call.1} parent=1 // pred_region
      %s69 = ssub.s32 6144, 6144
      %70 = vsyncadd [#allocation9], %s69
      %s71 = sshll.u32 [#allocation10], 4
      %s72 = int_to_ptr.vmem [resolvable:$true] %s71
      %77 = dma.hbm_to_vmem [thread:$0]  %s4, 6144, %s72, [#allocation9], 384, 384, 24
    $region21: #{tpu_custom_call.1} parent=1 // pred_fallthru
      _
    // Predicated region
    $region22: #{tpu_custom_call.1} parent=1 // pred_check
      _
    $region23: #{tpu_custom_call.1} parent=1 // pred_check_branch
      %79 = sbr.rel (0) target = $region25
    $region24: #{tpu_custom_call.1} parent=1 // pred_region
      %s81 = ssub.s32 2048, 2048
      %82 = vsyncadd [#allocation12], %s81
      %s83 = sshll.u32 [#allocation11], 4
      %s84 = int_to_ptr.vmem [resolvable:$true] %s83
      %89 = dma.hbm_to_vmem [thread:$0]  %s5, 2048, %s84, [#allocation12], 128, 128, 8
    $region25: #{tpu_custom_call.1} parent=1 // pred_fallthru
      _
    // Predicated region
    $region26: #{tpu_custom_call.1} parent=1 // pred_check
      _
    $region27: #{tpu_custom_call.1} parent=1 // pred_check_branch
      %91 = sbr.rel (0) target = $region29
    $region28: #{tpu_custom_call.1} parent=1 // pred_region
      _
    $region29: #{tpu_custom_call.1} parent=1 // pred_fallthru
      _
    // Predicated region
    $region30: #{tpu_custom_call.1} parent=1 // pred_check
      _
    $region31: #{tpu_custom_call.1} parent=1 // pred_check_branch
      %93 = sbr.rel (0) target = $region33
    $region32: #{tpu_custom_call.1} parent=1 // pred_region
      _
    $region33: #{tpu_custom_call.1} parent=1 // pred_fallthru
      _
    // Predicated region
    $region34: #{tpu_custom_call.1} parent=1 // pred_check
      _
    $region35: #{tpu_custom_call.1} parent=1 // pred_check_branch
      %95 = sbr.rel (0) target = $region37
    $region36: #{tpu_custom_call.1} parent=1 // pred_region
      %96 = dma.done [#allocation3], 1024
    $region37: #{tpu_custom_call.1} parent=1 // pred_fallthru
      _
    // Predicated region
    $region38: #{tpu_custom_call.1} parent=1 // pred_check
      _
    $region39: #{tpu_custom_call.1} parent=1 // pred_check_branch
      %98 = sbr.rel (0) target = $region41
    $region40: #{tpu_custom_call.1} parent=1 // pred_region
      %99 = dma.done [#allocation6], 2048
    $region41: #{tpu_custom_call.1} parent=1 // pred_fallthru
      _
    // Predicated region
    $region42: #{tpu_custom_call.1} parent=1 // pred_check
      _
    $region43: #{tpu_custom_call.1} parent=1 // pred_check_branch
      %101 = sbr.rel (0) target = $region45
    $region44: #{tpu_custom_call.1} parent=1 // pred_region
      %102 = dma.done [#allocation6], 512
    $region45: #{tpu_custom_call.1} parent=1 // pred_fallthru
      _
    // Predicated region
    $region46: #{tpu_custom_call.1} parent=1 // pred_check
      _
    $region47: #{tpu_custom_call.1} parent=1 // pred_check_branch
      %104 = sbr.rel (0) target = $region49
    $region48: #{tpu_custom_call.1} parent=1 // pred_region
      %105 = dma.done [#allocation9], 512
    $region49: #{tpu_custom_call.1} parent=1 // pred_fallthru
      _
    // Predicated region
    $region50: #{tpu_custom_call.1} parent=1 // pred_check
      _
    $region51: #{tpu_custom_call.1} parent=1 // pred_check_branch
      %107 = sbr.rel (0) target = $region53
    $region52: #{tpu_custom_call.1} parent=1 // pred_region
      %108 = dma.done [#allocation9], 6144
    $region53: #{tpu_custom_call.1} parent=1 // pred_fallthru
      _
    // Predicated region
    $region54: #{tpu_custom_call.1} parent=1 // pred_check
      _
    $region55: #{tpu_custom_call.1} parent=1 // pred_check_branch
      %110 = sbr.rel (0) target = $region57
    $region56: #{tpu_custom_call.1} parent=1 // pred_region
      %111 = dma.done [#allocation12], 2048
    $region57: #{tpu_custom_call.1} parent=1 // pred_fallthru
      _
    %v113 = vld [vmem:[#allocation7] sm:$0xf]
    %v114 = vld [vmem:[#allocation7 + $0x4] sm:$0xf]
    %v115 = vld [vmem:[#allocation7 + $0x8] sm:$0xf]
    %v116 = vld [vmem:[#allocation7 + $0xc] sm:$0xf]
    %v117 = vld [vmem:[#allocation7 + $0x10] sm:$0xf]
    %v118 = vld [vmem:[#allocation7 + $0x14] sm:$0xf]
    %v119 = vld [vmem:[#allocation7 + $0x18] sm:$0xf]
    %v120 = vld [vmem:[#allocation7 + $0x1c] sm:$0xf]
    %v121 = vld [vmem:[#allocation8] sm:$0xf]
    %v122 = vld [vmem:[#allocation8 + $0x4] sm:$0xf]
    %v123 = vld [vmem:[#allocation8 + $0x8] sm:$0xf]
    %v124 = vld [vmem:[#allocation8 + $0xc] sm:$0xf]
    %v125 = vld [vmem:[#allocation8 + $0x10] sm:$0xf]
    %v126 = vld [vmem:[#allocation8 + $0x14] sm:$0xf]
    %v127 = vld [vmem:[#allocation8 + $0x18] sm:$0xf]
    %v128 = vld [vmem:[#allocation8 + $0x1c] sm:$0xf]
    %v129 = vld [vmem:[#allocation2] sm:$0xf]
    %v130 = vld [vmem:[#allocation2 + $0x4] sm:$0xf]
    %v131 = vld [vmem:[#allocation2 + $0x8] sm:$0xf]
    %v132 = vld [vmem:[#allocation2 + $0xc] sm:$0xf]
    %v133 = vld [vmem:[#allocation2 + $0x10] sm:$0xf]
    %v134 = vld [vmem:[#allocation2 + $0x14] sm:$0xf]
    %v135 = vld [vmem:[#allocation2 + $0x18] sm:$0xf]
    %v136 = vld [vmem:[#allocation2 + $0x1c] sm:$0xf]
    %v137 = vld [vmem:[#allocation2 + $0x20] sm:$0xf]
    %v138 = vld [vmem:[#allocation2 + $0x24] sm:$0xf]
    %v139 = vld [vmem:[#allocation2 + $0x28] sm:$0xf]
    %v140 = vld [vmem:[#allocation2 + $0x2c] sm:$0xf]
    %v141 = vld [vmem:[#allocation2 + $0x30] sm:$0xf]
    %v142 = vld [vmem:[#allocation2 + $0x34] sm:$0xf]
    %v143 = vld [vmem:[#allocation2 + $0x38] sm:$0xf]
    %v144 = vld [vmem:[#allocation2 + $0x3c] sm:$0xf]
    %v145 = vld [vmem:[#allocation5] sm:$0xff]
    %v146 = vld [vmem:[#allocation5 + $0x8] sm:$0xff]
    %v147 = vld [vmem:[#allocation5 + $0x10] sm:$0xff]
    %v148 = vld [vmem:[#allocation5 + $0x18] sm:$0xff]
    %v149 = vld [vmem:[#allocation5 + $0x20] sm:$0xff]
    %v150 = vld [vmem:[#allocation5 + $0x28] sm:$0xff]
    %v151 = vld [vmem:[#allocation5 + $0x30] sm:$0xff]
    %v152 = vld [vmem:[#allocation5 + $0x38] sm:$0xff]
    %v153 = vld [vmem:[#allocation5 + $0x40] sm:$0xff]
    %v154 = vld [vmem:[#allocation5 + $0x48] sm:$0xff]
    %v155 = vld [vmem:[#allocation5 + $0x50] sm:$0xff]
    %v156 = vld [vmem:[#allocation5 + $0x58] sm:$0xff]
    %v157 = vld [vmem:[#allocation5 + $0x60] sm:$0xff]
    %v158 = vld [vmem:[#allocation5 + $0x68] sm:$0xff]
    %v159 = vld [vmem:[#allocation5 + $0x70] sm:$0xff]
    %v160 = vld [vmem:[#allocation5 + $0x78] sm:$0xff]
    %v161 = vld [vmem:[#allocation10] sm:$0xff]
    %v162 = vld [vmem:[#allocation10 + $0x8] sm:$0xff]
    %v163 = vld [vmem:[#allocation10 + $0x10] sm:$0xff]
    %v164 = vld [vmem:[#allocation10 + $0x18] sm:$0xff]
    %v165 = vld [vmem:[#allocation10 + $0x20] sm:$0xff]
    %v166 = vld [vmem:[#allocation10 + $0x28] sm:$0xff]
    %v167 = vld [vmem:[#allocation10 + $0x30] sm:$0xff]
    %v168 = vld [vmem:[#allocation10 + $0x38] sm:$0xff]
    %v169 = vld [vmem:[#allocation10 + $0x40] sm:$0xff]
    %v170 = vld [vmem:[#allocation10 + $0x48] sm:$0xff]
    %v171 = vld [vmem:[#allocation10 + $0x50] sm:$0xff]
    %v172 = vld [vmem:[#allocation10 + $0x58] sm:$0xff]
    %v173 = vld [vmem:[#allocation10 + $0x60] sm:$0xff]
    %v174 = vld [vmem:[#allocation10 + $0x68] sm:$0xff]
    %v175 = vld [vmem:[#allocation10 + $0x70] sm:$0xff]
    %v176 = vld [vmem:[#allocation10 + $0x78] sm:$0xff]
    %v177 = vld [vmem:[#allocation10 + $0x80] sm:$0xff]
    %v178 = vld [vmem:[#allocation10 + $0x88] sm:$0xff]
    %v179 = vld [vmem:[#allocation10 + $0x90] sm:$0xff]
    %v180 = vld [vmem:[#allocation10 + $0x98] sm:$0xff]
    %v181 = vld [vmem:[#allocation10 + $0xa0] sm:$0xff]
    %v182 = vld [vmem:[#allocation10 + $0xa8] sm:$0xff]
    %v183 = vld [vmem:[#allocation10 + $0xb0] sm:$0xff]
    %v184 = vld [vmem:[#allocation10 + $0xb8] sm:$0xff]
    %v185 = vld [vmem:[#allocation10 + $0xc0] sm:$0xff]
    %v186 = vld [vmem:[#allocation10 + $0xc8] sm:$0xff]
    %v187 = vld [vmem:[#allocation10 + $0xd0] sm:$0xff]
    %v188 = vld [vmem:[#allocation10 + $0xd8] sm:$0xff]
    %v189 = vld [vmem:[#allocation10 + $0xe0] sm:$0xff]
    %v190 = vld [vmem:[#allocation10 + $0xe8] sm:$0xff]
    %v191 = vld [vmem:[#allocation10 + $0xf0] sm:$0xff]
    %v192 = vld [vmem:[#allocation10 + $0xf8] sm:$0xff]
    %v193 = vld [vmem:[#allocation10 + $0x100] sm:$0xff]
    %v194 = vld [vmem:[#allocation10 + $0x108] sm:$0xff]
    %v195 = vld [vmem:[#allocation10 + $0x110] sm:$0xff]
    %v196 = vld [vmem:[#allocation10 + $0x118] sm:$0xff]
    %v197 = vld [vmem:[#allocation10 + $0x120] sm:$0xff]
    %v198 = vld [vmem:[#allocation10 + $0x128] sm:$0xff]
    %v199 = vld [vmem:[#allocation10 + $0x130] sm:$0xff]
    %v200 = vld [vmem:[#allocation10 + $0x138] sm:$0xff]
    %v201 = vld [vmem:[#allocation10 + $0x140] sm:$0xff]
    %v202 = vld [vmem:[#allocation10 + $0x148] sm:$0xff]
    %v203 = vld [vmem:[#allocation10 + $0x150] sm:$0xff]
    %v204 = vld [vmem:[#allocation10 + $0x158] sm:$0xff]
    %v205 = vld [vmem:[#allocation10 + $0x160] sm:$0xff]
    %v206 = vld [vmem:[#allocation10 + $0x168] sm:$0xff]
    %v207 = vld [vmem:[#allocation10 + $0x170] sm:$0xff]
    %v208 = vld [vmem:[#allocation10 + $0x178] sm:$0xff]
    %v225 = vunpack.c.l.b16 %v129
    %v226 = vunpack.c.l.b16 %v130
    %v227 = vunpack.c.l.b16 %v131
    %v228 = vunpack.c.l.b16 %v132
    %v229 = vunpack.c.l.b16 %v133
    %v230 = vunpack.c.l.b16 %v134
    %v231 = vunpack.c.l.b16 %v135
    %v232 = vunpack.c.l.b16 %v136
    %v233 = vunpack.c.l.b16 %v137
    %v234 = vunpack.c.l.b16 %v138
    %v235 = vunpack.c.l.b16 %v139
    %v236 = vunpack.c.l.b16 %v140
    %v237 = vunpack.c.l.b16 %v141
    %v238 = vunpack.c.l.b16 %v142
    %v239 = vunpack.c.l.b16 %v143
    %v240 = vunpack.c.l.b16 %v144
    %v241 = vpack.c.b16 %v226, %v225
    %v242 = vpack.c.b16 %v228, %v227
    %v243 = vpack.c.b16 %v230, %v229
    %v244 = vpack.c.b16 %v232, %v231
    %v245 = vpack.c.b16 %v234, %v233
    %v246 = vpack.c.b16 %v236, %v235
    %v247 = vpack.c.b16 %v238, %v237
    %v248 = vpack.c.b16 %v240, %v239
    %v305 = vunpack.c.l.b16 %v161
    %v306 = vunpack.c.h.b16 %v161
    %v307 = vunpack.c.l.b16 %v162
    %v308 = vunpack.c.h.b16 %v162
    %v309 = vunpack.c.l.b16 %v163
    %v310 = vunpack.c.h.b16 %v163
    %v311 = vunpack.c.l.b16 %v164
    %v312 = vunpack.c.h.b16 %v164
    %v313 = vunpack.c.l.b16 %v165
    %v314 = vunpack.c.h.b16 %v165
    %v315 = vunpack.c.l.b16 %v166
    %v316 = vunpack.c.h.b16 %v166
    %v317 = vunpack.c.l.b16 %v167
    %v318 = vunpack.c.h.b16 %v167
    %v319 = vunpack.c.l.b16 %v168
    %v320 = vunpack.c.h.b16 %v168
    %v321 = vunpack.c.l.b16 %v169
    %v322 = vunpack.c.h.b16 %v169
    %v323 = vunpack.c.l.b16 %v170
    %v324 = vunpack.c.h.b16 %v170
    %v325 = vunpack.c.l.b16 %v171
    %v326 = vunpack.c.h.b16 %v171
    %v327 = vunpack.c.l.b16 %v172
    %v328 = vunpack.c.h.b16 %v172
    %v329 = vunpack.c.l.b16 %v173
    %v330 = vunpack.c.h.b16 %v173
    %v331 = vunpack.c.l.b16 %v174
    %v332 = vunpack.c.h.b16 %v174
    %v333 = vunpack.c.l.b16 %v175
    %v334 = vunpack.c.h.b16 %v175
    %v335 = vunpack.c.l.b16 %v176
    %v336 = vunpack.c.h.b16 %v176
    %v337 = vunpack.c.l.b16 %v177
    %v338 = vunpack.c.h.b16 %v177
    %v339 = vunpack.c.l.b16 %v178
    %v340 = vunpack.c.h.b16 %v178
    %v341 = vunpack.c.l.b16 %v179
    %v342 = vunpack.c.h.b16 %v179
    %v343 = vunpack.c.l.b16 %v180
    %v344 = vunpack.c.h.b16 %v180
    %v345 = vunpack.c.l.b16 %v181
    %v346 = vunpack.c.h.b16 %v181
    %v347 = vunpack.c.l.b16 %v182
    %v348 = vunpack.c.h.b16 %v182
    %v349 = vunpack.c.l.b16 %v183
    %v350 = vunpack.c.h.b16 %v183
    %v351 = vunpack.c.l.b16 %v184
    %v352 = vunpack.c.h.b16 %v184
    %v353 = vunpack.c.l.b16 %v185
    %v354 = vunpack.c.h.b16 %v185
    %v355 = vunpack.c.l.b16 %v186
    %v356 = vunpack.c.h.b16 %v186
    %v357 = vunpack.c.l.b16 %v187
    %v358 = vunpack.c.h.b16 %v187
    %v359 = vunpack.c.l.b16 %v188
    %v360 = vunpack.c.h.b16 %v188
    %v361 = vunpack.c.l.b16 %v189
    %v362 = vunpack.c.h.b16 %v189
    %v363 = vunpack.c.l.b16 %v190
    %v364 = vunpack.c.h.b16 %v190
    %v365 = vunpack.c.l.b16 %v191
    %v366 = vunpack.c.h.b16 %v191
    %v367 = vunpack.c.l.b16 %v192
    %v368 = vunpack.c.h.b16 %v192
    %v369 = vunpack.c.l.b16 %v193
    %v370 = vunpack.c.h.b16 %v193
    %v371 = vunpack.c.l.b16 %v194
    %v372 = vunpack.c.h.b16 %v194
    %v373 = vunpack.c.l.b16 %v195
    %v374 = vunpack.c.h.b16 %v195
    %v375 = vunpack.c.l.b16 %v196
    %v376 = vunpack.c.h.b16 %v196
    %v377 = vunpack.c.l.b16 %v197
    %v378 = vunpack.c.h.b16 %v197
    %v379 = vunpack.c.l.b16 %v198
    %v380 = vunpack.c.h.b16 %v198
    %v381 = vunpack.c.l.b16 %v199
    %v382 = vunpack.c.h.b16 %v199
    %v383 = vunpack.c.l.b16 %v200
    %v384 = vunpack.c.h.b16 %v200
    %v385 = vunpack.c.l.b16 %v201
    %v386 = vunpack.c.h.b16 %v201
    %v387 = vunpack.c.l.b16 %v202
    %v388 = vunpack.c.h.b16 %v202
    %v389 = vunpack.c.l.b16 %v203
    %v390 = vunpack.c.h.b16 %v203
    %v391 = vunpack.c.l.b16 %v204
    %v392 = vunpack.c.h.b16 %v204
    %v393 = vunpack.c.l.b16 %v205
    %v394 = vunpack.c.h.b16 %v205
    %v395 = vunpack.c.l.b16 %v206
    %v396 = vunpack.c.h.b16 %v206
    %v397 = vunpack.c.l.b16 %v207
    %v398 = vunpack.c.h.b16 %v207
    %v399 = vunpack.c.l.b16 %v208
    %v400 = vunpack.c.h.b16 %v208
    %v401 = vpack.c.b16 %v311, %v305
    %v402 = vpack.c.b16 %v312, %v306
    %v403 = vpack.c.b16 %v313, %v307
    %v404 = vpack.c.b16 %v314, %v308
    %v405 = vpack.c.b16 %v315, %v309
    %v406 = vpack.c.b16 %v316, %v310
    %v407 = vpack.c.b16 %v323, %v317
    %v408 = vpack.c.b16 %v324, %v318
    %v409 = vpack.c.b16 %v325, %v319
    %v410 = vpack.c.b16 %v326, %v320
    %v411 = vpack.c.b16 %v327, %v321
    %v412 = vpack.c.b16 %v328, %v322
    %v413 = vpack.c.b16 %v335, %v329
    %v414 = vpack.c.b16 %v336, %v330
    %v415 = vpack.c.b16 %v337, %v331
    %v416 = vpack.c.b16 %v338, %v332
    %v417 = vpack.c.b16 %v339, %v333
    %v418 = vpack.c.b16 %v340, %v334
    %v419 = vpack.c.b16 %v347, %v341
    %v420 = vpack.c.b16 %v348, %v342
    %v421 = vpack.c.b16 %v349, %v343
    %v422 = vpack.c.b16 %v350, %v344
    %v423 = vpack.c.b16 %v351, %v345
    %v424 = vpack.c.b16 %v352, %v346
    %v425 = vpack.c.b16 %v359, %v353
    %v426 = vpack.c.b16 %v360, %v354
    %v427 = vpack.c.b16 %v361, %v355
    %v428 = vpack.c.b16 %v362, %v356
    %v429 = vpack.c.b16 %v363, %v357
    %v430 = vpack.c.b16 %v364, %v358
    %v431 = vpack.c.b16 %v371, %v365
    %v432 = vpack.c.b16 %v372, %v366
    %v433 = vpack.c.b16 %v373, %v367
    %v434 = vpack.c.b16 %v374, %v368
    %v435 = vpack.c.b16 %v375, %v369
    %v436 = vpack.c.b16 %v376, %v370
    %v437 = vpack.c.b16 %v383, %v377
    %v438 = vpack.c.b16 %v384, %v378
    %v439 = vpack.c.b16 %v385, %v379
    %v440 = vpack.c.b16 %v386, %v380
    %v441 = vpack.c.b16 %v387, %v381
    %v442 = vpack.c.b16 %v388, %v382
    %v443 = vpack.c.b16 %v395, %v389
    %v444 = vpack.c.b16 %v396, %v390
    %v445 = vpack.c.b16 %v397, %v391
    %v446 = vpack.c.b16 %v398, %v392
    %v447 = vpack.c.b16 %v399, %v393
    %v448 = vpack.c.b16 %v400, %v394
    %497 = vmatprep.subr.bf16.mxu0 %v402
    %498 = vmatpush1.bf16.msra.mxu0 %v401
    %499 = vmatprep.subr.bf16.mxu0 %v408
    %500 = vmatpush1.bf16.msra.mxu0 %v407
    %501 = vmatprep.subr.bf16.mxu0 %v414
    %502 = vmatpush1.bf16.msra.mxu0 %v413
    %503 = vmatprep.subr.bf16.mxu0 %v420
    %504 = vmatpush1.bf16.msra.mxu0 %v419
    %505 = vmatprep.subr.bf16.mxu0 %v426
    %506 = vmatpush1.bf16.msra.mxu0 %v425
    %507 = vmatprep.subr.bf16.mxu0 %v432
    %508 = vmatpush1.bf16.msra.mxu0 %v431
    %509 = vmatprep.subr.bf16.mxu0 %v438
    %510 = vmatpush1.bf16.msra.mxu0 %v437
    %511 = vmatprep.subr.bf16.mxu0 %v444
    %512 = vmatpush1.bf16.msra.mxu0 %v443
    %513 = vmatprep.subr.bf16.mxu0 0
    %514 = vmatpush1.bf16.msra.mxu0 0
    %515 = vmatprep.subr.bf16.mxu0 0
    %516 = vmatpush1.bf16.msra.mxu0 0
    %517 = vmatprep.subr.bf16.mxu0 0
    %518 = vmatpush1.bf16.msra.mxu0 0
    %519 = vmatprep.subr.bf16.mxu0 0
    %520 = vmatpush1.bf16.msra.mxu0 0
    %521 = vmatprep.subr.bf16.mxu0 0
    %522 = vmatpush1.bf16.msra.mxu0 0
    %523 = vmatprep.subr.bf16.mxu0 0
    %524 = vmatpush1.bf16.msra.mxu0 0
    %525 = vmatprep.subr.bf16.mxu0 0
    %526 = vmatpush1.bf16.msra.mxu0 0
    %527 = vmatprep.subr.bf16.mxu0 0
    %528 = vmatpush1.bf16.msra.mxu0 0
    %529 = vmatprep.mubr.bf16.mxu0 0
    %530 = vmatmul.mubr.bf16.gmra.mrb[0].mxu0 %v241
    %v531 = vpop.f32.mrb[0].mxu0
    %v532 = vadd.f32 0.0, %v531
    %v533 = vpop.f32.mrb[0].mxu0
    %v534 = vadd.f32 0.0, %v533
    %v535 = vpop.f32.mrb[0].mxu0
    %v536 = vadd.f32 0.0, %v535
    %v537 = vpop.f32.mrb[0].mxu0
    %v538 = vadd.f32 0.0, %v537
    %539 = vmatprep.mubr.bf16.mxu0 0
    %540 = vmatmul.mubr.bf16.gmra.mrb[0].mxu0 %v242
    %v541 = vpop.f32.mrb[0].mxu0
    %v542 = vadd.f32 0.0, %v541
    %v543 = vpop.f32.mrb[0].mxu0
    %v544 = vadd.f32 0.0, %v543
    %v545 = vpop.f32.mrb[0].mxu0
    %v546 = vadd.f32 0.0, %v545
    %v547 = vpop.f32.mrb[0].mxu0
    %v548 = vadd.f32 0.0, %v547
    %549 = vmatprep.mubr.bf16.mxu0 0
    %550 = vmatmul.mubr.bf16.gmra.mrb[0].mxu0 %v243
    %v551 = vpop.f32.mrb[0].mxu0
    %v552 = vadd.f32 0.0, %v551
    %v553 = vpop.f32.mrb[0].mxu0
    %v554 = vadd.f32 0.0, %v553
    %v555 = vpop.f32.mrb[0].mxu0
    %v556 = vadd.f32 0.0, %v555
    %v557 = vpop.f32.mrb[0].mxu0
    %v558 = vadd.f32 0.0, %v557
    %559 = vmatprep.mubr.bf16.mxu0 0
    %560 = vmatmul.mubr.bf16.gmra.mrb[0].mxu0 %v244
    %v561 = vpop.f32.mrb[0].mxu0
    %v562 = vadd.f32 0.0, %v561
    %v563 = vpop.f32.mrb[0].mxu0
    %v564 = vadd.f32 0.0, %v563
    %v565 = vpop.f32.mrb[0].mxu0
    %v566 = vadd.f32 0.0, %v565
    %v567 = vpop.f32.mrb[0].mxu0
    %v568 = vadd.f32 0.0, %v567
    %569 = vmatprep.mubr.bf16.mxu0 0
    %570 = vmatmul.mubr.bf16.gmra.mrb[0].mxu0 %v245
    %v571 = vpop.f32.mrb[0].mxu0
    %v572 = vadd.f32 0.0, %v571
    %v573 = vpop.f32.mrb[0].mxu0
    %v574 = vadd.f32 0.0, %v573
    %v575 = vpop.f32.mrb[0].mxu0
    %v576 = vadd.f32 0.0, %v575
    %v577 = vpop.f32.mrb[0].mxu0
    %v578 = vadd.f32 0.0, %v577
    %579 = vmatprep.mubr.bf16.mxu0 0
    %580 = vmatmul.mubr.bf16.gmra.mrb[0].mxu0 %v246
    %v581 = vpop.f32.mrb[0].mxu0
    %v582 = vadd.f32 0.0, %v581
    %v583 = vpop.f32.mrb[0].mxu0
    %v584 = vadd.f32 0.0, %v583
    %v585 = vpop.f32.mrb[0].mxu0
    %v586 = vadd.f32 0.0, %v585
    %v587 = vpop.f32.mrb[0].mxu0
    %v588 = vadd.f32 0.0, %v587
    %589 = vmatprep.mubr.bf16.mxu0 0
    %590 = vmatmul.mubr.bf16.gmra.mrb[0].mxu0 %v247
    %v591 = vpop.f32.mrb[0].mxu0
    %v592 = vadd.f32 0.0, %v591
    %v593 = vpop.f32.mrb[0].mxu0
    %v594 = vadd.f32 0.0, %v593
    %v595 = vpop.f32.mrb[0].mxu0
    %v596 = vadd.f32 0.0, %v595
    %v597 = vpop.f32.mrb[0].mxu0
    %v598 = vadd.f32 0.0, %v597
    %599 = vmatprep.mubr.bf16.mxu0 0
    %600 = vmatmul.mubr.bf16.gmra.mrb[0].mxu0 %v248
    %v601 = vpop.f32.mrb[0].mxu0
    %v602 = vadd.f32 0.0, %v601
    %v603 = vpop.f32.mrb[0].mxu0
    %v604 = vadd.f32 0.0, %v603
    %v605 = vpop.f32.mrb[0].mxu0
    %v606 = vadd.f32 0.0, %v605
    %v607 = vpop.f32.mrb[0].mxu0
    %v608 = vadd.f32 0.0, %v607
    %609 = vdwg.mxu0
    %610 = vmatprep.subr.bf16.mxu0 %v404
    %611 = vmatpush1.bf16.msra.mxu0 %v403
    %612 = vmatprep.subr.bf16.mxu0 %v410
    %613 = vmatpush1.bf16.msra.mxu0 %v409
    %614 = vmatprep.subr.bf16.mxu0 %v416
    %615 = vmatpush1.bf16.msra.mxu0 %v415
    %616 = vmatprep.subr.bf16.mxu0 %v422
    %617 = vmatpush1.bf16.msra.mxu0 %v421
    %618 = vmatprep.subr.bf16.mxu0 %v428
    %619 = vmatpush1.bf16.msra.mxu0 %v427
    %620 = vmatprep.subr.bf16.mxu0 %v434
    %621 = vmatpush1.bf16.msra.mxu0 %v433
    %622 = vmatprep.subr.bf16.mxu0 %v440
    %623 = vmatpush1.bf16.msra.mxu0 %v439
    %624 = vmatprep.subr.bf16.mxu0 %v446
    %625 = vmatpush1.bf16.msra.mxu0 %v445
    %626 = vmatprep.subr.bf16.mxu0 0
    %627 = vmatpush1.bf16.msra.mxu0 0
    %628 = vmatprep.subr.bf16.mxu0 0
    %629 = vmatpush1.bf16.msra.mxu0 0
    %630 = vmatprep.subr.bf16.mxu0 0
    %631 = vmatpush1.bf16.msra.mxu0 0
    %632 = vmatprep.subr.bf16.mxu0 0
    %633 = vmatpush1.bf16.msra.mxu0 0
    %634 = vmatprep.subr.bf16.mxu0 0
    %635 = vmatpush1.bf16.msra.mxu0 0
    %636 = vmatprep.subr.bf16.mxu0 0
    %637 = vmatpush1.bf16.msra.mxu0 0
    %638 = vmatprep.subr.bf16.mxu0 0
    %639 = vmatpush1.bf16.msra.mxu0 0
    %640 = vmatprep.subr.bf16.mxu0 0
    %641 = vmatpush1.bf16.msra.mxu0 0
    %642 = vmatprep.mubr.bf16.mxu0 0
    %643 = vmatmul.mubr.bf16.gmra.mrb[0].mxu0 %v241
    %v644 = vpop.f32.mrb[0].mxu0
    %v645 = vadd.f32 0.0, %v644
    %v646 = vpop.f32.mrb[0].mxu0
    %v647 = vadd.f32 0.0, %v646
    %v648 = vpop.f32.mrb[0].mxu0
    %v649 = vadd.f32 0.0, %v648
    %v650 = vpop.f32.mrb[0].mxu0
    %v651 = vadd.f32 0.0, %v650
    %652 = vmatprep.mubr.bf16.mxu0 0
    %653 = vmatmul.mubr.bf16.gmra.mrb[0].mxu0 %v242
    %v654 = vpop.f32.mrb[0].mxu0
    %v655 = vadd.f32 0.0, %v654
    %v656 = vpop.f32.mrb[0].mxu0
    %v657 = vadd.f32 0.0, %v656
    %v658 = vpop.f32.mrb[0].mxu0
    %v659 = vadd.f32 0.0, %v658
    %v660 = vpop.f32.mrb[0].mxu0
    %v661 = vadd.f32 0.0, %v660
    %662 = vmatprep.mubr.bf16.mxu0 0
    %663 = vmatmul.mubr.bf16.gmra.mrb[0].mxu0 %v243
    %v664 = vpop.f32.mrb[0].mxu0
    %v665 = vadd.f32 0.0, %v664
    %v666 = vpop.f32.mrb[0].mxu0
    %v667 = vadd.f32 0.0, %v666
    %v668 = vpop.f32.mrb[0].mxu0
    %v669 = vadd.f32 0.0, %v668
    %v670 = vpop.f32.mrb[0].mxu0
    %v671 = vadd.f32 0.0, %v670
    %672 = vmatprep.mubr.bf16.mxu0 0
    %673 = vmatmul.mubr.bf16.gmra.mrb[0].mxu0 %v244
    %v674 = vpop.f32.mrb[0].mxu0
    %v675 = vadd.f32 0.0, %v674
    %v676 = vpop.f32.mrb[0].mxu0
    %v677 = vadd.f32 0.0, %v676
    %v678 = vpop.f32.mrb[0].mxu0
    %v679 = vadd.f32 0.0, %v678
    %v680 = vpop.f32.mrb[0].mxu0
    %v681 = vadd.f32 0.0, %v680
    %682 = vmatprep.mubr.bf16.mxu0 0
    %683 = vmatmul.mubr.bf16.gmra.mrb[0].mxu0 %v245
    %v684 = vpop.f32.mrb[0].mxu0
    %v685 = vadd.f32 0.0, %v684
    %v686 = vpop.f32.mrb[0].mxu0
    %v687 = vadd.f32 0.0, %v686
    %v688 = vpop.f32.mrb[0].mxu0
    %v689 = vadd.f32 0.0, %v688
    %v690 = vpop.f32.mrb[0].mxu0
    %v691 = vadd.f32 0.0, %v690
    %692 = vmatprep.mubr.bf16.mxu0 0
    %693 = vmatmul.mubr.bf16.gmra.mrb[0].mxu0 %v246
    %v694 = vpop.f32.mrb[0].mxu0
    %v695 = vadd.f32 0.0, %v694
    %v696 = vpop.f32.mrb[0].mxu0
    %v697 = vadd.f32 0.0, %v696
    %v698 = vpop.f32.mrb[0].mxu0
    %v699 = vadd.f32 0.0, %v698
    %v700 = vpop.f32.mrb[0].mxu0
    %v701 = vadd.f32 0.0, %v700
    %702 = vmatprep.mubr.bf16.mxu0 0
    %703 = vmatmul.mubr.bf16.gmra.mrb[0].mxu0 %v247
    %v704 = vpop.f32.mrb[0].mxu0
    %v705 = vadd.f32 0.0, %v704
    %v706 = vpop.f32.mrb[0].mxu0
    %v707 = vadd.f32 0.0, %v706
    %v708 = vpop.f32.mrb[0].mxu0
    %v709 = vadd.f32 0.0, %v708
    %v710 = vpop.f32.mrb[0].mxu0
    %v711 = vadd.f32 0.0, %v710
    %712 = vmatprep.mubr.bf16.mxu0 0
    %713 = vmatmul.mubr.bf16.gmra.mrb[0].mxu0 %v248
    %v714 = vpop.f32.mrb[0].mxu0
    %v715 = vadd.f32 0.0, %v714
    %v716 = vpop.f32.mrb[0].mxu0
    %v717 = vadd.f32 0.0, %v716
    %v718 = vpop.f32.mrb[0].mxu0
    %v719 = vadd.f32 0.0, %v718
    %v720 = vpop.f32.mrb[0].mxu0
    %v721 = vadd.f32 0.0, %v720
    %722 = vdwg.mxu0
    %723 = vmatprep.subr.bf16.mxu0 %v406
    %724 = vmatpush1.bf16.msra.mxu0 %v405
    %725 = vmatprep.subr.bf16.mxu0 %v412
    %726 = vmatpush1.bf16.msra.mxu0 %v411
    %727 = vmatprep.subr.bf16.mxu0 %v418
    %728 = vmatpush1.bf16.msra.mxu0 %v417
    %729 = vmatprep.subr.bf16.mxu0 %v424
    %730 = vmatpush1.bf16.msra.mxu0 %v423
    %731 = vmatprep.subr.bf16.mxu0 %v430
    %732 = vmatpush1.bf16.msra.mxu0 %v429
    %733 = vmatprep.subr.bf16.mxu0 %v436
    %734 = vmatpush1.bf16.msra.mxu0 %v435
    %735 = vmatprep.subr.bf16.mxu0 %v442
    %736 = vmatpush1.bf16.msra.mxu0 %v441
    %737 = vmatprep.subr.bf16.mxu0 %v448
    %738 = vmatpush1.bf16.msra.mxu0 %v447
    %739 = vmatprep.subr.bf16.mxu0 0
    %740 = vmatpush1.bf16.msra.mxu0 0
    %741 = vmatprep.subr.bf16.mxu0 0
    %742 = vmatpush1.bf16.msra.mxu0 0
    %743 = vmatprep.subr.bf16.mxu0 0
    %744 = vmatpush1.bf16.msra.mxu0 0
    %745 = vmatprep.subr.bf16.mxu0 0
    %746 = vmatpush1.bf16.msra.mxu0 0
    %747 = vmatprep.subr.bf16.mxu0 0
    %748 = vmatpush1.bf16.msra.mxu0 0
    %749 = vmatprep.subr.bf16.mxu0 0
    %750 = vmatpush1.bf16.msra.mxu0 0
    %751 = vmatprep.subr.bf16.mxu0 0
    %752 = vmatpush1.bf16.msra.mxu0 0
    %753 = vmatprep.subr.bf16.mxu0 0
    %754 = vmatpush1.bf16.msra.mxu0 0
    %755 = vmatprep.mubr.bf16.mxu0 0
    %756 = vmatmul.mubr.bf16.gmra.mrb[0].mxu0 %v241
    %v757 = vpop.f32.mrb[0].mxu0
    %v758 = vadd.f32 0.0, %v757
    %v759 = vpop.f32.mrb[0].mxu0
    %v760 = vadd.f32 0.0, %v759
    %v761 = vpop.f32.mrb[0].mxu0
    %v762 = vadd.f32 0.0, %v761
    %v763 = vpop.f32.mrb[0].mxu0
    %v764 = vadd.f32 0.0, %v763
    %765 = vmatprep.mubr.bf16.mxu0 0
    %766 = vmatmul.mubr.bf16.gmra.mrb[0].mxu0 %v242
    %v767 = vpop.f32.mrb[0].mxu0
    %v768 = vadd.f32 0.0, %v767
    %v769 = vpop.f32.mrb[0].mxu0
    %v770 = vadd.f32 0.0, %v769
    %v771 = vpop.f32.mrb[0].mxu0
    %v772 = vadd.f32 0.0, %v771
    %v773 = vpop.f32.mrb[0].mxu0
    %v774 = vadd.f32 0.0, %v773
    %775 = vmatprep.mubr.bf16.mxu0 0
    %776 = vmatmul.mubr.bf16.gmra.mrb[0].mxu0 %v243
    %v777 = vpop.f32.mrb[0].mxu0
    %v778 = vadd.f32 0.0, %v777
    %v779 = vpop.f32.mrb[0].mxu0
    %v780 = vadd.f32 0.0, %v779
    %v781 = vpop.f32.mrb[0].mxu0
    %v782 = vadd.f32 0.0, %v781
    %v783 = vpop.f32.mrb[0].mxu0
    %v784 = vadd.f32 0.0, %v783
    %785 = vmatprep.mubr.bf16.mxu0 0
    %786 = vmatmul.mubr.bf16.gmra.mrb[0].mxu0 %v244
    %v787 = vpop.f32.mrb[0].mxu0
    %v788 = vadd.f32 0.0, %v787
    %v789 = vpop.f32.mrb[0].mxu0
    %v790 = vadd.f32 0.0, %v789
    %v791 = vpop.f32.mrb[0].mxu0
    %v792 = vadd.f32 0.0, %v791
    %v793 = vpop.f32.mrb[0].mxu0
    %v794 = vadd.f32 0.0, %v793
    %795 = vmatprep.mubr.bf16.mxu0 0
    %796 = vmatmul.mubr.bf16.gmra.mrb[0].mxu0 %v245
    %v797 = vpop.f32.mrb[0].mxu0
    %v798 = vadd.f32 0.0, %v797
    %v799 = vpop.f32.mrb[0].mxu0
    %v800 = vadd.f32 0.0, %v799
    %v801 = vpop.f32.mrb[0].mxu0
    %v802 = vadd.f32 0.0, %v801
    %v803 = vpop.f32.mrb[0].mxu0
    %v804 = vadd.f32 0.0, %v803
    %805 = vmatprep.mubr.bf16.mxu0 0
    %806 = vmatmul.mubr.bf16.gmra.mrb[0].mxu0 %v246
    %v807 = vpop.f32.mrb[0].mxu0
    %v808 = vadd.f32 0.0, %v807
    %v809 = vpop.f32.mrb[0].mxu0
    %v810 = vadd.f32 0.0, %v809
    %v811 = vpop.f32.mrb[0].mxu0
    %v812 = vadd.f32 0.0, %v811
    %v813 = vpop.f32.mrb[0].mxu0
    %v814 = vadd.f32 0.0, %v813
    %815 = vmatprep.mubr.bf16.mxu0 0
    %816 = vmatmul.mubr.bf16.gmra.mrb[0].mxu0 %v247
    %v817 = vpop.f32.mrb[0].mxu0
    %v818 = vadd.f32 0.0, %v817
    %v819 = vpop.f32.mrb[0].mxu0
    %v820 = vadd.f32 0.0, %v819
    %v821 = vpop.f32.mrb[0].mxu0
    %v822 = vadd.f32 0.0, %v821
    %v823 = vpop.f32.mrb[0].mxu0
    %v824 = vadd.f32 0.0, %v823
    %825 = vmatprep.mubr.bf16.mxu0 0
    %826 = vmatmul.mubr.bf16.gmra.mrb[0].mxu0 %v248
    %v827 = vpop.f32.mrb[0].mxu0
    %v828 = vadd.f32 0.0, %v827
    %v829 = vpop.f32.mrb[0].mxu0
    %v830 = vadd.f32 0.0, %v829
    %v831 = vpop.f32.mrb[0].mxu0
    %v832 = vadd.f32 0.0, %v831
    %v833 = vpop.f32.mrb[0].mxu0
    %v834 = vadd.f32 0.0, %v833
    %835 = vdwg.mxu0
    %v836 = vadd.f32 %v532, %v645
    %v837 = vadd.f32 %v534, %v647
    %v838 = vadd.f32 %v536, %v649
    %v839 = vadd.f32 %v538, %v651
    %v840 = vadd.f32 %v542, %v655
    %v841 = vadd.f32 %v544, %v657
    %v842 = vadd.f32 %v546, %v659
    %v843 = vadd.f32 %v548, %v661
    %v844 = vadd.f32 %v552, %v665
    %v845 = vadd.f32 %v554, %v667
    %v846 = vadd.f32 %v556, %v669
    %v847 = vadd.f32 %v558, %v671
    %v848 = vadd.f32 %v562, %v675
    %v849 = vadd.f32 %v564, %v677
    %v850 = vadd.f32 %v566, %v679
    %v851 = vadd.f32 %v568, %v681
    %v852 = vadd.f32 %v572, %v685
    %v853 = vadd.f32 %v574, %v687
    %v854 = vadd.f32 %v576, %v689
    %v855 = vadd.f32 %v578, %v691
    %v856 = vadd.f32 %v582, %v695
    %v857 = vadd.f32 %v584, %v697
    %v858 = vadd.f32 %v586, %v699
    %v859 = vadd.f32 %v588, %v701
    %v860 = vadd.f32 %v592, %v705
    %v861 = vadd.f32 %v594, %v707
    %v862 = vadd.f32 %v596, %v709
    %v863 = vadd.f32 %v598, %v711
    %v864 = vadd.f32 %v602, %v715
    %v865 = vadd.f32 %v604, %v717
    %v866 = vadd.f32 %v606, %v719
    %v867 = vadd.f32 %v608, %v721
    %v868 = vpack.c.bf16 %v536, %v532
    %v869 = vpack.c.bf16 %v538, %v534
    %v870 = vpack.c.bf16 %v546, %v542
    %v871 = vpack.c.bf16 %v548, %v544
    %v872 = vpack.c.bf16 %v556, %v552
    %v873 = vpack.c.bf16 %v558, %v554
    %v874 = vpack.c.bf16 %v566, %v562
    %v875 = vpack.c.bf16 %v568, %v564
    %v876 = vpack.c.bf16 %v576, %v572
    %v877 = vpack.c.bf16 %v578, %v574
    %v878 = vpack.c.bf16 %v586, %v582
    %v879 = vpack.c.bf16 %v588, %v584
    %v880 = vpack.c.bf16 %v596, %v592
    %v881 = vpack.c.bf16 %v598, %v594
    %v882 = vpack.c.bf16 %v606, %v602
    %v883 = vpack.c.bf16 %v608, %v604
    %v892 = vunpack.c.l.b16 %v113
    %v893 = vunpack.c.l.b16 %v114
    %v894 = vunpack.c.l.b16 %v115
    %v895 = vunpack.c.l.b16 %v116
    %v896 = vunpack.c.l.b16 %v117
    %v897 = vunpack.c.l.b16 %v118
    %v898 = vunpack.c.l.b16 %v119
    %v899 = vunpack.c.l.b16 %v120
    %v900 = vpack.c.b16 %v893, %v892
    %v901 = vpack.c.b16 %v895, %v894
    %v902 = vpack.c.b16 %v897, %v896
    %v903 = vpack.c.b16 %v899, %v898
    %vm904 = vcmask 523264
    %v906 = vsel %vm904, %v900, 0
    %v909 = vsel %vm904, %v901, 0
    %v912 = vsel %vm904, %v902, 0
    %v915 = vsel %vm904, %v903, 0
    %917 = vmatprep.subr.bf16.mxu0 %v869
    %918 = vmatpush1.bf16.msra.mxu0 %v868
    %919 = vmatprep.subr.bf16.mxu0 %v871
    %920 = vmatpush1.bf16.msra.mxu0 %v870
    %921 = vmatprep.subr.bf16.mxu0 %v873
    %922 = vmatpush1.bf16.msra.mxu0 %v872
    %923 = vmatprep.subr.bf16.mxu0 %v875
    %924 = vmatpush1.bf16.msra.mxu0 %v874
    %925 = vmatprep.subr.bf16.mxu0 0
    %926 = vmatpush1.bf16.msra.mxu0 0
    %927 = vmatprep.subr.bf16.mxu0 0
    %928 = vmatpush1.bf16.msra.mxu0 0
    %929 = vmatprep.subr.bf16.mxu0 0
    %930 = vmatpush1.bf16.msra.mxu0 0
    %931 = vmatprep.subr.bf16.mxu0 0
    %932 = vmatpush1.bf16.msra.mxu0 0
    %933 = vmatprep.subr.bf16.mxu0 0
    %934 = vmatpush1.bf16.msra.mxu0 0
    %935 = vmatprep.subr.bf16.mxu0 0
    %936 = vmatpush1.bf16.msra.mxu0 0
    %937 = vmatprep.subr.bf16.mxu0 0
    %938 = vmatpush1.bf16.msra.mxu0 0
    %939 = vmatprep.subr.bf16.mxu0 0
    %940 = vmatpush1.bf16.msra.mxu0 0
    %941 = vmatprep.subr.bf16.mxu0 0
    %942 = vmatpush1.bf16.msra.mxu0 0
    %943 = vmatprep.subr.bf16.mxu0 0
    %944 = vmatpush1.bf16.msra.mxu0 0
    %945 = vmatprep.subr.bf16.mxu0 0
    %946 = vmatpush1.bf16.msra.mxu0 0
    %947 = vmatprep.subr.bf16.mxu0 0
    %948 = vmatpush1.bf16.msra.mxu0 0
    %949 = vmatprep.mubr.bf16.mxu0 0
    %950 = vmatmul.mubr.bf16.gmra.mrb[0].mxu0 %v906
    %v951 = vpop.f32.mrb[0].mxu0
    %v952 = vadd.f32 0.0, %v951
    %v953 = vpop.f32.mrb[0].mxu0
    %v954 = vadd.f32 0.0, %v953
    %v955 = vpop.f32.mrb[0].mxu0
    %v956 = vadd.f32 0.0, %v955
    %v957 = vpop.f32.mrb[0].mxu0
    %v958 = vadd.f32 0.0, %v957
    %959 = vmatprep.mubr.bf16.mxu0 0
    %960 = vmatmul.mubr.bf16.gmra.mrb[0].mxu0 %v909
    %v961 = vpop.f32.mrb[0].mxu0
    %v962 = vadd.f32 0.0, %v961
    %v963 = vpop.f32.mrb[0].mxu0
    %v964 = vadd.f32 0.0, %v963
    %v965 = vpop.f32.mrb[0].mxu0
    %v966 = vadd.f32 0.0, %v965
    %v967 = vpop.f32.mrb[0].mxu0
    %v968 = vadd.f32 0.0, %v967
    %969 = vmatprep.mubr.bf16.mxu0 0
    %970 = vmatmul.mubr.bf16.gmra.mrb[0].mxu0 %v912
    %v971 = vpop.f32.mrb[0].mxu0
    %v972 = vadd.f32 0.0, %v971
    %v973 = vpop.f32.mrb[0].mxu0
    %v974 = vadd.f32 0.0, %v973
    %v975 = vpop.f32.mrb[0].mxu0
    %v976 = vadd.f32 0.0, %v975
    %v977 = vpop.f32.mrb[0].mxu0
    %v978 = vadd.f32 0.0, %v977
    %979 = vmatprep.mubr.bf16.mxu0 0
    %980 = vmatmul.mubr.bf16.gmra.mrb[0].mxu0 %v915
    %v981 = vpop.f32.mrb[0].mxu0
    %v982 = vadd.f32 0.0, %v981
    %v983 = vpop.f32.mrb[0].mxu0
    %v984 = vadd.f32 0.0, %v983
    %v985 = vpop.f32.mrb[0].mxu0
    %v986 = vadd.f32 0.0, %v985
    %v987 = vpop.f32.mrb[0].mxu0
    %v988 = vadd.f32 0.0, %v987
    %989 = vdwg.mxu0
    %990 = vmatprep.subr.bf16.mxu0 %v877
    %991 = vmatpush1.bf16.msra.mxu0 %v876
    %992 = vmatprep.subr.bf16.mxu0 %v879
    %993 = vmatpush1.bf16.msra.mxu0 %v878
    %994 = vmatprep.subr.bf16.mxu0 %v881
    %995 = vmatpush1.bf16.msra.mxu0 %v880
    %996 = vmatprep.subr.bf16.mxu0 %v883
    %997 = vmatpush1.bf16.msra.mxu0 %v882
    %998 = vmatprep.subr.bf16.mxu0 0
    %999 = vmatpush1.bf16.msra.mxu0 0
    %1000 = vmatprep.subr.bf16.mxu0 0
    %1001 = vmatpush1.bf16.msra.mxu0 0
    %1002 = vmatprep.subr.bf16.mxu0 0
    %1003 = vmatpush1.bf16.msra.mxu0 0
    %1004 = vmatprep.subr.bf16.mxu0 0
    %1005 = vmatpush1.bf16.msra.mxu0 0
    %1006 = vmatprep.subr.bf16.mxu0 0
    %1007 = vmatpush1.bf16.msra.mxu0 0
    %1008 = vmatprep.subr.bf16.mxu0 0
    %1009 = vmatpush1.bf16.msra.mxu0 0
    %1010 = vmatprep.subr.bf16.mxu0 0
    %1011 = vmatpush1.bf16.msra.mxu0 0
    %1012 = vmatprep.subr.bf16.mxu0 0
    %1013 = vmatpush1.bf16.msra.mxu0 0
    %1014 = vmatprep.subr.bf16.mxu0 0
    %1015 = vmatpush1.bf16.msra.mxu0 0
    %1016 = vmatprep.subr.bf16.mxu0 0
    %1017 = vmatpush1.bf16.msra.mxu0 0
    %1018 = vmatprep.subr.bf16.mxu0 0
    %1019 = vmatpush1.bf16.msra.mxu0 0
    %1020 = vmatprep.subr.bf16.mxu0 0
    %1021 = vmatpush1.bf16.msra.mxu0 0
    %1022 = vmatprep.mubr.bf16.mxu0 0
    %1023 = vmatmul.mubr.bf16.gmra.mrb[0].mxu0 %v906
    %v1024 = vpop.f32.mrb[0].mxu0
    %v1025 = vadd.f32 0.0, %v1024
    %v1026 = vpop.f32.mrb[0].mxu0
    %v1027 = vadd.f32 0.0, %v1026
    %v1028 = vpop.f32.mrb[0].mxu0
    %v1029 = vadd.f32 0.0, %v1028
    %v1030 = vpop.f32.mrb[0].mxu0
    %v1031 = vadd.f32 0.0, %v1030
    %1032 = vmatprep.mubr.bf16.mxu0 0
    %1033 = vmatmul.mubr.bf16.gmra.mrb[0].mxu0 %v909
    %v1034 = vpop.f32.mrb[0].mxu0
    %v1035 = vadd.f32 0.0, %v1034
    %v1036 = vpop.f32.mrb[0].mxu0
    %v1037 = vadd.f32 0.0, %v1036
    %v1038 = vpop.f32.mrb[0].mxu0
    %v1039 = vadd.f32 0.0, %v1038
    %v1040 = vpop.f32.mrb[0].mxu0
    %v1041 = vadd.f32 0.0, %v1040
    %1042 = vmatprep.mubr.bf16.mxu0 0
    %1043 = vmatmul.mubr.bf16.gmra.mrb[0].mxu0 %v912
    %v1044 = vpop.f32.mrb[0].mxu0
    %v1045 = vadd.f32 0.0, %v1044
    %v1046 = vpop.f32.mrb[0].mxu0
    %v1047 = vadd.f32 0.0, %v1046
    %v1048 = vpop.f32.mrb[0].mxu0
    %v1049 = vadd.f32 0.0, %v1048
    %v1050 = vpop.f32.mrb[0].mxu0
    %v1051 = vadd.f32 0.0, %v1050
    %1052 = vmatprep.mubr.bf16.mxu0 0
    %1053 = vmatmul.mubr.bf16.gmra.mrb[0].mxu0 %v915
    %v1054 = vpop.f32.mrb[0].mxu0
    %v1055 = vadd.f32 0.0, %v1054
    %v1056 = vpop.f32.mrb[0].mxu0
    %v1057 = vadd.f32 0.0, %v1056
    %v1058 = vpop.f32.mrb[0].mxu0
    %v1059 = vadd.f32 0.0, %v1058
    %v1060 = vpop.f32.mrb[0].mxu0
    %v1061 = vadd.f32 0.0, %v1060
    %1062 = vdwg.mxu0
    %v1063 = vadd.f32 %v836, %v952
    %v1064 = vadd.f32 %v837, %v954
    %v1065 = vadd.f32 %v838, %v956
    %v1066 = vadd.f32 %v839, %v958
    %v1067 = vadd.f32 %v840, %v962
    %v1068 = vadd.f32 %v841, %v964
    %v1069 = vadd.f32 %v842, %v966
    %v1070 = vadd.f32 %v843, %v968
    %v1071 = vadd.f32 %v844, %v972
    %v1072 = vadd.f32 %v845, %v974
    %v1073 = vadd.f32 %v846, %v976
    %v1074 = vadd.f32 %v847, %v978
    %v1075 = vadd.f32 %v848, %v982
    %v1076 = vadd.f32 %v849, %v984
    %v1077 = vadd.f32 %v850, %v986
    %v1078 = vadd.f32 %v851, %v988
    %v1079 = vadd.f32 %v852, %v1025
    %v1080 = vadd.f32 %v853, %v1027
    %v1081 = vadd.f32 %v854, %v1029
    %v1082 = vadd.f32 %v855, %v1031
    %v1083 = vadd.f32 %v856, %v1035
    %v1084 = vadd.f32 %v857, %v1037
    %v1085 = vadd.f32 %v858, %v1039
    %v1086 = vadd.f32 %v859, %v1041
    %v1087 = vadd.f32 %v860, %v1045
    %v1088 = vadd.f32 %v861, %v1047
    %v1089 = vadd.f32 %v862, %v1049
    %v1090 = vadd.f32 %v863, %v1051
    %v1091 = vadd.f32 %v864, %v1055
    %v1092 = vadd.f32 %v865, %v1057
    %v1093 = vadd.f32 %v866, %v1059
    %v1094 = vadd.f32 %v867, %v1061
    %v1095 = vpack.c.bf16 %v649, %v645
    %v1096 = vpack.c.bf16 %v651, %v647
    %v1097 = vpack.c.bf16 %v659, %v655
    %v1098 = vpack.c.bf16 %v661, %v657
    %v1099 = vpack.c.bf16 %v669, %v665
    %v1100 = vpack.c.bf16 %v671, %v667
    %v1101 = vpack.c.bf16 %v679, %v675
    %v1102 = vpack.c.bf16 %v681, %v677
    %v1103 = vpack.c.bf16 %v689, %v685
    %v1104 = vpack.c.bf16 %v691, %v687
    %v1105 = vpack.c.bf16 %v699, %v695
    %v1106 = vpack.c.bf16 %v701, %v697
    %v1107 = vpack.c.bf16 %v709, %v705
    %v1108 = vpack.c.bf16 %v711, %v707
    %v1109 = vpack.c.bf16 %v719, %v715
    %v1110 = vpack.c.bf16 %v721, %v717
    %v1119 = vunpack.c.l.b16 %v121
    %v1120 = vunpack.c.l.b16 %v122
    %v1121 = vunpack.c.l.b16 %v123
    %v1122 = vunpack.c.l.b16 %v124
    %v1123 = vunpack.c.l.b16 %v125
    %v1124 = vunpack.c.l.b16 %v126
    %v1125 = vunpack.c.l.b16 %v127
    %v1126 = vunpack.c.l.b16 %v128
    %v1127 = vpack.c.b16 %v1120, %v1119
    %v1128 = vpack.c.b16 %v1122, %v1121
    %v1129 = vpack.c.b16 %v1124, %v1123
    %v1130 = vpack.c.b16 %v1126, %v1125
    %v1132 = vsel %vm904, %v1127, 0
    %v1135 = vsel %vm904, %v1128, 0
    %v1138 = vsel %vm904, %v1129, 0
    %v1141 = vsel %vm904, %v1130, 0
    %1143 = vmatprep.subr.bf16.mxu0 %v1096
    %1144 = vmatpush1.bf16.msra.mxu0 %v1095
    %1145 = vmatprep.subr.bf16.mxu0 %v1098
    %1146 = vmatpush1.bf16.msra.mxu0 %v1097
    %1147 = vmatprep.subr.bf16.mxu0 %v1100
    %1148 = vmatpush1.bf16.msra.mxu0 %v1099
    %1149 = vmatprep.subr.bf16.mxu0 %v1102
    %1150 = vmatpush1.bf16.msra.mxu0 %v1101
    %1151 = vmatprep.subr.bf16.mxu0 0
    %1152 = vmatpush1.bf16.msra.mxu0 0
    %1153 = vmatprep.subr.bf16.mxu0 0
    %1154 = vmatpush1.bf16.msra.mxu0 0
    %1155 = vmatprep.subr.bf16.mxu0 0
    %1156 = vmatpush1.bf16.msra.mxu0 0
    %1157 = vmatprep.subr.bf16.mxu0 0
    %1158 = vmatpush1.bf16.msra.mxu0 0
    %1159 = vmatprep.subr.bf16.mxu0 0
    %1160 = vmatpush1.bf16.msra.mxu0 0
    %1161 = vmatprep.subr.bf16.mxu0 0
    %1162 = vmatpush1.bf16.msra.mxu0 0
    %1163 = vmatprep.subr.bf16.mxu0 0
    %1164 = vmatpush1.bf16.msra.mxu0 0
    %1165 = vmatprep.subr.bf16.mxu0 0
    %1166 = vmatpush1.bf16.msra.mxu0 0
    %1167 = vmatprep.subr.bf16.mxu0 0
    %1168 = vmatpush1.bf16.msra.mxu0 0
    %1169 = vmatprep.subr.bf16.mxu0 0
    %1170 = vmatpush1.bf16.msra.mxu0 0
    %1171 = vmatprep.subr.bf16.mxu0 0
    %1172 = vmatpush1.bf16.msra.mxu0 0
    %1173 = vmatprep.subr.bf16.mxu0 0
    %1174 = vmatpush1.bf16.msra.mxu0 0
    %1175 = vmatprep.mubr.bf16.mxu0 0
    %1176 = vmatmul.mubr.bf16.gmra.mrb[0].mxu0 %v1132
    %v1177 = vpop.f32.mrb[0].mxu0
    %v1178 = vadd.f32 0.0, %v1177
    %v1179 = vpop.f32.mrb[0].mxu0
    %v1180 = vadd.f32 0.0, %v1179
    %v1181 = vpop.f32.mrb[0].mxu0
    %v1182 = vadd.f32 0.0, %v1181
    %v1183 = vpop.f32.mrb[0].mxu0
    %v1184 = vadd.f32 0.0, %v1183
    %1185 = vmatprep.mubr.bf16.mxu0 0
    %1186 = vmatmul.mubr.bf16.gmra.mrb[0].mxu0 %v1135
    %v1187 = vpop.f32.mrb[0].mxu0
    %v1188 = vadd.f32 0.0, %v1187
    %v1189 = vpop.f32.mrb[0].mxu0
    %v1190 = vadd.f32 0.0, %v1189
    %v1191 = vpop.f32.mrb[0].mxu0
    %v1192 = vadd.f32 0.0, %v1191
    %v1193 = vpop.f32.mrb[0].mxu0
    %v1194 = vadd.f32 0.0, %v1193
    %1195 = vmatprep.mubr.bf16.mxu0 0
    %1196 = vmatmul.mubr.bf16.gmra.mrb[0].mxu0 %v1138
    %v1197 = vpop.f32.mrb[0].mxu0
    %v1198 = vadd.f32 0.0, %v1197
    %v1199 = vpop.f32.mrb[0].mxu0
    %v1200 = vadd.f32 0.0, %v1199
    %v1201 = vpop.f32.mrb[0].mxu0
    %v1202 = vadd.f32 0.0, %v1201
    %v1203 = vpop.f32.mrb[0].mxu0
    %v1204 = vadd.f32 0.0, %v1203
    %1205 = vmatprep.mubr.bf16.mxu0 0
    %1206 = vmatmul.mubr.bf16.gmra.mrb[0].mxu0 %v1141
    %v1207 = vpop.f32.mrb[0].mxu0
    %v1208 = vadd.f32 0.0, %v1207
    %v1209 = vpop.f32.mrb[0].mxu0
    %v1210 = vadd.f32 0.0, %v1209
    %v1211 = vpop.f32.mrb[0].mxu0
    %v1212 = vadd.f32 0.0, %v1211
    %v1213 = vpop.f32.mrb[0].mxu0
    %v1214 = vadd.f32 0.0, %v1213
    %1215 = vdwg.mxu0
    %1216 = vmatprep.subr.bf16.mxu0 %v1104
    %1217 = vmatpush1.bf16.msra.mxu0 %v1103
    %1218 = vmatprep.subr.bf16.mxu0 %v1106
    %1219 = vmatpush1.bf16.msra.mxu0 %v1105
    %1220 = vmatprep.subr.bf16.mxu0 %v1108
    %1221 = vmatpush1.bf16.msra.mxu0 %v1107
    %1222 = vmatprep.subr.bf16.mxu0 %v1110
    %1223 = vmatpush1.bf16.msra.mxu0 %v1109
    %1224 = vmatprep.subr.bf16.mxu0 0
    %1225 = vmatpush1.bf16.msra.mxu0 0
    %1226 = vmatprep.subr.bf16.mxu0 0
    %1227 = vmatpush1.bf16.msra.mxu0 0
    %1228 = vmatprep.subr.bf16.mxu0 0
    %1229 = vmatpush1.bf16.msra.mxu0 0
    %1230 = vmatprep.subr.bf16.mxu0 0
    %1231 = vmatpush1.bf16.msra.mxu0 0
    %1232 = vmatprep.subr.bf16.mxu0 0
    %1233 = vmatpush1.bf16.msra.mxu0 0
    %1234 = vmatprep.subr.bf16.mxu0 0
    %1235 = vmatpush1.bf16.msra.mxu0 0
    %1236 = vmatprep.subr.bf16.mxu0 0
    %1237 = vmatpush1.bf16.msra.mxu0 0
    %1238 = vmatprep.subr.bf16.mxu0 0
    %1239 = vmatpush1.bf16.msra.mxu0 0
    %1240 = vmatprep.subr.bf16.mxu0 0
    %1241 = vmatpush1.bf16.msra.mxu0 0
    %1242 = vmatprep.subr.bf16.mxu0 0
    %1243 = vmatpush1.bf16.msra.mxu0 0
    %1244 = vmatprep.subr.bf16.mxu0 0
    %1245 = vmatpush1.bf16.msra.mxu0 0
    %1246 = vmatprep.subr.bf16.mxu0 0
    %1247 = vmatpush1.bf16.msra.mxu0 0
    %1248 = vmatprep.mubr.bf16.mxu0 0
    %1249 = vmatmul.mubr.bf16.gmra.mrb[0].mxu0 %v1132
    %v1250 = vpop.f32.mrb[0].mxu0
    %v1251 = vadd.f32 0.0, %v1250
    %v1252 = vpop.f32.mrb[0].mxu0
    %v1253 = vadd.f32 0.0, %v1252
    %v1254 = vpop.f32.mrb[0].mxu0
    %v1255 = vadd.f32 0.0, %v1254
    %v1256 = vpop.f32.mrb[0].mxu0
    %v1257 = vadd.f32 0.0, %v1256
    %1258 = vmatprep.mubr.bf16.mxu0 0
    %1259 = vmatmul.mubr.bf16.gmra.mrb[0].mxu0 %v1135
    %v1260 = vpop.f32.mrb[0].mxu0
    %v1261 = vadd.f32 0.0, %v1260
    %v1262 = vpop.f32.mrb[0].mxu0
    %v1263 = vadd.f32 0.0, %v1262
    %v1264 = vpop.f32.mrb[0].mxu0
    %v1265 = vadd.f32 0.0, %v1264
    %v1266 = vpop.f32.mrb[0].mxu0
    %v1267 = vadd.f32 0.0, %v1266
    %1268 = vmatprep.mubr.bf16.mxu0 0
    %1269 = vmatmul.mubr.bf16.gmra.mrb[0].mxu0 %v1138
    %v1270 = vpop.f32.mrb[0].mxu0
    %v1271 = vadd.f32 0.0, %v1270
    %v1272 = vpop.f32.mrb[0].mxu0
    %v1273 = vadd.f32 0.0, %v1272
    %v1274 = vpop.f32.mrb[0].mxu0
    %v1275 = vadd.f32 0.0, %v1274
    %v1276 = vpop.f32.mrb[0].mxu0
    %v1277 = vadd.f32 0.0, %v1276
    %1278 = vmatprep.mubr.bf16.mxu0 0
    %1279 = vmatmul.mubr.bf16.gmra.mrb[0].mxu0 %v1141
    %v1280 = vpop.f32.mrb[0].mxu0
    %v1281 = vadd.f32 0.0, %v1280
    %v1282 = vpop.f32.mrb[0].mxu0
    %v1283 = vadd.f32 0.0, %v1282
    %v1284 = vpop.f32.mrb[0].mxu0
    %v1285 = vadd.f32 0.0, %v1284
    %v1286 = vpop.f32.mrb[0].mxu0
    %v1287 = vadd.f32 0.0, %v1286
    %1288 = vdwg.mxu0
    %v1289 = vadd.f32 %v1063, %v1178
    %v1290 = vadd.f32 %v1064, %v1180
    %v1291 = vadd.f32 %v1065, %v1182
    %v1292 = vadd.f32 %v1066, %v1184
    %v1293 = vadd.f32 %v1067, %v1188
    %v1294 = vadd.f32 %v1068, %v1190
    %v1295 = vadd.f32 %v1069, %v1192
    %v1296 = vadd.f32 %v1070, %v1194
    %v1297 = vadd.f32 %v1071, %v1198
    %v1298 = vadd.f32 %v1072, %v1200
    %v1299 = vadd.f32 %v1073, %v1202
    %v1300 = vadd.f32 %v1074, %v1204
    %v1301 = vadd.f32 %v1075, %v1208
    %v1302 = vadd.f32 %v1076, %v1210
    %v1303 = vadd.f32 %v1077, %v1212
    %v1304 = vadd.f32 %v1078, %v1214
    %v1305 = vadd.f32 %v1079, %v1251
    %v1306 = vadd.f32 %v1080, %v1253
    %v1307 = vadd.f32 %v1081, %v1255
    %v1308 = vadd.f32 %v1082, %v1257
    %v1309 = vadd.f32 %v1083, %v1261
    %v1310 = vadd.f32 %v1084, %v1263
    %v1311 = vadd.f32 %v1085, %v1265
    %v1312 = vadd.f32 %v1086, %v1267
    %v1313 = vadd.f32 %v1087, %v1271
    %v1314 = vadd.f32 %v1088, %v1273
    %v1315 = vadd.f32 %v1089, %v1275
    %v1316 = vadd.f32 %v1090, %v1277
    %v1317 = vadd.f32 %v1091, %v1281
    %v1318 = vadd.f32 %v1092, %v1283
    %v1319 = vadd.f32 %v1093, %v1285
    %v1320 = vadd.f32 %v1094, %v1287
    %v1321 = vld [vmem:[%s6] sm:$0x3]
    %v1323 = vlaneseq
    %v1324 = vshrl.u32 %v1323, 7
    %v1325 = vsub.s32 0, %v1324
    %v1326 = vrot.slane %v1321, %v1325
    %v1327 = vlaneseq
    %v1328 = vshrl.u32 %v1327, 7
    %v1329 = vsub.s32 1, %v1328
    %v1330 = vrot.slane %v1321, %v1329
    %v1333 = vadd.f32 %v1289, %v1326
    %v1334 = vadd.f32 %v1290, %v1330
    %v1335 = vadd.f32 %v1291, %v1326
    %v1336 = vadd.f32 %v1292, %v1330
    %v1337 = vadd.f32 %v1293, %v1326
    %v1338 = vadd.f32 %v1294, %v1330
    %v1339 = vadd.f32 %v1295, %v1326
    %v1340 = vadd.f32 %v1296, %v1330
    %v1341 = vadd.f32 %v1297, %v1326
    %v1342 = vadd.f32 %v1298, %v1330
    %v1343 = vadd.f32 %v1299, %v1326
    %v1344 = vadd.f32 %v1300, %v1330
    %v1345 = vadd.f32 %v1301, %v1326
    %v1346 = vadd.f32 %v1302, %v1330
    %v1347 = vadd.f32 %v1303, %v1326
    %v1348 = vadd.f32 %v1304, %v1330
    %v1349 = vadd.f32 %v1305, %v1326
    %v1350 = vadd.f32 %v1306, %v1330
    %v1351 = vadd.f32 %v1307, %v1326
    %v1352 = vadd.f32 %v1308, %v1330
    %v1353 = vadd.f32 %v1309, %v1326
    %v1354 = vadd.f32 %v1310, %v1330
    %v1355 = vadd.f32 %v1311, %v1326
    %v1356 = vadd.f32 %v1312, %v1330
    %v1357 = vadd.f32 %v1313, %v1326
    %v1358 = vadd.f32 %v1314, %v1330
    %v1359 = vadd.f32 %v1315, %v1326
    %v1360 = vadd.f32 %v1316, %v1330
    %v1361 = vadd.f32 %v1317, %v1326
    %v1362 = vadd.f32 %v1318, %v1330
    %v1363 = vadd.f32 %v1319, %v1326
    %v1364 = vadd.f32 %v1320, %v1330
    %v1365 = vxor.u32 %v1333, 2147483648
    %v1366 = vxor.u32 %v1335, 2147483648
    %v1367 = vxor.u32 %v1337, 2147483648
    %v1368 = vxor.u32 %v1339, 2147483648
    %v1369 = vxor.u32 %v1341, 2147483648
    %v1370 = vxor.u32 %v1343, 2147483648
    %v1371 = vxor.u32 %v1345, 2147483648
    %v1372 = vxor.u32 %v1347, 2147483648
    %v1373 = vxor.u32 %v1349, 2147483648
    %v1374 = vxor.u32 %v1351, 2147483648
    %v1375 = vxor.u32 %v1353, 2147483648
    %v1376 = vxor.u32 %v1355, 2147483648
    %v1377 = vxor.u32 %v1357, 2147483648
    %v1378 = vxor.u32 %v1359, 2147483648
    %v1379 = vxor.u32 %v1361, 2147483648
    %v1380 = vxor.u32 %v1363, 2147483648
    %v1381 = vmul.f32 %v1365, 1.442695
    %v1382 = vpow.pop %v1381
    %v1383 = vmul.f32 %v1366, 1.442695
    %v1384 = vpow.pop %v1383
    %v1385 = vmul.f32 %v1367, 1.442695
    %v1386 = vpow.pop %v1385
    %v1387 = vmul.f32 %v1368, 1.442695
    %v1388 = vpow.pop %v1387
    %v1389 = vmul.f32 %v1369, 1.442695
    %v1390 = vpow.pop %v1389
    %v1391 = vmul.f32 %v1370, 1.442695
    %v1392 = vpow.pop %v1391
    %v1393 = vmul.f32 %v1371, 1.442695
    %v1394 = vpow.pop %v1393
    %v1395 = vmul.f32 %v1372, 1.442695
    %v1396 = vpow.pop %v1395
    %v1397 = vmul.f32 %v1373, 1.442695
    %v1398 = vpow.pop %v1397
    %v1399 = vmul.f32 %v1374, 1.442695
    %v1400 = vpow.pop %v1399
    %v1401 = vmul.f32 %v1375, 1.442695
    %v1402 = vpow.pop %v1401
    %v1403 = vmul.f32 %v1376, 1.442695
    %v1404 = vpow.pop %v1403
    %v1405 = vmul.f32 %v1377, 1.442695
    %v1406 = vpow.pop %v1405
    %v1407 = vmul.f32 %v1378, 1.442695
    %v1408 = vpow.pop %v1407
    %v1409 = vmul.f32 %v1379, 1.442695
    %v1410 = vpow.pop %v1409
    %v1411 = vmul.f32 %v1380, 1.442695
    %v1412 = vpow.pop %v1411
    %v1413 = vadd.f32 %v1382, 1.0
    %v1414 = vadd.f32 %v1384, 1.0
    %v1415 = vadd.f32 %v1386, 1.0
    %v1416 = vadd.f32 %v1388, 1.0
    %v1417 = vadd.f32 %v1390, 1.0
    %v1418 = vadd.f32 %v1392, 1.0
    %v1419 = vadd.f32 %v1394, 1.0
    %v1420 = vadd.f32 %v1396, 1.0
    %v1421 = vadd.f32 %v1398, 1.0
    %v1422 = vadd.f32 %v1400, 1.0
    %v1423 = vadd.f32 %v1402, 1.0
    %v1424 = vadd.f32 %v1404, 1.0
    %v1425 = vadd.f32 %v1406, 1.0
    %v1426 = vadd.f32 %v1408, 1.0
    %v1427 = vadd.f32 %v1410, 1.0
    %v1428 = vadd.f32 %v1412, 1.0
    %v1429 = vrcp.pop %v1413
    %v1430 = vmul.f32 1.0, %v1429
    %v1431 = vrcp.pop %v1414
    %v1432 = vmul.f32 1.0, %v1431
    %v1433 = vrcp.pop %v1415
    %v1434 = vmul.f32 1.0, %v1433
    %v1435 = vrcp.pop %v1416
    %v1436 = vmul.f32 1.0, %v1435
    %v1437 = vrcp.pop %v1417
    %v1438 = vmul.f32 1.0, %v1437
    %v1439 = vrcp.pop %v1418
    %v1440 = vmul.f32 1.0, %v1439
    %v1441 = vrcp.pop %v1419
    %v1442 = vmul.f32 1.0, %v1441
    %v1443 = vrcp.pop %v1420
    %v1444 = vmul.f32 1.0, %v1443
    %v1445 = vrcp.pop %v1421
    %v1446 = vmul.f32 1.0, %v1445
    %v1447 = vrcp.pop %v1422
    %v1448 = vmul.f32 1.0, %v1447
    %v1449 = vrcp.pop %v1423
    %v1450 = vmul.f32 1.0, %v1449
    %v1451 = vrcp.pop %v1424
    %v1452 = vmul.f32 1.0, %v1451
    %v1453 = vrcp.pop %v1425
    %v1454 = vmul.f32 1.0, %v1453
    %v1455 = vrcp.pop %v1426
    %v1456 = vmul.f32 1.0, %v1455
    %v1457 = vrcp.pop %v1427
    %v1458 = vmul.f32 1.0, %v1457
    %v1459 = vrcp.pop %v1428
    %v1460 = vmul.f32 1.0, %v1459
    %v1461 = vxor.u32 %v1334, 2147483648
    %v1462 = vxor.u32 %v1336, 2147483648
    %v1463 = vxor.u32 %v1338, 2147483648
    %v1464 = vxor.u32 %v1340, 2147483648
    %v1465 = vxor.u32 %v1342, 2147483648
    %v1466 = vxor.u32 %v1344, 2147483648
    %v1467 = vxor.u32 %v1346, 2147483648
    %v1468 = vxor.u32 %v1348, 2147483648
    %v1469 = vxor.u32 %v1350, 2147483648
    %v1470 = vxor.u32 %v1352, 2147483648
    %v1471 = vxor.u32 %v1354, 2147483648
    %v1472 = vxor.u32 %v1356, 2147483648
    %v1473 = vxor.u32 %v1358, 2147483648
    %v1474 = vxor.u32 %v1360, 2147483648
    %v1475 = vxor.u32 %v1362, 2147483648
    %v1476 = vxor.u32 %v1364, 2147483648
    %v1477 = vmul.f32 %v1461, 1.442695
    %v1478 = vpow.pop %v1477
    %v1479 = vmul.f32 %v1462, 1.442695
    %v1480 = vpow.pop %v1479
    %v1481 = vmul.f32 %v1463, 1.442695
    %v1482 = vpow.pop %v1481
    %v1483 = vmul.f32 %v1464, 1.442695
    %v1484 = vpow.pop %v1483
    %v1485 = vmul.f32 %v1465, 1.442695
    %v1486 = vpow.pop %v1485
    %v1487 = vmul.f32 %v1466, 1.442695
    %v1488 = vpow.pop %v1487
    %v1489 = vmul.f32 %v1467, 1.442695
    %v1490 = vpow.pop %v1489
    %v1491 = vmul.f32 %v1468, 1.442695
    %v1492 = vpow.pop %v1491
    %v1493 = vmul.f32 %v1469, 1.442695
    %v1494 = vpow.pop %v1493
    %v1495 = vmul.f32 %v1470, 1.442695
    %v1496 = vpow.pop %v1495
    %v1497 = vmul.f32 %v1471, 1.442695
    %v1498 = vpow.pop %v1497
    %v1499 = vmul.f32 %v1472, 1.442695
    %v1500 = vpow.pop %v1499
    %v1501 = vmul.f32 %v1473, 1.442695
    %v1502 = vpow.pop %v1501
    %v1503 = vmul.f32 %v1474, 1.442695
    %v1504 = vpow.pop %v1503
    %v1505 = vmul.f32 %v1475, 1.442695
    %v1506 = vpow.pop %v1505
    %v1507 = vmul.f32 %v1476, 1.442695
    %v1508 = vpow.pop %v1507
    %v1509 = vadd.f32 %v1478, 1.0
    %v1510 = vadd.f32 %v1480, 1.0
    %v1511 = vadd.f32 %v1482, 1.0
    %v1512 = vadd.f32 %v1484, 1.0
    %v1513 = vadd.f32 %v1486, 1.0
    %v1514 = vadd.f32 %v1488, 1.0
    %v1515 = vadd.f32 %v1490, 1.0
    %v1516 = vadd.f32 %v1492, 1.0
    %v1517 = vadd.f32 %v1494, 1.0
    %v1518 = vadd.f32 %v1496, 1.0
    %v1519 = vadd.f32 %v1498, 1.0
    %v1520 = vadd.f32 %v1500, 1.0
    %v1521 = vadd.f32 %v1502, 1.0
    %v1522 = vadd.f32 %v1504, 1.0
    %v1523 = vadd.f32 %v1506, 1.0
    %v1524 = vadd.f32 %v1508, 1.0
    %v1525 = vrcp.pop %v1509
    %v1526 = vmul.f32 1.0, %v1525
    %v1527 = vrcp.pop %v1510
    %v1528 = vmul.f32 1.0, %v1527
    %v1529 = vrcp.pop %v1511
    %v1530 = vmul.f32 1.0, %v1529
    %v1531 = vrcp.pop %v1512
    %v1532 = vmul.f32 1.0, %v1531
    %v1533 = vrcp.pop %v1513
    %v1534 = vmul.f32 1.0, %v1533
    %v1535 = vrcp.pop %v1514
    %v1536 = vmul.f32 1.0, %v1535
    %v1537 = vrcp.pop %v1515
    %v1538 = vmul.f32 1.0, %v1537
    %v1539 = vrcp.pop %v1516
    %v1540 = vmul.f32 1.0, %v1539
    %v1541 = vrcp.pop %v1517
    %v1542 = vmul.f32 1.0, %v1541
    %v1543 = vrcp.pop %v1518
    %v1544 = vmul.f32 1.0, %v1543
    %v1545 = vrcp.pop %v1519
    %v1546 = vmul.f32 1.0, %v1545
    %v1547 = vrcp.pop %v1520
    %v1548 = vmul.f32 1.0, %v1547
    %v1549 = vrcp.pop %v1521
    %v1550 = vmul.f32 1.0, %v1549
    %v1551 = vrcp.pop %v1522
    %v1552 = vmul.f32 1.0, %v1551
    %v1553 = vrcp.pop %v1523
    %v1554 = vmul.f32 1.0, %v1553
    %v1555 = vrcp.pop %v1524
    %v1556 = vmul.f32 1.0, %v1555
    %v1557 = vmul.f32 %v1526, %v145
    %v1558 = vmul.f32 %v1528, %v146
    %v1559 = vmul.f32 %v1530, %v147
    %v1560 = vmul.f32 %v1532, %v148
    %v1561 = vmul.f32 %v1534, %v149
    %v1562 = vmul.f32 %v1536, %v150
    %v1563 = vmul.f32 %v1538, %v151
    %v1564 = vmul.f32 %v1540, %v152
    %v1565 = vmul.f32 %v1542, %v153
    %v1566 = vmul.f32 %v1544, %v154
    %v1567 = vmul.f32 %v1546, %v155
    %v1568 = vmul.f32 %v1548, %v156
    %v1569 = vmul.f32 %v1550, %v157
    %v1570 = vmul.f32 %v1552, %v158
    %v1571 = vmul.f32 %v1554, %v159
    %v1572 = vmul.f32 %v1556, %v160
    %v1573 = vpack.c.bf16 %v1558, %v1557
    %v1574 = vpack.c.bf16 %v1560, %v1559
    %v1575 = vpack.c.bf16 %v1562, %v1561
    %v1576 = vpack.c.bf16 %v1564, %v1563
    %v1577 = vpack.c.bf16 %v1566, %v1565
    %v1578 = vpack.c.bf16 %v1568, %v1567
    %v1579 = vpack.c.bf16 %v1570, %v1569
    %v1580 = vpack.c.bf16 %v1572, %v1571
    %v1581 = vld [vmem:[#allocation11] sm:$0xff]
    %v1582 = vld [vmem:[#allocation11 + $0x8] sm:$0xff]
    %v1583 = vld [vmem:[#allocation11 + $0x10] sm:$0xff]
    %v1584 = vld [vmem:[#allocation11 + $0x18] sm:$0xff]
    %v1585 = vld [vmem:[#allocation11 + $0x20] sm:$0xff]
    %v1586 = vld [vmem:[#allocation11 + $0x28] sm:$0xff]
    %v1587 = vld [vmem:[#allocation11 + $0x30] sm:$0xff]
    %v1588 = vld [vmem:[#allocation11 + $0x38] sm:$0xff]
    %v1589 = vld [vmem:[#allocation11 + $0x40] sm:$0xff]
    %v1590 = vld [vmem:[#allocation11 + $0x48] sm:$0xff]
    %v1591 = vld [vmem:[#allocation11 + $0x50] sm:$0xff]
    %v1592 = vld [vmem:[#allocation11 + $0x58] sm:$0xff]
    %v1593 = vld [vmem:[#allocation11 + $0x60] sm:$0xff]
    %v1594 = vld [vmem:[#allocation11 + $0x68] sm:$0xff]
    %v1595 = vld [vmem:[#allocation11 + $0x70] sm:$0xff]
    %v1596 = vld [vmem:[#allocation11 + $0x78] sm:$0xff]
    %v1613 = vunpack.c.l.b16 %v1581
    %v1614 = vunpack.c.h.b16 %v1581
    %v1615 = vunpack.c.l.b16 %v1582
    %v1616 = vunpack.c.h.b16 %v1582
    %v1617 = vunpack.c.l.b16 %v1583
    %v1618 = vunpack.c.h.b16 %v1583
    %v1619 = vunpack.c.l.b16 %v1584
    %v1620 = vunpack.c.h.b16 %v1584
    %v1621 = vunpack.c.l.b16 %v1585
    %v1622 = vunpack.c.h.b16 %v1585
    %v1623 = vunpack.c.l.b16 %v1586
    %v1624 = vunpack.c.h.b16 %v1586
    %v1625 = vunpack.c.l.b16 %v1587
    %v1626 = vunpack.c.h.b16 %v1587
    %v1627 = vunpack.c.l.b16 %v1588
    %v1628 = vunpack.c.h.b16 %v1588
    %v1629 = vunpack.c.l.b16 %v1589
    %v1630 = vunpack.c.h.b16 %v1589
    %v1631 = vunpack.c.l.b16 %v1590
    %v1632 = vunpack.c.h.b16 %v1590
    %v1633 = vunpack.c.l.b16 %v1591
    %v1634 = vunpack.c.h.b16 %v1591
    %v1635 = vunpack.c.l.b16 %v1592
    %v1636 = vunpack.c.h.b16 %v1592
    %v1637 = vunpack.c.l.b16 %v1593
    %v1638 = vunpack.c.h.b16 %v1593
    %v1639 = vunpack.c.l.b16 %v1594
    %v1640 = vunpack.c.h.b16 %v1594
    %v1641 = vunpack.c.l.b16 %v1595
    %v1642 = vunpack.c.h.b16 %v1595
    %v1643 = vunpack.c.l.b16 %v1596
    %v1644 = vunpack.c.h.b16 %v1596
    %v1645 = vpack.c.b16 %v1615, %v1613
    %v1646 = vpack.c.b16 %v1616, %v1614
    %v1647 = vpack.c.b16 %v1619, %v1617
    %v1648 = vpack.c.b16 %v1620, %v1618
    %v1649 = vpack.c.b16 %v1623, %v1621
    %v1650 = vpack.c.b16 %v1624, %v1622
    %v1651 = vpack.c.b16 %v1627, %v1625
    %v1652 = vpack.c.b16 %v1628, %v1626
    %v1653 = vpack.c.b16 %v1631, %v1629
    %v1654 = vpack.c.b16 %v1632, %v1630
    %v1655 = vpack.c.b16 %v1635, %v1633
    %v1656 = vpack.c.b16 %v1636, %v1634
    %v1657 = vpack.c.b16 %v1639, %v1637
    %v1658 = vpack.c.b16 %v1640, %v1638
    %v1659 = vpack.c.b16 %v1643, %v1641
    %v1660 = vpack.c.b16 %v1644, %v1642
    %1677 = vmatprep.subr.bf16.mxu0 %v1646
    %1678 = vmatpush1.bf16.msra.mxu0 %v1645
    %1679 = vmatprep.subr.bf16.mxu0 %v1648
    %1680 = vmatpush1.bf16.msra.mxu0 %v1647
    %1681 = vmatprep.subr.bf16.mxu0 %v1650
    %1682 = vmatpush1.bf16.msra.mxu0 %v1649
    %1683 = vmatprep.subr.bf16.mxu0 %v1652
    %1684 = vmatpush1.bf16.msra.mxu0 %v1651
    %1685 = vmatprep.subr.bf16.mxu0 %v1654
    %1686 = vmatpush1.bf16.msra.mxu0 %v1653
    %1687 = vmatprep.subr.bf16.mxu0 %v1656
    %1688 = vmatpush1.bf16.msra.mxu0 %v1655
    %1689 = vmatprep.subr.bf16.mxu0 %v1658
    %1690 = vmatpush1.bf16.msra.mxu0 %v1657
    %1691 = vmatprep.subr.bf16.mxu0 %v1660
    %1692 = vmatpush1.bf16.msra.mxu0 %v1659
    %1693 = vmatprep.subr.bf16.mxu0 0
    %1694 = vmatpush1.bf16.msra.mxu0 0
    %1695 = vmatprep.subr.bf16.mxu0 0
    %1696 = vmatpush1.bf16.msra.mxu0 0
    %1697 = vmatprep.subr.bf16.mxu0 0
    %1698 = vmatpush1.bf16.msra.mxu0 0
    %1699 = vmatprep.subr.bf16.mxu0 0
    %1700 = vmatpush1.bf16.msra.mxu0 0
    %1701 = vmatprep.subr.bf16.mxu0 0
    %1702 = vmatpush1.bf16.msra.mxu0 0
    %1703 = vmatprep.subr.bf16.mxu0 0
    %1704 = vmatpush1.bf16.msra.mxu0 0
    %1705 = vmatprep.subr.bf16.mxu0 0
    %1706 = vmatpush1.bf16.msra.mxu0 0
    %1707 = vmatprep.subr.bf16.mxu0 0
    %1708 = vmatpush1.bf16.msra.mxu0 0
    %1709 = vmatprep.mubr.bf16.mxu0 0
    %1710 = vmatmul.mubr.bf16.gmra.mrb[0].mxu0 %v1573
    %v1711 = vpop.f32.mrb[0].mxu0
    %v1712 = vadd.f32 0.0, %v1711
    %v1713 = vpop.f32.mrb[0].mxu0
    %v1714 = vadd.f32 0.0, %v1713
    %v1715 = vpop.f32.mrb[0].mxu0
    %v1716 = vadd.f32 0.0, %v1715
    %v1717 = vpop.f32.mrb[0].mxu0
    %v1718 = vadd.f32 0.0, %v1717
    %1719 = vmatprep.mubr.bf16.mxu0 0
    %1720 = vmatmul.mubr.bf16.gmra.mrb[0].mxu0 %v1574
    %v1721 = vpop.f32.mrb[0].mxu0
    %v1722 = vadd.f32 0.0, %v1721
    %v1723 = vpop.f32.mrb[0].mxu0
    %v1724 = vadd.f32 0.0, %v1723
    %v1725 = vpop.f32.mrb[0].mxu0
    %v1726 = vadd.f32 0.0, %v1725
    %v1727 = vpop.f32.mrb[0].mxu0
    %v1728 = vadd.f32 0.0, %v1727
    %1729 = vmatprep.mubr.bf16.mxu0 0
    %1730 = vmatmul.mubr.bf16.gmra.mrb[0].mxu0 %v1575
    %v1731 = vpop.f32.mrb[0].mxu0
    %v1732 = vadd.f32 0.0, %v1731
    %v1733 = vpop.f32.mrb[0].mxu0
    %v1734 = vadd.f32 0.0, %v1733
    %v1735 = vpop.f32.mrb[0].mxu0
    %v1736 = vadd.f32 0.0, %v1735
    %v1737 = vpop.f32.mrb[0].mxu0
    %v1738 = vadd.f32 0.0, %v1737
    %1739 = vmatprep.mubr.bf16.mxu0 0
    %1740 = vmatmul.mubr.bf16.gmra.mrb[0].mxu0 %v1576
    %v1741 = vpop.f32.mrb[0].mxu0
    %v1742 = vadd.f32 0.0, %v1741
    %v1743 = vpop.f32.mrb[0].mxu0
    %v1744 = vadd.f32 0.0, %v1743
    %v1745 = vpop.f32.mrb[0].mxu0
    %v1746 = vadd.f32 0.0, %v1745
    %v1747 = vpop.f32.mrb[0].mxu0
    %v1748 = vadd.f32 0.0, %v1747
    %1749 = vmatprep.mubr.bf16.mxu0 0
    %1750 = vmatmul.mubr.bf16.gmra.mrb[0].mxu0 %v1577
    %v1751 = vpop.f32.mrb[0].mxu0
    %v1752 = vadd.f32 0.0, %v1751
    %v1753 = vpop.f32.mrb[0].mxu0
    %v1754 = vadd.f32 0.0, %v1753
    %v1755 = vpop.f32.mrb[0].mxu0
    %v1756 = vadd.f32 0.0, %v1755
    %v1757 = vpop.f32.mrb[0].mxu0
    %v1758 = vadd.f32 0.0, %v1757
    %1759 = vmatprep.mubr.bf16.mxu0 0
    %1760 = vmatmul.mubr.bf16.gmra.mrb[0].mxu0 %v1578
    %v1761 = vpop.f32.mrb[0].mxu0
    %v1762 = vadd.f32 0.0, %v1761
    %v1763 = vpop.f32.mrb[0].mxu0
    %v1764 = vadd.f32 0.0, %v1763
    %v1765 = vpop.f32.mrb[0].mxu0
    %v1766 = vadd.f32 0.0, %v1765
    %v1767 = vpop.f32.mrb[0].mxu0
    %v1768 = vadd.f32 0.0, %v1767
    %1769 = vmatprep.mubr.bf16.mxu0 0
    %1770 = vmatmul.mubr.bf16.gmra.mrb[0].mxu0 %v1579
    %v1771 = vpop.f32.mrb[0].mxu0
    %v1772 = vadd.f32 0.0, %v1771
    %v1773 = vpop.f32.mrb[0].mxu0
    %v1774 = vadd.f32 0.0, %v1773
    %v1775 = vpop.f32.mrb[0].mxu0
    %v1776 = vadd.f32 0.0, %v1775
    %v1777 = vpop.f32.mrb[0].mxu0
    %v1778 = vadd.f32 0.0, %v1777
    %1779 = vmatprep.mubr.bf16.mxu0 0
    %1780 = vmatmul.mubr.bf16.gmra.mrb[0].mxu0 %v1580
    %v1781 = vpop.f32.mrb[0].mxu0
    %v1782 = vadd.f32 0.0, %v1781
    %v1783 = vpop.f32.mrb[0].mxu0
    %v1784 = vadd.f32 0.0, %v1783
    %v1785 = vpop.f32.mrb[0].mxu0
    %v1786 = vadd.f32 0.0, %v1785
    %v1787 = vpop.f32.mrb[0].mxu0
    %v1788 = vadd.f32 0.0, %v1787
    %1789 = vdwg.mxu0
    %v1790 = vadd.f32 %v758, %v1712
    %v1791 = vadd.f32 %v760, %v1714
    %v1792 = vadd.f32 %v762, %v1716
    %v1793 = vadd.f32 %v764, %v1718
    %v1794 = vadd.f32 %v768, %v1722
    %v1795 = vadd.f32 %v770, %v1724
    %v1796 = vadd.f32 %v772, %v1726
    %v1797 = vadd.f32 %v774, %v1728
    %v1798 = vadd.f32 %v778, %v1732
    %v1799 = vadd.f32 %v780, %v1734
    %v1800 = vadd.f32 %v782, %v1736
    %v1801 = vadd.f32 %v784, %v1738
    %v1802 = vadd.f32 %v788, %v1742
    %v1803 = vadd.f32 %v790, %v1744
    %v1804 = vadd.f32 %v792, %v1746
    %v1805 = vadd.f32 %v794, %v1748
    %v1806 = vadd.f32 %v798, %v1752
    %v1807 = vadd.f32 %v800, %v1754
    %v1808 = vadd.f32 %v802, %v1756
    %v1809 = vadd.f32 %v804, %v1758
    %v1810 = vadd.f32 %v808, %v1762
    %v1811 = vadd.f32 %v810, %v1764
    %v1812 = vadd.f32 %v812, %v1766
    %v1813 = vadd.f32 %v814, %v1768
    %v1814 = vadd.f32 %v818, %v1772
    %v1815 = vadd.f32 %v820, %v1774
    %v1816 = vadd.f32 %v822, %v1776
    %v1817 = vadd.f32 %v824, %v1778
    %v1818 = vadd.f32 %v828, %v1782
    %v1819 = vadd.f32 %v830, %v1784
    %v1820 = vadd.f32 %v832, %v1786
    %v1821 = vadd.f32 %v834, %v1788
    %v1822 = vadd.f32 %v1790, %v1791
    %v1823 = vadd.f32 %v1792, %v1793
    %v1824 = vadd.f32 %v1794, %v1795
    %v1825 = vadd.f32 %v1796, %v1797
    %v1826 = vadd.f32 %v1798, %v1799
    %v1827 = vadd.f32 %v1800, %v1801
    %v1828 = vadd.f32 %v1802, %v1803
    %v1829 = vadd.f32 %v1804, %v1805
    %v1830 = vadd.f32 %v1806, %v1807
    %v1831 = vadd.f32 %v1808, %v1809
    %v1832 = vadd.f32 %v1810, %v1811
    %v1833 = vadd.f32 %v1812, %v1813
    %v1834 = vadd.f32 %v1814, %v1815
    %v1835 = vadd.f32 %v1816, %v1817
    %v1836 = vadd.f32 %v1818, %v1819
    %v1837 = vadd.f32 %v1820, %v1821
    %v1838 = vpack.c.bf16 %v1792, %v1790
    %v1839 = vpack.c.bf16 %v1796, %v1794
    %v1840 = vpack.c.bf16 %v1800, %v1798
    %v1841 = vpack.c.bf16 %v1804, %v1802
    %v1842 = vpack.c.bf16 %v1808, %v1806
    %v1843 = vpack.c.bf16 %v1812, %v1810
    %v1844 = vpack.c.bf16 %v1816, %v1814
    %v1845 = vpack.c.bf16 %v1820, %v1818
    %1846 = vmatprep.subr.bf16.mxu0 0
    %1847 = vmatpush1.bf16.msra.mxu0 %v1838
    %1848 = vmatprep.subr.bf16.mxu0 0
    %1849 = vmatpush1.bf16.msra.mxu0 %v1839
    %1850 = vmatprep.subr.bf16.mxu0 0
    %1851 = vmatpush1.bf16.msra.mxu0 %v1840
    %1852 = vmatprep.subr.bf16.mxu0 0
    %1853 = vmatpush1.bf16.msra.mxu0 %v1841
    %1854 = vmatprep.subr.bf16.mxu0 0
    %1855 = vmatpush1.bf16.msra.mxu0 0
    %1856 = vmatprep.subr.bf16.mxu0 0
    %1857 = vmatpush1.bf16.msra.mxu0 0
    %1858 = vmatprep.subr.bf16.mxu0 0
    %1859 = vmatpush1.bf16.msra.mxu0 0
    %1860 = vmatprep.subr.bf16.mxu0 0
    %1861 = vmatpush1.bf16.msra.mxu0 0
    %1862 = vmatprep.subr.bf16.mxu0 0
    %1863 = vmatpush1.bf16.msra.mxu0 0
    %1864 = vmatprep.subr.bf16.mxu0 0
    %1865 = vmatpush1.bf16.msra.mxu0 0
    %1866 = vmatprep.subr.bf16.mxu0 0
    %1867 = vmatpush1.bf16.msra.mxu0 0
    %1868 = vmatprep.subr.bf16.mxu0 0
    %1869 = vmatpush1.bf16.msra.mxu0 0
    %1870 = vmatprep.subr.bf16.mxu0 0
    %1871 = vmatpush1.bf16.msra.mxu0 0
    %1872 = vmatprep.subr.bf16.mxu0 0
    %1873 = vmatpush1.bf16.msra.mxu0 0
    %1874 = vmatprep.subr.bf16.mxu0 0
    %1875 = vmatpush1.bf16.msra.mxu0 0
    %1876 = vmatprep.subr.bf16.mxu0 0
    %1877 = vmatpush1.bf16.msra.mxu0 0
    %1878 = vmatprep.mubr.bf16.mxu0 0
    %1879 = vmatmul.mubr.bf16.gmra.mrb[0].mxu0 %v906
    %v1880 = vpop.f32.mrb[0].mxu0
    %v1881 = vadd.f32 0.0, %v1880
    %v1882 = vpop.f32.mrb[0].mxu0
    %v1883 = vpop.f32.mrb[0].mxu0
    %v1884 = vadd.f32 0.0, %v1883
    %v1885 = vpop.f32.mrb[0].mxu0
    %1886 = vmatprep.mubr.bf16.mxu0 0
    %1887 = vmatmul.mubr.bf16.gmra.mrb[0].mxu0 %v909
    %v1888 = vpop.f32.mrb[0].mxu0
    %v1889 = vadd.f32 0.0, %v1888
    %v1890 = vpop.f32.mrb[0].mxu0
    %v1891 = vpop.f32.mrb[0].mxu0
    %v1892 = vadd.f32 0.0, %v1891
    %v1893 = vpop.f32.mrb[0].mxu0
    %1894 = vmatprep.mubr.bf16.mxu0 0
    %1895 = vmatmul.mubr.bf16.gmra.mrb[0].mxu0 %v912
    %v1896 = vpop.f32.mrb[0].mxu0
    %v1897 = vadd.f32 0.0, %v1896
    %v1898 = vpop.f32.mrb[0].mxu0
    %v1899 = vpop.f32.mrb[0].mxu0
    %v1900 = vadd.f32 0.0, %v1899
    %v1901 = vpop.f32.mrb[0].mxu0
    %1902 = vmatprep.mubr.bf16.mxu0 0
    %1903 = vmatmul.mubr.bf16.gmra.mrb[0].mxu0 %v915
    %v1904 = vpop.f32.mrb[0].mxu0
    %v1905 = vadd.f32 0.0, %v1904
    %v1906 = vpop.f32.mrb[0].mxu0
    %v1907 = vpop.f32.mrb[0].mxu0
    %v1908 = vadd.f32 0.0, %v1907
    %v1909 = vpop.f32.mrb[0].mxu0
    %1910 = vdwg.mxu0
    %1911 = vmatprep.subr.bf16.mxu0 0
    %1912 = vmatpush1.bf16.msra.mxu0 %v1842
    %1913 = vmatprep.subr.bf16.mxu0 0
    %1914 = vmatpush1.bf16.msra.mxu0 %v1843
    %1915 = vmatprep.subr.bf16.mxu0 0
    %1916 = vmatpush1.bf16.msra.mxu0 %v1844
    %1917 = vmatprep.subr.bf16.mxu0 0
    %1918 = vmatpush1.bf16.msra.mxu0 %v1845
    %1919 = vmatprep.subr.bf16.mxu0 0
    %1920 = vmatpush1.bf16.msra.mxu0 0
    %1921 = vmatprep.subr.bf16.mxu0 0
    %1922 = vmatpush1.bf16.msra.mxu0 0
    %1923 = vmatprep.subr.bf16.mxu0 0
    %1924 = vmatpush1.bf16.msra.mxu0 0
    %1925 = vmatprep.subr.bf16.mxu0 0
    %1926 = vmatpush1.bf16.msra.mxu0 0
    %1927 = vmatprep.subr.bf16.mxu0 0
    %1928 = vmatpush1.bf16.msra.mxu0 0
    %1929 = vmatprep.subr.bf16.mxu0 0
    %1930 = vmatpush1.bf16.msra.mxu0 0
    %1931 = vmatprep.subr.bf16.mxu0 0
    %1932 = vmatpush1.bf16.msra.mxu0 0
    %1933 = vmatprep.subr.bf16.mxu0 0
    %1934 = vmatpush1.bf16.msra.mxu0 0
    %1935 = vmatprep.subr.bf16.mxu0 0
    %1936 = vmatpush1.bf16.msra.mxu0 0
    %1937 = vmatprep.subr.bf16.mxu0 0
    %1938 = vmatpush1.bf16.msra.mxu0 0
    %1939 = vmatprep.subr.bf16.mxu0 0
    %1940 = vmatpush1.bf16.msra.mxu0 0
    %1941 = vmatprep.subr.bf16.mxu0 0
    %1942 = vmatpush1.bf16.msra.mxu0 0
    %1943 = vmatprep.mubr.bf16.mxu0 0
    %1944 = vmatmul.mubr.bf16.gmra.mrb[0].mxu0 %v906
    %v1945 = vpop.f32.mrb[0].mxu0
    %v1946 = vadd.f32 0.0, %v1945
    %v1947 = vpop.f32.mrb[0].mxu0
    %v1948 = vpop.f32.mrb[0].mxu0
    %v1949 = vadd.f32 0.0, %v1948
    %v1950 = vpop.f32.mrb[0].mxu0
    %1951 = vmatprep.mubr.bf16.mxu0 0
    %1952 = vmatmul.mubr.bf16.gmra.mrb[0].mxu0 %v909
    %v1953 = vpop.f32.mrb[0].mxu0
    %v1954 = vadd.f32 0.0, %v1953
    %v1955 = vpop.f32.mrb[0].mxu0
    %v1956 = vpop.f32.mrb[0].mxu0
    %v1957 = vadd.f32 0.0, %v1956
    %v1958 = vpop.f32.mrb[0].mxu0
    %1959 = vmatprep.mubr.bf16.mxu0 0
    %1960 = vmatmul.mubr.bf16.gmra.mrb[0].mxu0 %v912
    %v1961 = vpop.f32.mrb[0].mxu0
    %v1962 = vadd.f32 0.0, %v1961
    %v1963 = vpop.f32.mrb[0].mxu0
    %v1964 = vpop.f32.mrb[0].mxu0
    %v1965 = vadd.f32 0.0, %v1964
    %v1966 = vpop.f32.mrb[0].mxu0
    %1967 = vmatprep.mubr.bf16.mxu0 0
    %1968 = vmatmul.mubr.bf16.gmra.mrb[0].mxu0 %v915
    %v1969 = vpop.f32.mrb[0].mxu0
    %v1970 = vadd.f32 0.0, %v1969
    %v1971 = vpop.f32.mrb[0].mxu0
    %v1972 = vpop.f32.mrb[0].mxu0
    %v1973 = vadd.f32 0.0, %v1972
    %v1974 = vpop.f32.mrb[0].mxu0
    %1975 = vdwg.mxu0
    %v1976 = vadd.f32 %v1822, %v1881
    %v1977 = vadd.f32 %v1823, %v1884
    %v1978 = vadd.f32 %v1824, %v1889
    %v1979 = vadd.f32 %v1825, %v1892
    %v1980 = vadd.f32 %v1826, %v1897
    %v1981 = vadd.f32 %v1827, %v1900
    %v1982 = vadd.f32 %v1828, %v1905
    %v1983 = vadd.f32 %v1829, %v1908
    %v1984 = vadd.f32 %v1830, %v1946
    %v1985 = vadd.f32 %v1831, %v1949
    %v1986 = vadd.f32 %v1832, %v1954
    %v1987 = vadd.f32 %v1833, %v1957
    %v1988 = vadd.f32 %v1834, %v1962
    %v1989 = vadd.f32 %v1835, %v1965
    %v1990 = vadd.f32 %v1836, %v1970
    %v1991 = vadd.f32 %v1837, %v1973
    %v1992 = vpack.c.bf16 %v1793, %v1791
    %v1993 = vpack.c.bf16 %v1797, %v1795
    %v1994 = vpack.c.bf16 %v1801, %v1799
    %v1995 = vpack.c.bf16 %v1805, %v1803
    %v1996 = vpack.c.bf16 %v1809, %v1807
    %v1997 = vpack.c.bf16 %v1813, %v1811
    %v1998 = vpack.c.bf16 %v1817, %v1815
    %v1999 = vpack.c.bf16 %v1821, %v1819
    %2000 = vmatprep.subr.bf16.mxu0 0
    %2001 = vmatpush1.bf16.msra.mxu0 %v1992
    %2002 = vmatprep.subr.bf16.mxu0 0
    %2003 = vmatpush1.bf16.msra.mxu0 %v1993
    %2004 = vmatprep.subr.bf16.mxu0 0
    %2005 = vmatpush1.bf16.msra.mxu0 %v1994
    %2006 = vmatprep.subr.bf16.mxu0 0
    %2007 = vmatpush1.bf16.msra.mxu0 %v1995
    %2008 = vmatprep.subr.bf16.mxu0 0
    %2009 = vmatpush1.bf16.msra.mxu0 0
    %2010 = vmatprep.subr.bf16.mxu0 0
    %2011 = vmatpush1.bf16.msra.mxu0 0
    %2012 = vmatprep.subr.bf16.mxu0 0
    %2013 = vmatpush1.bf16.msra.mxu0 0
    %2014 = vmatprep.subr.bf16.mxu0 0
    %2015 = vmatpush1.bf16.msra.mxu0 0
    %2016 = vmatprep.subr.bf16.mxu0 0
    %2017 = vmatpush1.bf16.msra.mxu0 0
    %2018 = vmatprep.subr.bf16.mxu0 0
    %2019 = vmatpush1.bf16.msra.mxu0 0
    %2020 = vmatprep.subr.bf16.mxu0 0
    %2021 = vmatpush1.bf16.msra.mxu0 0
    %2022 = vmatprep.subr.bf16.mxu0 0
    %2023 = vmatpush1.bf16.msra.mxu0 0
    %2024 = vmatprep.subr.bf16.mxu0 0
    %2025 = vmatpush1.bf16.msra.mxu0 0
    %2026 = vmatprep.subr.bf16.mxu0 0
    %2027 = vmatpush1.bf16.msra.mxu0 0
    %2028 = vmatprep.subr.bf16.mxu0 0
    %2029 = vmatpush1.bf16.msra.mxu0 0
    %2030 = vmatprep.subr.bf16.mxu0 0
    %2031 = vmatpush1.bf16.msra.mxu0 0
    %2032 = vmatprep.mubr.bf16.mxu0 0
    %2033 = vmatmul.mubr.bf16.gmra.mrb[0].mxu0 %v1132
    %v2034 = vpop.f32.mrb[0].mxu0
    %v2035 = vadd.f32 0.0, %v2034
    %v2036 = vpop.f32.mrb[0].mxu0
    %v2037 = vpop.f32.mrb[0].mxu0
    %v2038 = vadd.f32 0.0, %v2037
    %v2039 = vpop.f32.mrb[0].mxu0
    %2040 = vmatprep.mubr.bf16.mxu0 0
    %2041 = vmatmul.mubr.bf16.gmra.mrb[0].mxu0 %v1135
    %v2042 = vpop.f32.mrb[0].mxu0
    %v2043 = vadd.f32 0.0, %v2042
    %v2044 = vpop.f32.mrb[0].mxu0
    %v2045 = vpop.f32.mrb[0].mxu0
    %v2046 = vadd.f32 0.0, %v2045
    %v2047 = vpop.f32.mrb[0].mxu0
    %2048 = vmatprep.mubr.bf16.mxu0 0
    %2049 = vmatmul.mubr.bf16.gmra.mrb[0].mxu0 %v1138
    %v2050 = vpop.f32.mrb[0].mxu0
    %v2051 = vadd.f32 0.0, %v2050
    %v2052 = vpop.f32.mrb[0].mxu0
    %v2053 = vpop.f32.mrb[0].mxu0
    %v2054 = vadd.f32 0.0, %v2053
    %v2055 = vpop.f32.mrb[0].mxu0
    %2056 = vmatprep.mubr.bf16.mxu0 0
    %2057 = vmatmul.mubr.bf16.gmra.mrb[0].mxu0 %v1141
    %v2058 = vpop.f32.mrb[0].mxu0
    %v2059 = vadd.f32 0.0, %v2058
    %v2060 = vpop.f32.mrb[0].mxu0
    %v2061 = vpop.f32.mrb[0].mxu0
    %v2062 = vadd.f32 0.0, %v2061
    %v2063 = vpop.f32.mrb[0].mxu0
    %2064 = vdwg.mxu0
    %2065 = vmatprep.subr.bf16.mxu0 0
    %2066 = vmatpush1.bf16.msra.mxu0 %v1996
    %2067 = vmatprep.subr.bf16.mxu0 0
    %2068 = vmatpush1.bf16.msra.mxu0 %v1997
    %2069 = vmatprep.subr.bf16.mxu0 0
    %2070 = vmatpush1.bf16.msra.mxu0 %v1998
    %2071 = vmatprep.subr.bf16.mxu0 0
    %2072 = vmatpush1.bf16.msra.mxu0 %v1999
    %2073 = vmatprep.subr.bf16.mxu0 0
    %2074 = vmatpush1.bf16.msra.mxu0 0
    %2075 = vmatprep.subr.bf16.mxu0 0
    %2076 = vmatpush1.bf16.msra.mxu0 0
    %2077 = vmatprep.subr.bf16.mxu0 0
    %2078 = vmatpush1.bf16.msra.mxu0 0
    %2079 = vmatprep.subr.bf16.mxu0 0
    %2080 = vmatpush1.bf16.msra.mxu0 0
    %2081 = vmatprep.subr.bf16.mxu0 0
    %2082 = vmatpush1.bf16.msra.mxu0 0
    %2083 = vmatprep.subr.bf16.mxu0 0
    %2084 = vmatpush1.bf16.msra.mxu0 0
    %2085 = vmatprep.subr.bf16.mxu0 0
    %2086 = vmatpush1.bf16.msra.mxu0 0
    %2087 = vmatprep.subr.bf16.mxu0 0
    %2088 = vmatpush1.bf16.msra.mxu0 0
    %2089 = vmatprep.subr.bf16.mxu0 0
    %2090 = vmatpush1.bf16.msra.mxu0 0
    %2091 = vmatprep.subr.bf16.mxu0 0
    %2092 = vmatpush1.bf16.msra.mxu0 0
    %2093 = vmatprep.subr.bf16.mxu0 0
    %2094 = vmatpush1.bf16.msra.mxu0 0
    %2095 = vmatprep.subr.bf16.mxu0 0
    %2096 = vmatpush1.bf16.msra.mxu0 0
    %2097 = vmatprep.mubr.bf16.mxu0 0
    %2098 = vmatmul.mubr.bf16.gmra.mrb[0].mxu0 %v1132
    %v2099 = vpop.f32.mrb[0].mxu0
    %v2100 = vadd.f32 0.0, %v2099
    %v2101 = vpop.f32.mrb[0].mxu0
    %v2102 = vpop.f32.mrb[0].mxu0
    %v2103 = vadd.f32 0.0, %v2102
    %v2104 = vpop.f32.mrb[0].mxu0
    %2105 = vmatprep.mubr.bf16.mxu0 0
    %2106 = vmatmul.mubr.bf16.gmra.mrb[0].mxu0 %v1135
    %v2107 = vpop.f32.mrb[0].mxu0
    %v2108 = vadd.f32 0.0, %v2107
    %v2109 = vpop.f32.mrb[0].mxu0
    %v2110 = vpop.f32.mrb[0].mxu0
    %v2111 = vadd.f32 0.0, %v2110
    %v2112 = vpop.f32.mrb[0].mxu0
    %2113 = vmatprep.mubr.bf16.mxu0 0
    %2114 = vmatmul.mubr.bf16.gmra.mrb[0].mxu0 %v1138
    %v2115 = vpop.f32.mrb[0].mxu0
    %v2116 = vadd.f32 0.0, %v2115
    %v2117 = vpop.f32.mrb[0].mxu0
    %v2118 = vpop.f32.mrb[0].mxu0
    %v2119 = vadd.f32 0.0, %v2118
    %v2120 = vpop.f32.mrb[0].mxu0
    %2121 = vmatprep.mubr.bf16.mxu0 0
    %2122 = vmatmul.mubr.bf16.gmra.mrb[0].mxu0 %v1141
    %v2123 = vpop.f32.mrb[0].mxu0
    %v2124 = vadd.f32 0.0, %v2123
    %v2125 = vpop.f32.mrb[0].mxu0
    %v2126 = vpop.f32.mrb[0].mxu0
    %v2127 = vadd.f32 0.0, %v2126
    %v2128 = vpop.f32.mrb[0].mxu0
    %2129 = vdwg.mxu0
    %v2130 = vadd.f32 %v1976, %v2035
    %v2131 = vadd.f32 %v1977, %v2038
    %v2132 = vadd.f32 %v1978, %v2043
    %v2133 = vadd.f32 %v1979, %v2046
    %v2134 = vadd.f32 %v1980, %v2051
    %v2135 = vadd.f32 %v1981, %v2054
    %v2136 = vadd.f32 %v1982, %v2059
    %v2137 = vadd.f32 %v1983, %v2062
    %v2138 = vadd.f32 %v1984, %v2100
    %v2139 = vadd.f32 %v1985, %v2103
    %v2140 = vadd.f32 %v1986, %v2108
    %v2141 = vadd.f32 %v1987, %v2111
    %v2142 = vadd.f32 %v1988, %v2116
    %v2143 = vadd.f32 %v1989, %v2119
    %v2144 = vadd.f32 %v1990, %v2124
    %v2145 = vadd.f32 %v1991, %v2127
    %v2146 = vld [vmem:[%s7] sm:$0x1]
    %v2148 = vlaneseq
    %v2149 = vshrl.u32 %v2148, 7
    %v2150 = vsub.s32 0, %v2149
    %v2151 = vrot.slane %v2146, %v2150
    %v2153 = vadd.f32 %v2130, %v2151
    %v2154 = vadd.f32 %v2131, %v2151
    %v2155 = vadd.f32 %v2132, %v2151
    %v2156 = vadd.f32 %v2133, %v2151
    %v2157 = vadd.f32 %v2134, %v2151
    %v2158 = vadd.f32 %v2135, %v2151
    %v2159 = vadd.f32 %v2136, %v2151
    %v2160 = vadd.f32 %v2137, %v2151
    %v2161 = vadd.f32 %v2138, %v2151
    %v2162 = vadd.f32 %v2139, %v2151
    %v2163 = vadd.f32 %v2140, %v2151
    %v2164 = vadd.f32 %v2141, %v2151
    %v2165 = vadd.f32 %v2142, %v2151
    %v2166 = vadd.f32 %v2143, %v2151
    %v2167 = vadd.f32 %v2144, %v2151
    %v2168 = vadd.f32 %v2145, %v2151
    %v2169 = vtanh.pop %v2153
    %v2170 = vtanh.pop %v2154
    %v2171 = vtanh.pop %v2155
    %v2172 = vtanh.pop %v2156
    %v2173 = vtanh.pop %v2157
    %v2174 = vtanh.pop %v2158
    %v2175 = vtanh.pop %v2159
    %v2176 = vtanh.pop %v2160
    %v2177 = vtanh.pop %v2161
    %v2178 = vtanh.pop %v2162
    %v2179 = vtanh.pop %v2163
    %v2180 = vtanh.pop %v2164
    %v2181 = vtanh.pop %v2165
    %v2182 = vtanh.pop %v2166
    %v2183 = vtanh.pop %v2167
    %v2184 = vtanh.pop %v2168
    %v2185 = vsub.f32 1.0, %v1430
    %v2186 = vsub.f32 1.0, %v1432
    %v2187 = vsub.f32 1.0, %v1434
    %v2188 = vsub.f32 1.0, %v1436
    %v2189 = vsub.f32 1.0, %v1438
    %v2190 = vsub.f32 1.0, %v1440
    %v2191 = vsub.f32 1.0, %v1442
    %v2192 = vsub.f32 1.0, %v1444
    %v2193 = vsub.f32 1.0, %v1446
    %v2194 = vsub.f32 1.0, %v1448
    %v2195 = vsub.f32 1.0, %v1450
    %v2196 = vsub.f32 1.0, %v1452
    %v2197 = vsub.f32 1.0, %v1454
    %v2198 = vsub.f32 1.0, %v1456
    %v2199 = vsub.f32 1.0, %v1458
    %v2200 = vsub.f32 1.0, %v1460
    %v2201 = vmul.f32 %v2185, %v145
    %v2202 = vmul.f32 %v2186, %v146
    %v2203 = vmul.f32 %v2187, %v147
    %v2204 = vmul.f32 %v2188, %v148
    %v2205 = vmul.f32 %v2189, %v149
    %v2206 = vmul.f32 %v2190, %v150
    %v2207 = vmul.f32 %v2191, %v151
    %v2208 = vmul.f32 %v2192, %v152
    %v2209 = vmul.f32 %v2193, %v153
    %v2210 = vmul.f32 %v2194, %v154
    %v2211 = vmul.f32 %v2195, %v155
    %v2212 = vmul.f32 %v2196, %v156
    %v2213 = vmul.f32 %v2197, %v157
    %v2214 = vmul.f32 %v2198, %v158
    %v2215 = vmul.f32 %v2199, %v159
    %v2216 = vmul.f32 %v2200, %v160
    %v2217 = vmul.f32 %v1430, %v2169
    %v2218 = vmul.f32 %v1432, %v2170
    %v2219 = vmul.f32 %v1434, %v2171
    %v2220 = vmul.f32 %v1436, %v2172
    %v2221 = vmul.f32 %v1438, %v2173
    %v2222 = vmul.f32 %v1440, %v2174
    %v2223 = vmul.f32 %v1442, %v2175
    %v2224 = vmul.f32 %v1444, %v2176
    %v2225 = vmul.f32 %v1446, %v2177
    %v2226 = vmul.f32 %v1448, %v2178
    %v2227 = vmul.f32 %v1450, %v2179
    %v2228 = vmul.f32 %v1452, %v2180
    %v2229 = vmul.f32 %v1454, %v2181
    %v2230 = vmul.f32 %v1456, %v2182
    %v2231 = vmul.f32 %v1458, %v2183
    %v2232 = vmul.f32 %v1460, %v2184
    %v2233 = vadd.f32 %v2201, %v2217
    %v2234 = vadd.f32 %v2202, %v2218
    %v2235 = vadd.f32 %v2203, %v2219
    %v2236 = vadd.f32 %v2204, %v2220
    %v2237 = vadd.f32 %v2205, %v2221
    %v2238 = vadd.f32 %v2206, %v2222
    %v2239 = vadd.f32 %v2207, %v2223
    %v2240 = vadd.f32 %v2208, %v2224
    %v2241 = vadd.f32 %v2209, %v2225
    %v2242 = vadd.f32 %v2210, %v2226
    %v2243 = vadd.f32 %v2211, %v2227
    %v2244 = vadd.f32 %v2212, %v2228
    %v2245 = vadd.f32 %v2213, %v2229
    %v2246 = vadd.f32 %v2214, %v2230
    %v2247 = vadd.f32 %v2215, %v2231
    %v2248 = vadd.f32 %v2216, %v2232
    %2249 = vst [vmem:[#allocation13] sm:$0xff] %v2233
    %2250 = vst [vmem:[#allocation13 + $0x8] sm:$0xff] %v2234
    %2251 = vst [vmem:[#allocation13 + $0x10] sm:$0xff] %v2235
    %2252 = vst [vmem:[#allocation13 + $0x18] sm:$0xff] %v2236
    %2253 = vst [vmem:[#allocation13 + $0x20] sm:$0xff] %v2237
    %2254 = vst [vmem:[#allocation13 + $0x28] sm:$0xff] %v2238
    %2255 = vst [vmem:[#allocation13 + $0x30] sm:$0xff] %v2239
    %2256 = vst [vmem:[#allocation13 + $0x38] sm:$0xff] %v2240
    %2257 = vst [vmem:[#allocation13 + $0x40] sm:$0xff] %v2241
    %2258 = vst [vmem:[#allocation13 + $0x48] sm:$0xff] %v2242
    %2259 = vst [vmem:[#allocation13 + $0x50] sm:$0xff] %v2243
    %2260 = vst [vmem:[#allocation13 + $0x58] sm:$0xff] %v2244
    %2261 = vst [vmem:[#allocation13 + $0x60] sm:$0xff] %v2245
    %2262 = vst [vmem:[#allocation13 + $0x68] sm:$0xff] %v2246
    %2263 = vst [vmem:[#allocation13 + $0x70] sm:$0xff] %v2247
    %2264 = vst [vmem:[#allocation13 + $0x78] sm:$0xff] %v2248
    // Predicated region
    $region58: #{tpu_custom_call.1} parent=1 // pred_check
      _
    $region59: #{tpu_custom_call.1} parent=1 // pred_check_branch
      %2266 = sbr.rel (0) target = $region61
    $region60: #{tpu_custom_call.1} parent=1 // pred_region
      %s2268 = ssub.s32 2048, 2048
      %2269 = vsyncadd [#allocation4], %s2268
      %s2270 = sshll.u32 [#allocation13], 4
      %s2271 = int_to_ptr.vmem [resolvable:$true] %s2270
      %2276 = dma.vmem_to_hbm [thread:$0]  %s2271, 2048, %s8, [#allocation4], 128, 128, 8
    $region61: #{tpu_custom_call.1} parent=1 // pred_fallthru
      _
    // Predicated region
    $region62: #{tpu_custom_call.1} parent=1 // pred_check
      _
    $region63: #{tpu_custom_call.1} parent=1 // pred_check_branch
      %2278 = sbr.rel (0) target = $region65
    $region64: #{tpu_custom_call.1} parent=1 // pred_region
      %2279 = dma.done [#allocation4], 2048
    $region65: #{tpu_custom_call.1} parent=1 // pred_fallthru
      _
    %2280 = vsyncpa [#allocation3], 1
    %2281 = vsyncpa [#allocation6], 1
    %2282 = vsyncpa [#allocation9], 1
    %2283 = vsyncpa [#allocation12], 1
    %2284 = vsyncpa [#allocation4], 1

</llo_original>
